<compile_context>
chip_gen: v5e
topology: v5e:2x2
jax: 0.10.0
libtpu: 0.0.40
codegen_flags: <defaults>
</compile_context>

<pallas_src>
import functools

import jax
import jax.numpy as jnp
from jax.experimental import pallas as pl
from jax.experimental.pallas import tpu as pltpu

HID = 8  # hidden channels of the synthetic net


def _conv3x3_same(x2d, w_ref, b_ref, *, cin, cout, H, W):
    """3x3 'same' conv, pure VPU/XLU (no MXU).

    x2d:   (cin*H, W) f32 value; rows are channel-major ([c0 rows, c1 rows, ...])
           and W is the lane dimension.
    w_ref: SMEM ref, flat (9*cin*cout,) f32, row-major [dy, dx, ci, co].
    b_ref: SMEM ref, (cout,) f32.
    Returns (cout*H, W) f32.
    """
    CH = cin * H
    row = jax.lax.broadcasted_iota(jnp.int32, (H, W), 0)
    col = jax.lax.broadcasted_iota(jnp.int32, (H, W), 1)

    # Build the 9 shifted taps once for the whole channel stack (<=2 XLU rolls
    # each); cross-channel wrap from the sublane roll only lands on rows that
    # the halo mask zeroes anyway.
    patches = {}
    for dy in (-1, 0, 1):
        for dx in (-1, 0, 1):
            t = x2d
            if dy != 0:
                t = pltpu.roll(t, (-dy) % CH, 0)   # sublane rotation
            if dx != 0:
                t = pltpu.roll(t, (-dx) % W, 1)    # lane rotation
            valid = ((row + dy >= 0) & (row + dy < H) &
                     (col + dx >= 0) & (col + dx < W))
            for ci in range(cin):
                p = t[ci * H:(ci + 1) * H, :]      # (H, W) plane of channel ci
                if dy != 0 or dx != 0:
                    p = jnp.where(valid, p, 0.0)
                patches[(dy, dx, ci)] = p

    # Broadcast-scalar multiply-accumulate on the VPU; weights read from SMEM.
    outs = []
    for co in range(cout):
        acc = jnp.zeros((H, W), jnp.float32)
        for ky, dy in enumerate((-1, 0, 1)):
            for kx, dx in enumerate((-1, 0, 1)):
                for ci in range(cin):
                    w = w_ref[((ky * 3 + kx) * cin + ci) * cout + co]
                    acc = acc + w * patches[(dy, dx, ci)]
        outs.append(acc + b_ref[co])
    return jnp.concatenate(outs, axis=0)           # (cout*H, W)


def cnn_block_kernel(inv_sigma_ref, w1_ref, b1_ref, w2_ref, b2_ref,
                     x_ref, out_ref, *, H, W, hid):
    b = pl.program_id(0)

    x = x_ref[...]                                                   # (2*H, W)

    # conv1 + bias + relu
    h = _conv3x3_same(x, w1_ref, b1_ref, cin=2, cout=hid, H=H, W=W)  # (hid*H, W)
    h = jnp.maximum(h, 0.0)

    # conv2 + bias
    y = _conv3x3_same(h, w2_ref, b2_ref, cin=hid, cout=2, H=H, W=W)  # (2*H, W)

    # per-batch sigma conditioning (1/sigma precomputed on the host)
    out_ref[...] = y * inv_sigma_ref[b]


def cnn_block_forward(x, sigma, params):
    """x: complex64 (B, H, W); sigma: f32 (B,). Returns complex64 (B, H, W)."""
    B, H, W = x.shape
    w1, b1, w2, b2 = params
    hid = w1.shape[-1]

    # view_as_real + 'b w h c -> b c w h' -> NCHW; collapse (C, H) so the kernel
    # block is a lane-dense 2-D (2*H, W) tile.  Pure layout plumbing.
    xr = jnp.stack([jnp.real(x), jnp.imag(x)], axis=1).astype(jnp.float32)
    x2d = xr.reshape(B, 2 * H, W)

    inv_sigma = (1.0 / sigma).astype(jnp.float32)      # divide done host-side
    w1f = w1.astype(jnp.float32).reshape(-1)           # flat [dy, dx, ci, co]
    w2f = w2.astype(jnp.float32).reshape(-1)
    b1f = b1.astype(jnp.float32).reshape(-1)
    b2f = b2.astype(jnp.float32).reshape(-1)

    kernel = functools.partial(cnn_block_kernel, H=H, W=W, hid=hid)

    out = pl.pallas_call(
        kernel,
        out_shape=jax.ShapeDtypeStruct((B, 2 * H, W), jnp.float32),
        grid_spec=pltpu.PrefetchScalarGridSpec(
            num_scalar_prefetch=5,      # inv_sigma, w1, b1, w2, b2 -> SMEM
            grid=(B,),
            in_specs=[
                pl.BlockSpec((None, 2 * H, W), lambda b, *_: (b, 0, 0)),
            ],
            out_specs=pl.BlockSpec((None, 2 * H, W), lambda b, *_: (b, 0, 0)),
        ),
        compiler_params=pltpu.CompilerParams(
            dimension_semantics=("parallel",)),   # batch across v7x's 2 TCs
    )(inv_sigma, w1f, b1f, w2f, b2f, x2d)

    # rearrange back ('b c w h -> b w h c') + recombine into a complex array
    outr = out.reshape(B, 2, H, W)
    return outr[:, 0] + 1j * outr[:, 1]


def make_params(key):
    k1, k2 = jax.random.split(key, 2)
    w1 = 0.1 * jax.random.normal(k1, (3, 3, 2, HID), dtype=jnp.float32)
    b1 = 0.01 * jnp.ones((HID,), jnp.float32)
    w2 = 0.1 * jax.random.normal(k2, (3, 3, HID, 2), dtype=jnp.float32)
    b2 = jnp.zeros((2,), jnp.float32)
    return w1, b1, w2, b2


if __name__ == "__main__":
    key = jax.random.PRNGKey(0)
    kx, ky, kp = jax.random.split(key, 3)

    B, H, W = 2, 16, 128   # W a multiple of 128 -> lane-dense tiles/stores
    x = (jax.random.normal(kx, (B, H, W), dtype=jnp.float32)
         + 1j * jax.random.normal(ky, (B, H, W), dtype=jnp.float32)
         ).astype(jnp.complex64)
    sigma = jnp.array([0.5, 1.5], dtype=jnp.float32)

    params = make_params(kp)
    out = cnn_block_forward(x, sigma, params)
    jax.block_until_ready(out)

    assert out.shape == (B, H, W) and jnp.iscomplexobj(out)
    print("KERNEL_OK")
</pallas_src>

<mosaic_0001>
module attributes {stable_mosaic.version = 11 : i64} {
  func.func @cnn_block_kernel(%arg0: i32, %arg1: memref<2xf32, #tpu.memory_space<smem>>, %arg2: memref<144xf32, #tpu.memory_space<smem>>, %arg3: memref<8xf32, #tpu.memory_space<smem>>, %arg4: memref<144xf32, #tpu.memory_space<smem>>, %arg5: memref<2xf32, #tpu.memory_space<smem>>, %arg6: memref<1x32x128xf32, #tpu.memory_space<vmem>>, %arg7: memref<1x32x128xf32, #tpu.memory_space<vmem>>) attributes {dimension_semantics = [#tpu.dimension_semantics<parallel>], iteration_bounds = array<i64: 2>, scalar_prefetch = 5 : i64, scratch_operands = 0 : i64, tpu.core_type = #tpu.core_type<tc>, window_params = [{transform_indices = @transform_0, window_bounds = array<i64: 1, 32, 128>}, {transform_indices = @transform_1, window_bounds = array<i64: 1, 32, 128>}]} {
    %c0 = arith.constant 0 : index
    %c0_0 = arith.constant 0 : index
    %c0_1 = arith.constant 0 : index
    %0 = vector.load %arg6[%c0, %c0_0, %c0_1] : memref<1x32x128xf32, #tpu.memory_space<vmem>>, vector<1x32x128xf32>
    %1 = vector.shape_cast %0 : vector<1x32x128xf32> to vector<32x128xf32>
    %2 = tpu.iota {dimensions = array<i32: 0>} : vector<16x128xi32>
    %3 = tpu.iota {dimensions = array<i32: 1>} : vector<16x128xi32>
    %c1_i32 = arith.constant 1 : i32
    %4 = tpu.dynamic_rotate %1 by %c1_i32 dim 0 : vector<32x128xf32>, i32 -> vector<32x128xf32>
    %c1_i32_2 = arith.constant 1 : i32
    %5 = tpu.dynamic_rotate %4 by %c1_i32_2 dim 1 : vector<32x128xf32>, i32 -> vector<32x128xf32>
    %c-1_i32 = arith.constant -1 : i32
    %6 = vector.broadcast %c-1_i32 : i32 to vector<16x128xi32>
    %7 = arith.addi %2, %6 : vector<16x128xi32>
    %c0_i32 = arith.constant 0 : i32
    %8 = vector.broadcast %c0_i32 : i32 to vector<16x128xi32>
    %9 = arith.cmpi sge, %7, %8 : vector<16x128xi32>
    %c-1_i32_3 = arith.constant -1 : i32
    %10 = vector.broadcast %c-1_i32_3 : i32 to vector<16x128xi32>
    %11 = arith.addi %2, %10 : vector<16x128xi32>
    %c16_i32 = arith.constant 16 : i32
    %12 = vector.broadcast %c16_i32 : i32 to vector<16x128xi32>
    %13 = arith.cmpi slt, %11, %12 : vector<16x128xi32>
    %14 = arith.andi %9, %13 : vector<16x128xi1>
    %c-1_i32_4 = arith.constant -1 : i32
    %15 = vector.broadcast %c-1_i32_4 : i32 to vector<16x128xi32>
    %16 = arith.addi %3, %15 : vector<16x128xi32>
    %c0_i32_5 = arith.constant 0 : i32
    %17 = vector.broadcast %c0_i32_5 : i32 to vector<16x128xi32>
    %18 = arith.cmpi sge, %16, %17 : vector<16x128xi32>
    %19 = arith.andi %14, %18 : vector<16x128xi1>
    %c-1_i32_6 = arith.constant -1 : i32
    %20 = vector.broadcast %c-1_i32_6 : i32 to vector<16x128xi32>
    %21 = arith.addi %3, %20 : vector<16x128xi32>
    %c128_i32 = arith.constant 128 : i32
    %22 = vector.broadcast %c128_i32 : i32 to vector<16x128xi32>
    %23 = arith.cmpi slt, %21, %22 : vector<16x128xi32>
    %24 = arith.andi %19, %23 : vector<16x128xi1>
    %25 = vector.extract_strided_slice %5 {offsets = [0, 0], sizes = [16, 128], strides = [1, 1]} : vector<32x128xf32> to vector<16x128xf32>
    %cst = arith.constant 0.000000e+00 : f32
    %26 = vector.broadcast %cst : f32 to vector<16x128xf32>
    %27 = arith.select %24, %25, %26 : vector<16x128xi1>, vector<16x128xf32>
    %28 = vector.extract_strided_slice %5 {offsets = [16, 0], sizes = [16, 128], strides = [1, 1]} : vector<32x128xf32> to vector<16x128xf32>
    %cst_7 = arith.constant 0.000000e+00 : f32
    %29 = vector.broadcast %cst_7 : f32 to vector<16x128xf32>
    %30 = arith.select %24, %28, %29 : vector<16x128xi1>, vector<16x128xf32>
    %c1_i32_8 = arith.constant 1 : i32
    %31 = tpu.dynamic_rotate %1 by %c1_i32_8 dim 0 : vector<32x128xf32>, i32 -> vector<32x128xf32>
    %c-1_i32_9 = arith.constant -1 : i32
    %32 = vector.broadcast %c-1_i32_9 : i32 to vector<16x128xi32>
    %33 = arith.addi %2, %32 : vector<16x128xi32>
    %c0_i32_10 = arith.constant 0 : i32
    %34 = vector.broadcast %c0_i32_10 : i32 to vector<16x128xi32>
    %35 = arith.cmpi sge, %33, %34 : vector<16x128xi32>
    %c-1_i32_11 = arith.constant -1 : i32
    %36 = vector.broadcast %c-1_i32_11 : i32 to vector<16x128xi32>
    %37 = arith.addi %2, %36 : vector<16x128xi32>
    %c16_i32_12 = arith.constant 16 : i32
    %38 = vector.broadcast %c16_i32_12 : i32 to vector<16x128xi32>
    %39 = arith.cmpi slt, %37, %38 : vector<16x128xi32>
    %40 = arith.andi %35, %39 : vector<16x128xi1>
    %c0_i32_13 = arith.constant 0 : i32
    %41 = vector.broadcast %c0_i32_13 : i32 to vector<16x128xi32>
    %42 = arith.addi %3, %41 : vector<16x128xi32>
    %c0_i32_14 = arith.constant 0 : i32
    %43 = vector.broadcast %c0_i32_14 : i32 to vector<16x128xi32>
    %44 = arith.cmpi sge, %42, %43 : vector<16x128xi32>
    %45 = arith.andi %40, %44 : vector<16x128xi1>
    %c0_i32_15 = arith.constant 0 : i32
    %46 = vector.broadcast %c0_i32_15 : i32 to vector<16x128xi32>
    %47 = arith.addi %3, %46 : vector<16x128xi32>
    %c128_i32_16 = arith.constant 128 : i32
    %48 = vector.broadcast %c128_i32_16 : i32 to vector<16x128xi32>
    %49 = arith.cmpi slt, %47, %48 : vector<16x128xi32>
    %50 = arith.andi %45, %49 : vector<16x128xi1>
    %51 = vector.extract_strided_slice %31 {offsets = [0, 0], sizes = [16, 128], strides = [1, 1]} : vector<32x128xf32> to vector<16x128xf32>
    %cst_17 = arith.constant 0.000000e+00 : f32
    %52 = vector.broadcast %cst_17 : f32 to vector<16x128xf32>
    %53 = arith.select %50, %51, %52 : vector<16x128xi1>, vector<16x128xf32>
    %54 = vector.extract_strided_slice %31 {offsets = [16, 0], sizes = [16, 128], strides = [1, 1]} : vector<32x128xf32> to vector<16x128xf32>
    %cst_18 = arith.constant 0.000000e+00 : f32
    %55 = vector.broadcast %cst_18 : f32 to vector<16x128xf32>
    %56 = arith.select %50, %54, %55 : vector<16x128xi1>, vector<16x128xf32>
    %c1_i32_19 = arith.constant 1 : i32
    %57 = tpu.dynamic_rotate %1 by %c1_i32_19 dim 0 : vector<32x128xf32>, i32 -> vector<32x128xf32>
    %c127_i32 = arith.constant 127 : i32
    %58 = tpu.dynamic_rotate %57 by %c127_i32 dim 1 : vector<32x128xf32>, i32 -> vector<32x128xf32>
    %c-1_i32_20 = arith.constant -1 : i32
    %59 = vector.broadcast %c-1_i32_20 : i32 to vector<16x128xi32>
    %60 = arith.addi %2, %59 : vector<16x128xi32>
    %c0_i32_21 = arith.constant 0 : i32
    %61 = vector.broadcast %c0_i32_21 : i32 to vector<16x128xi32>
    %62 = arith.cmpi sge, %60, %61 : vector<16x128xi32>
    %c-1_i32_22 = arith.constant -1 : i32
    %63 = vector.broadcast %c-1_i32_22 : i32 to vector<16x128xi32>
    %64 = arith.addi %2, %63 : vector<16x128xi32>
    %c16_i32_23 = arith.constant 16 : i32
    %65 = vector.broadcast %c16_i32_23 : i32 to vector<16x128xi32>
    %66 = arith.cmpi slt, %64, %65 : vector<16x128xi32>
    %67 = arith.andi %62, %66 : vector<16x128xi1>
    %c1_i32_24 = arith.constant 1 : i32
    %68 = vector.broadcast %c1_i32_24 : i32 to vector<16x128xi32>
    %69 = arith.addi %3, %68 : vector<16x128xi32>
    %c0_i32_25 = arith.constant 0 : i32
    %70 = vector.broadcast %c0_i32_25 : i32 to vector<16x128xi32>
    %71 = arith.cmpi sge, %69, %70 : vector<16x128xi32>
    %72 = arith.andi %67, %71 : vector<16x128xi1>
    %c1_i32_26 = arith.constant 1 : i32
    %73 = vector.broadcast %c1_i32_26 : i32 to vector<16x128xi32>
    %74 = arith.addi %3, %73 : vector<16x128xi32>
    %c128_i32_27 = arith.constant 128 : i32
    %75 = vector.broadcast %c128_i32_27 : i32 to vector<16x128xi32>
    %76 = arith.cmpi slt, %74, %75 : vector<16x128xi32>
    %77 = arith.andi %72, %76 : vector<16x128xi1>
    %78 = vector.extract_strided_slice %58 {offsets = [0, 0], sizes = [16, 128], strides = [1, 1]} : vector<32x128xf32> to vector<16x128xf32>
    %cst_28 = arith.constant 0.000000e+00 : f32
    %79 = vector.broadcast %cst_28 : f32 to vector<16x128xf32>
    %80 = arith.select %77, %78, %79 : vector<16x128xi1>, vector<16x128xf32>
    %81 = vector.extract_strided_slice %58 {offsets = [16, 0], sizes = [16, 128], strides = [1, 1]} : vector<32x128xf32> to vector<16x128xf32>
    %cst_29 = arith.constant 0.000000e+00 : f32
    %82 = vector.broadcast %cst_29 : f32 to vector<16x128xf32>
    %83 = arith.select %77, %81, %82 : vector<16x128xi1>, vector<16x128xf32>
    %c1_i32_30 = arith.constant 1 : i32
    %84 = tpu.dynamic_rotate %1 by %c1_i32_30 dim 1 : vector<32x128xf32>, i32 -> vector<32x128xf32>
    %c0_i32_31 = arith.constant 0 : i32
    %85 = vector.broadcast %c0_i32_31 : i32 to vector<16x128xi32>
    %86 = arith.addi %2, %85 : vector<16x128xi32>
    %c0_i32_32 = arith.constant 0 : i32
    %87 = vector.broadcast %c0_i32_32 : i32 to vector<16x128xi32>
    %88 = arith.cmpi sge, %86, %87 : vector<16x128xi32>
    %c0_i32_33 = arith.constant 0 : i32
    %89 = vector.broadcast %c0_i32_33 : i32 to vector<16x128xi32>
    %90 = arith.addi %2, %89 : vector<16x128xi32>
    %c16_i32_34 = arith.constant 16 : i32
    %91 = vector.broadcast %c16_i32_34 : i32 to vector<16x128xi32>
    %92 = arith.cmpi slt, %90, %91 : vector<16x128xi32>
    %93 = arith.andi %88, %92 : vector<16x128xi1>
    %c-1_i32_35 = arith.constant -1 : i32
    %94 = vector.broadcast %c-1_i32_35 : i32 to vector<16x128xi32>
    %95 = arith.addi %3, %94 : vector<16x128xi32>
    %c0_i32_36 = arith.constant 0 : i32
    %96 = vector.broadcast %c0_i32_36 : i32 to vector<16x128xi32>
    %97 = arith.cmpi sge, %95, %96 : vector<16x128xi32>
    %98 = arith.andi %93, %97 : vector<16x128xi1>
    %c-1_i32_37 = arith.constant -1 : i32
    %99 = vector.broadcast %c-1_i32_37 : i32 to vector<16x128xi32>
    %100 = arith.addi %3, %99 : vector<16x128xi32>
    %c128_i32_38 = arith.constant 128 : i32
    %101 = vector.broadcast %c128_i32_38 : i32 to vector<16x128xi32>
    %102 = arith.cmpi slt, %100, %101 : vector<16x128xi32>
    %103 = arith.andi %98, %102 : vector<16x128xi1>
    %104 = vector.extract_strided_slice %84 {offsets = [0, 0], sizes = [16, 128], strides = [1, 1]} : vector<32x128xf32> to vector<16x128xf32>
    %cst_39 = arith.constant 0.000000e+00 : f32
    %105 = vector.broadcast %cst_39 : f32 to vector<16x128xf32>
    %106 = arith.select %103, %104, %105 : vector<16x128xi1>, vector<16x128xf32>
    %107 = vector.extract_strided_slice %84 {offsets = [16, 0], sizes = [16, 128], strides = [1, 1]} : vector<32x128xf32> to vector<16x128xf32>
    %cst_40 = arith.constant 0.000000e+00 : f32
    %108 = vector.broadcast %cst_40 : f32 to vector<16x128xf32>
    %109 = arith.select %103, %107, %108 : vector<16x128xi1>, vector<16x128xf32>
    %110 = vector.extract_strided_slice %1 {offsets = [0, 0], sizes = [16, 128], strides = [1, 1]} : vector<32x128xf32> to vector<16x128xf32>
    %111 = vector.extract_strided_slice %1 {offsets = [16, 0], sizes = [16, 128], strides = [1, 1]} : vector<32x128xf32> to vector<16x128xf32>
    %c127_i32_41 = arith.constant 127 : i32
    %112 = tpu.dynamic_rotate %1 by %c127_i32_41 dim 1 : vector<32x128xf32>, i32 -> vector<32x128xf32>
    %c0_i32_42 = arith.constant 0 : i32
    %113 = vector.broadcast %c0_i32_42 : i32 to vector<16x128xi32>
    %114 = arith.addi %2, %113 : vector<16x128xi32>
    %c0_i32_43 = arith.constant 0 : i32
    %115 = vector.broadcast %c0_i32_43 : i32 to vector<16x128xi32>
    %116 = arith.cmpi sge, %114, %115 : vector<16x128xi32>
    %c0_i32_44 = arith.constant 0 : i32
    %117 = vector.broadcast %c0_i32_44 : i32 to vector<16x128xi32>
    %118 = arith.addi %2, %117 : vector<16x128xi32>
    %c16_i32_45 = arith.constant 16 : i32
    %119 = vector.broadcast %c16_i32_45 : i32 to vector<16x128xi32>
    %120 = arith.cmpi slt, %118, %119 : vector<16x128xi32>
    %121 = arith.andi %116, %120 : vector<16x128xi1>
    %c1_i32_46 = arith.constant 1 : i32
    %122 = vector.broadcast %c1_i32_46 : i32 to vector<16x128xi32>
    %123 = arith.addi %3, %122 : vector<16x128xi32>
    %c0_i32_47 = arith.constant 0 : i32
    %124 = vector.broadcast %c0_i32_47 : i32 to vector<16x128xi32>
    %125 = arith.cmpi sge, %123, %124 : vector<16x128xi32>
    %126 = arith.andi %121, %125 : vector<16x128xi1>
    %c1_i32_48 = arith.constant 1 : i32
    %127 = vector.broadcast %c1_i32_48 : i32 to vector<16x128xi32>
    %128 = arith.addi %3, %127 : vector<16x128xi32>
    %c128_i32_49 = arith.constant 128 : i32
    %129 = vector.broadcast %c128_i32_49 : i32 to vector<16x128xi32>
    %130 = arith.cmpi slt, %128, %129 : vector<16x128xi32>
    %131 = arith.andi %126, %130 : vector<16x128xi1>
    %132 = vector.extract_strided_slice %112 {offsets = [0, 0], sizes = [16, 128], strides = [1, 1]} : vector<32x128xf32> to vector<16x128xf32>
    %cst_50 = arith.constant 0.000000e+00 : f32
    %133 = vector.broadcast %cst_50 : f32 to vector<16x128xf32>
    %134 = arith.select %131, %132, %133 : vector<16x128xi1>, vector<16x128xf32>
    %135 = vector.extract_strided_slice %112 {offsets = [16, 0], sizes = [16, 128], strides = [1, 1]} : vector<32x128xf32> to vector<16x128xf32>
    %cst_51 = arith.constant 0.000000e+00 : f32
    %136 = vector.broadcast %cst_51 : f32 to vector<16x128xf32>
    %137 = arith.select %131, %135, %136 : vector<16x128xi1>, vector<16x128xf32>
    %c31_i32 = arith.constant 31 : i32
    %138 = tpu.dynamic_rotate %1 by %c31_i32 dim 0 : vector<32x128xf32>, i32 -> vector<32x128xf32>
    %c1_i32_52 = arith.constant 1 : i32
    %139 = tpu.dynamic_rotate %138 by %c1_i32_52 dim 1 : vector<32x128xf32>, i32 -> vector<32x128xf32>
    %c1_i32_53 = arith.constant 1 : i32
    %140 = vector.broadcast %c1_i32_53 : i32 to vector<16x128xi32>
    %141 = arith.addi %2, %140 : vector<16x128xi32>
    %c0_i32_54 = arith.constant 0 : i32
    %142 = vector.broadcast %c0_i32_54 : i32 to vector<16x128xi32>
    %143 = arith.cmpi sge, %141, %142 : vector<16x128xi32>
    %c1_i32_55 = arith.constant 1 : i32
    %144 = vector.broadcast %c1_i32_55 : i32 to vector<16x128xi32>
    %145 = arith.addi %2, %144 : vector<16x128xi32>
    %c16_i32_56 = arith.constant 16 : i32
    %146 = vector.broadcast %c16_i32_56 : i32 to vector<16x128xi32>
    %147 = arith.cmpi slt, %145, %146 : vector<16x128xi32>
    %148 = arith.andi %143, %147 : vector<16x128xi1>
    %c-1_i32_57 = arith.constant -1 : i32
    %149 = vector.broadcast %c-1_i32_57 : i32 to vector<16x128xi32>
    %150 = arith.addi %3, %149 : vector<16x128xi32>
    %c0_i32_58 = arith.constant 0 : i32
    %151 = vector.broadcast %c0_i32_58 : i32 to vector<16x128xi32>
    %152 = arith.cmpi sge, %150, %151 : vector<16x128xi32>
    %153 = arith.andi %148, %152 : vector<16x128xi1>
    %c-1_i32_59 = arith.constant -1 : i32
    %154 = vector.broadcast %c-1_i32_59 : i32 to vector<16x128xi32>
    %155 = arith.addi %3, %154 : vector<16x128xi32>
    %c128_i32_60 = arith.constant 128 : i32
    %156 = vector.broadcast %c128_i32_60 : i32 to vector<16x128xi32>
    %157 = arith.cmpi slt, %155, %156 : vector<16x128xi32>
    %158 = arith.andi %153, %157 : vector<16x128xi1>
    %159 = vector.extract_strided_slice %139 {offsets = [0, 0], sizes = [16, 128], strides = [1, 1]} : vector<32x128xf32> to vector<16x128xf32>
    %cst_61 = arith.constant 0.000000e+00 : f32
    %160 = vector.broadcast %cst_61 : f32 to vector<16x128xf32>
    %161 = arith.select %158, %159, %160 : vector<16x128xi1>, vector<16x128xf32>
    %162 = vector.extract_strided_slice %139 {offsets = [16, 0], sizes = [16, 128], strides = [1, 1]} : vector<32x128xf32> to vector<16x128xf32>
    %cst_62 = arith.constant 0.000000e+00 : f32
    %163 = vector.broadcast %cst_62 : f32 to vector<16x128xf32>
    %164 = arith.select %158, %162, %163 : vector<16x128xi1>, vector<16x128xf32>
    %c31_i32_63 = arith.constant 31 : i32
    %165 = tpu.dynamic_rotate %1 by %c31_i32_63 dim 0 : vector<32x128xf32>, i32 -> vector<32x128xf32>
    %c1_i32_64 = arith.constant 1 : i32
    %166 = vector.broadcast %c1_i32_64 : i32 to vector<16x128xi32>
    %167 = arith.addi %2, %166 : vector<16x128xi32>
    %c0_i32_65 = arith.constant 0 : i32
    %168 = vector.broadcast %c0_i32_65 : i32 to vector<16x128xi32>
    %169 = arith.cmpi sge, %167, %168 : vector<16x128xi32>
    %c1_i32_66 = arith.constant 1 : i32
    %170 = vector.broadcast %c1_i32_66 : i32 to vector<16x128xi32>
    %171 = arith.addi %2, %170 : vector<16x128xi32>
    %c16_i32_67 = arith.constant 16 : i32
    %172 = vector.broadcast %c16_i32_67 : i32 to vector<16x128xi32>
    %173 = arith.cmpi slt, %171, %172 : vector<16x128xi32>
    %174 = arith.andi %169, %173 : vector<16x128xi1>
    %c0_i32_68 = arith.constant 0 : i32
    %175 = vector.broadcast %c0_i32_68 : i32 to vector<16x128xi32>
    %176 = arith.addi %3, %175 : vector<16x128xi32>
    %c0_i32_69 = arith.constant 0 : i32
    %177 = vector.broadcast %c0_i32_69 : i32 to vector<16x128xi32>
    %178 = arith.cmpi sge, %176, %177 : vector<16x128xi32>
    %179 = arith.andi %174, %178 : vector<16x128xi1>
    %c0_i32_70 = arith.constant 0 : i32
    %180 = vector.broadcast %c0_i32_70 : i32 to vector<16x128xi32>
    %181 = arith.addi %3, %180 : vector<16x128xi32>
    %c128_i32_71 = arith.constant 128 : i32
    %182 = vector.broadcast %c128_i32_71 : i32 to vector<16x128xi32>
    %183 = arith.cmpi slt, %181, %182 : vector<16x128xi32>
    %184 = arith.andi %179, %183 : vector<16x128xi1>
    %185 = vector.extract_strided_slice %165 {offsets = [0, 0], sizes = [16, 128], strides = [1, 1]} : vector<32x128xf32> to vector<16x128xf32>
    %cst_72 = arith.constant 0.000000e+00 : f32
    %186 = vector.broadcast %cst_72 : f32 to vector<16x128xf32>
    %187 = arith.select %184, %185, %186 : vector<16x128xi1>, vector<16x128xf32>
    %188 = vector.extract_strided_slice %165 {offsets = [16, 0], sizes = [16, 128], strides = [1, 1]} : vector<32x128xf32> to vector<16x128xf32>
    %cst_73 = arith.constant 0.000000e+00 : f32
    %189 = vector.broadcast %cst_73 : f32 to vector<16x128xf32>
    %190 = arith.select %184, %188, %189 : vector<16x128xi1>, vector<16x128xf32>
    %c31_i32_74 = arith.constant 31 : i32
    %191 = tpu.dynamic_rotate %1 by %c31_i32_74 dim 0 : vector<32x128xf32>, i32 -> vector<32x128xf32>
    %c127_i32_75 = arith.constant 127 : i32
    %192 = tpu.dynamic_rotate %191 by %c127_i32_75 dim 1 : vector<32x128xf32>, i32 -> vector<32x128xf32>
    %c1_i32_76 = arith.constant 1 : i32
    %193 = vector.broadcast %c1_i32_76 : i32 to vector<16x128xi32>
    %194 = arith.addi %2, %193 : vector<16x128xi32>
    %c0_i32_77 = arith.constant 0 : i32
    %195 = vector.broadcast %c0_i32_77 : i32 to vector<16x128xi32>
    %196 = arith.cmpi sge, %194, %195 : vector<16x128xi32>
    %c1_i32_78 = arith.constant 1 : i32
    %197 = vector.broadcast %c1_i32_78 : i32 to vector<16x128xi32>
    %198 = arith.addi %2, %197 : vector<16x128xi32>
    %c16_i32_79 = arith.constant 16 : i32
    %199 = vector.broadcast %c16_i32_79 : i32 to vector<16x128xi32>
    %200 = arith.cmpi slt, %198, %199 : vector<16x128xi32>
    %201 = arith.andi %196, %200 : vector<16x128xi1>
    %c1_i32_80 = arith.constant 1 : i32
    %202 = vector.broadcast %c1_i32_80 : i32 to vector<16x128xi32>
    %203 = arith.addi %3, %202 : vector<16x128xi32>
    %c0_i32_81 = arith.constant 0 : i32
    %204 = vector.broadcast %c0_i32_81 : i32 to vector<16x128xi32>
    %205 = arith.cmpi sge, %203, %204 : vector<16x128xi32>
    %206 = arith.andi %201, %205 : vector<16x128xi1>
    %c1_i32_82 = arith.constant 1 : i32
    %207 = vector.broadcast %c1_i32_82 : i32 to vector<16x128xi32>
    %208 = arith.addi %3, %207 : vector<16x128xi32>
    %c128_i32_83 = arith.constant 128 : i32
    %209 = vector.broadcast %c128_i32_83 : i32 to vector<16x128xi32>
    %210 = arith.cmpi slt, %208, %209 : vector<16x128xi32>
    %211 = arith.andi %206, %210 : vector<16x128xi1>
    %212 = vector.extract_strided_slice %192 {offsets = [0, 0], sizes = [16, 128], strides = [1, 1]} : vector<32x128xf32> to vector<16x128xf32>
    %cst_84 = arith.constant 0.000000e+00 : f32
    %213 = vector.broadcast %cst_84 : f32 to vector<16x128xf32>
    %214 = arith.select %211, %212, %213 : vector<16x128xi1>, vector<16x128xf32>
    %215 = vector.extract_strided_slice %192 {offsets = [16, 0], sizes = [16, 128], strides = [1, 1]} : vector<32x128xf32> to vector<16x128xf32>
    %cst_85 = arith.constant 0.000000e+00 : f32
    %216 = vector.broadcast %cst_85 : f32 to vector<16x128xf32>
    %217 = arith.select %211, %215, %216 : vector<16x128xi1>, vector<16x128xf32>
    %cst_86 = arith.constant 0.000000e+00 : f32
    %218 = vector.broadcast %cst_86 : f32 to vector<16x128xf32>
    %c0_87 = arith.constant 0 : index
    %219 = memref.load %arg2[%c0_87] : memref<144xf32, #tpu.memory_space<smem>>
    %220 = vector.broadcast %219 : f32 to vector<16x128xf32>
    %221 = arith.mulf %220, %27 : vector<16x128xf32>
    %222 = arith.addf %218, %221 : vector<16x128xf32>
    %c8 = arith.constant 8 : index
    %223 = memref.load %arg2[%c8] : memref<144xf32, #tpu.memory_space<smem>>
    %224 = vector.broadcast %223 : f32 to vector<16x128xf32>
    %225 = arith.mulf %224, %30 : vector<16x128xf32>
    %226 = arith.addf %222, %225 : vector<16x128xf32>
    %c16 = arith.constant 16 : index
    %227 = memref.load %arg2[%c16] : memref<144xf32, #tpu.memory_space<smem>>
    %228 = vector.broadcast %227 : f32 to vector<16x128xf32>
    %229 = arith.mulf %228, %53 : vector<16x128xf32>
    %230 = arith.addf %226, %229 : vector<16x128xf32>
    %c24 = arith.constant 24 : index
    %231 = memref.load %arg2[%c24] : memref<144xf32, #tpu.memory_space<smem>>
    %232 = vector.broadcast %231 : f32 to vector<16x128xf32>
    %233 = arith.mulf %232, %56 : vector<16x128xf32>
    %234 = arith.addf %230, %233 : vector<16x128xf32>
    %c32 = arith.constant 32 : index
    %235 = memref.load %arg2[%c32] : memref<144xf32, #tpu.memory_space<smem>>
    %236 = vector.broadcast %235 : f32 to vector<16x128xf32>
    %237 = arith.mulf %236, %80 : vector<16x128xf32>
    %238 = arith.addf %234, %237 : vector<16x128xf32>
    %c40 = arith.constant 40 : index
    %239 = memref.load %arg2[%c40] : memref<144xf32, #tpu.memory_space<smem>>
    %240 = vector.broadcast %239 : f32 to vector<16x128xf32>
    %241 = arith.mulf %240, %83 : vector<16x128xf32>
    %242 = arith.addf %238, %241 : vector<16x128xf32>
    %c48 = arith.constant 48 : index
    %243 = memref.load %arg2[%c48] : memref<144xf32, #tpu.memory_space<smem>>
    %244 = vector.broadcast %243 : f32 to vector<16x128xf32>
    %245 = arith.mulf %244, %106 : vector<16x128xf32>
    %246 = arith.addf %242, %245 : vector<16x128xf32>
    %c56 = arith.constant 56 : index
    %247 = memref.load %arg2[%c56] : memref<144xf32, #tpu.memory_space<smem>>
    %248 = vector.broadcast %247 : f32 to vector<16x128xf32>
    %249 = arith.mulf %248, %109 : vector<16x128xf32>
    %250 = arith.addf %246, %249 : vector<16x128xf32>
    %c64 = arith.constant 64 : index
    %251 = memref.load %arg2[%c64] : memref<144xf32, #tpu.memory_space<smem>>
    %252 = vector.broadcast %251 : f32 to vector<16x128xf32>
    %253 = arith.mulf %252, %110 : vector<16x128xf32>
    %254 = arith.addf %250, %253 : vector<16x128xf32>
    %c72 = arith.constant 72 : index
    %255 = memref.load %arg2[%c72] : memref<144xf32, #tpu.memory_space<smem>>
    %256 = vector.broadcast %255 : f32 to vector<16x128xf32>
    %257 = arith.mulf %256, %111 : vector<16x128xf32>
    %258 = arith.addf %254, %257 : vector<16x128xf32>
    %c80 = arith.constant 80 : index
    %259 = memref.load %arg2[%c80] : memref<144xf32, #tpu.memory_space<smem>>
    %260 = vector.broadcast %259 : f32 to vector<16x128xf32>
    %261 = arith.mulf %260, %134 : vector<16x128xf32>
    %262 = arith.addf %258, %261 : vector<16x128xf32>
    %c88 = arith.constant 88 : index
    %263 = memref.load %arg2[%c88] : memref<144xf32, #tpu.memory_space<smem>>
    %264 = vector.broadcast %263 : f32 to vector<16x128xf32>
    %265 = arith.mulf %264, %137 : vector<16x128xf32>
    %266 = arith.addf %262, %265 : vector<16x128xf32>
    %c96 = arith.constant 96 : index
    %267 = memref.load %arg2[%c96] : memref<144xf32, #tpu.memory_space<smem>>
    %268 = vector.broadcast %267 : f32 to vector<16x128xf32>
    %269 = arith.mulf %268, %161 : vector<16x128xf32>
    %270 = arith.addf %266, %269 : vector<16x128xf32>
    %c104 = arith.constant 104 : index
    %271 = memref.load %arg2[%c104] : memref<144xf32, #tpu.memory_space<smem>>
    %272 = vector.broadcast %271 : f32 to vector<16x128xf32>
    %273 = arith.mulf %272, %164 : vector<16x128xf32>
    %274 = arith.addf %270, %273 : vector<16x128xf32>
    %c112 = arith.constant 112 : index
    %275 = memref.load %arg2[%c112] : memref<144xf32, #tpu.memory_space<smem>>
    %276 = vector.broadcast %275 : f32 to vector<16x128xf32>
    %277 = arith.mulf %276, %187 : vector<16x128xf32>
    %278 = arith.addf %274, %277 : vector<16x128xf32>
    %c120 = arith.constant 120 : index
    %279 = memref.load %arg2[%c120] : memref<144xf32, #tpu.memory_space<smem>>
    %280 = vector.broadcast %279 : f32 to vector<16x128xf32>
    %281 = arith.mulf %280, %190 : vector<16x128xf32>
    %282 = arith.addf %278, %281 : vector<16x128xf32>
    %c128 = arith.constant 128 : index
    %283 = memref.load %arg2[%c128] : memref<144xf32, #tpu.memory_space<smem>>
    %284 = vector.broadcast %283 : f32 to vector<16x128xf32>
    %285 = arith.mulf %284, %214 : vector<16x128xf32>
    %286 = arith.addf %282, %285 : vector<16x128xf32>
    %c136 = arith.constant 136 : index
    %287 = memref.load %arg2[%c136] : memref<144xf32, #tpu.memory_space<smem>>
    %288 = vector.broadcast %287 : f32 to vector<16x128xf32>
    %289 = arith.mulf %288, %217 : vector<16x128xf32>
    %290 = arith.addf %286, %289 : vector<16x128xf32>
    %c0_88 = arith.constant 0 : index
    %291 = memref.load %arg3[%c0_88] : memref<8xf32, #tpu.memory_space<smem>>
    %292 = vector.broadcast %291 : f32 to vector<16x128xf32>
    %293 = arith.addf %290, %292 : vector<16x128xf32>
    %cst_89 = arith.constant 0.000000e+00 : f32
    %294 = vector.broadcast %cst_89 : f32 to vector<16x128xf32>
    %c1 = arith.constant 1 : index
    %295 = memref.load %arg2[%c1] : memref<144xf32, #tpu.memory_space<smem>>
    %296 = vector.broadcast %295 : f32 to vector<16x128xf32>
    %297 = arith.mulf %296, %27 : vector<16x128xf32>
    %298 = arith.addf %294, %297 : vector<16x128xf32>
    %c9 = arith.constant 9 : index
    %299 = memref.load %arg2[%c9] : memref<144xf32, #tpu.memory_space<smem>>
    %300 = vector.broadcast %299 : f32 to vector<16x128xf32>
    %301 = arith.mulf %300, %30 : vector<16x128xf32>
    %302 = arith.addf %298, %301 : vector<16x128xf32>
    %c17 = arith.constant 17 : index
    %303 = memref.load %arg2[%c17] : memref<144xf32, #tpu.memory_space<smem>>
    %304 = vector.broadcast %303 : f32 to vector<16x128xf32>
    %305 = arith.mulf %304, %53 : vector<16x128xf32>
    %306 = arith.addf %302, %305 : vector<16x128xf32>
    %c25 = arith.constant 25 : index
    %307 = memref.load %arg2[%c25] : memref<144xf32, #tpu.memory_space<smem>>
    %308 = vector.broadcast %307 : f32 to vector<16x128xf32>
    %309 = arith.mulf %308, %56 : vector<16x128xf32>
    %310 = arith.addf %306, %309 : vector<16x128xf32>
    %c33 = arith.constant 33 : index
    %311 = memref.load %arg2[%c33] : memref<144xf32, #tpu.memory_space<smem>>
    %312 = vector.broadcast %311 : f32 to vector<16x128xf32>
    %313 = arith.mulf %312, %80 : vector<16x128xf32>
    %314 = arith.addf %310, %313 : vector<16x128xf32>
    %c41 = arith.constant 41 : index
    %315 = memref.load %arg2[%c41] : memref<144xf32, #tpu.memory_space<smem>>
    %316 = vector.broadcast %315 : f32 to vector<16x128xf32>
    %317 = arith.mulf %316, %83 : vector<16x128xf32>
    %318 = arith.addf %314, %317 : vector<16x128xf32>
    %c49 = arith.constant 49 : index
    %319 = memref.load %arg2[%c49] : memref<144xf32, #tpu.memory_space<smem>>
    %320 = vector.broadcast %319 : f32 to vector<16x128xf32>
    %321 = arith.mulf %320, %106 : vector<16x128xf32>
    %322 = arith.addf %318, %321 : vector<16x128xf32>
    %c57 = arith.constant 57 : index
    %323 = memref.load %arg2[%c57] : memref<144xf32, #tpu.memory_space<smem>>
    %324 = vector.broadcast %323 : f32 to vector<16x128xf32>
    %325 = arith.mulf %324, %109 : vector<16x128xf32>
    %326 = arith.addf %322, %325 : vector<16x128xf32>
    %c65 = arith.constant 65 : index
    %327 = memref.load %arg2[%c65] : memref<144xf32, #tpu.memory_space<smem>>
    %328 = vector.broadcast %327 : f32 to vector<16x128xf32>
    %329 = arith.mulf %328, %110 : vector<16x128xf32>
    %330 = arith.addf %326, %329 : vector<16x128xf32>
    %c73 = arith.constant 73 : index
    %331 = memref.load %arg2[%c73] : memref<144xf32, #tpu.memory_space<smem>>
    %332 = vector.broadcast %331 : f32 to vector<16x128xf32>
    %333 = arith.mulf %332, %111 : vector<16x128xf32>
    %334 = arith.addf %330, %333 : vector<16x128xf32>
    %c81 = arith.constant 81 : index
    %335 = memref.load %arg2[%c81] : memref<144xf32, #tpu.memory_space<smem>>
    %336 = vector.broadcast %335 : f32 to vector<16x128xf32>
    %337 = arith.mulf %336, %134 : vector<16x128xf32>
    %338 = arith.addf %334, %337 : vector<16x128xf32>
    %c89 = arith.constant 89 : index
    %339 = memref.load %arg2[%c89] : memref<144xf32, #tpu.memory_space<smem>>
    %340 = vector.broadcast %339 : f32 to vector<16x128xf32>
    %341 = arith.mulf %340, %137 : vector<16x128xf32>
    %342 = arith.addf %338, %341 : vector<16x128xf32>
    %c97 = arith.constant 97 : index
    %343 = memref.load %arg2[%c97] : memref<144xf32, #tpu.memory_space<smem>>
    %344 = vector.broadcast %343 : f32 to vector<16x128xf32>
    %345 = arith.mulf %344, %161 : vector<16x128xf32>
    %346 = arith.addf %342, %345 : vector<16x128xf32>
    %c105 = arith.constant 105 : index
    %347 = memref.load %arg2[%c105] : memref<144xf32, #tpu.memory_space<smem>>
    %348 = vector.broadcast %347 : f32 to vector<16x128xf32>
    %349 = arith.mulf %348, %164 : vector<16x128xf32>
    %350 = arith.addf %346, %349 : vector<16x128xf32>
    %c113 = arith.constant 113 : index
    %351 = memref.load %arg2[%c113] : memref<144xf32, #tpu.memory_space<smem>>
    %352 = vector.broadcast %351 : f32 to vector<16x128xf32>
    %353 = arith.mulf %352, %187 : vector<16x128xf32>
    %354 = arith.addf %350, %353 : vector<16x128xf32>
    %c121 = arith.constant 121 : index
    %355 = memref.load %arg2[%c121] : memref<144xf32, #tpu.memory_space<smem>>
    %356 = vector.broadcast %355 : f32 to vector<16x128xf32>
    %357 = arith.mulf %356, %190 : vector<16x128xf32>
    %358 = arith.addf %354, %357 : vector<16x128xf32>
    %c129 = arith.constant 129 : index
    %359 = memref.load %arg2[%c129] : memref<144xf32, #tpu.memory_space<smem>>
    %360 = vector.broadcast %359 : f32 to vector<16x128xf32>
    %361 = arith.mulf %360, %214 : vector<16x128xf32>
    %362 = arith.addf %358, %361 : vector<16x128xf32>
    %c137 = arith.constant 137 : index
    %363 = memref.load %arg2[%c137] : memref<144xf32, #tpu.memory_space<smem>>
    %364 = vector.broadcast %363 : f32 to vector<16x128xf32>
    %365 = arith.mulf %364, %217 : vector<16x128xf32>
    %366 = arith.addf %362, %365 : vector<16x128xf32>
    %c1_90 = arith.constant 1 : index
    %367 = memref.load %arg3[%c1_90] : memref<8xf32, #tpu.memory_space<smem>>
    %368 = vector.broadcast %367 : f32 to vector<16x128xf32>
    %369 = arith.addf %366, %368 : vector<16x128xf32>
    %cst_91 = arith.constant 0.000000e+00 : f32
    %370 = vector.broadcast %cst_91 : f32 to vector<16x128xf32>
    %c2 = arith.constant 2 : index
    %371 = memref.load %arg2[%c2] : memref<144xf32, #tpu.memory_space<smem>>
    %372 = vector.broadcast %371 : f32 to vector<16x128xf32>
    %373 = arith.mulf %372, %27 : vector<16x128xf32>
    %374 = arith.addf %370, %373 : vector<16x128xf32>
    %c10 = arith.constant 10 : index
    %375 = memref.load %arg2[%c10] : memref<144xf32, #tpu.memory_space<smem>>
    %376 = vector.broadcast %375 : f32 to vector<16x128xf32>
    %377 = arith.mulf %376, %30 : vector<16x128xf32>
    %378 = arith.addf %374, %377 : vector<16x128xf32>
    %c18 = arith.constant 18 : index
    %379 = memref.load %arg2[%c18] : memref<144xf32, #tpu.memory_space<smem>>
    %380 = vector.broadcast %379 : f32 to vector<16x128xf32>
    %381 = arith.mulf %380, %53 : vector<16x128xf32>
    %382 = arith.addf %378, %381 : vector<16x128xf32>
    %c26 = arith.constant 26 : index
    %383 = memref.load %arg2[%c26] : memref<144xf32, #tpu.memory_space<smem>>
    %384 = vector.broadcast %383 : f32 to vector<16x128xf32>
    %385 = arith.mulf %384, %56 : vector<16x128xf32>
    %386 = arith.addf %382, %385 : vector<16x128xf32>
    %c34 = arith.constant 34 : index
    %387 = memref.load %arg2[%c34] : memref<144xf32, #tpu.memory_space<smem>>
    %388 = vector.broadcast %387 : f32 to vector<16x128xf32>
    %389 = arith.mulf %388, %80 : vector<16x128xf32>
    %390 = arith.addf %386, %389 : vector<16x128xf32>
    %c42 = arith.constant 42 : index
    %391 = memref.load %arg2[%c42] : memref<144xf32, #tpu.memory_space<smem>>
    %392 = vector.broadcast %391 : f32 to vector<16x128xf32>
    %393 = arith.mulf %392, %83 : vector<16x128xf32>
    %394 = arith.addf %390, %393 : vector<16x128xf32>
    %c50 = arith.constant 50 : index
    %395 = memref.load %arg2[%c50] : memref<144xf32, #tpu.memory_space<smem>>
    %396 = vector.broadcast %395 : f32 to vector<16x128xf32>
    %397 = arith.mulf %396, %106 : vector<16x128xf32>
    %398 = arith.addf %394, %397 : vector<16x128xf32>
    %c58 = arith.constant 58 : index
    %399 = memref.load %arg2[%c58] : memref<144xf32, #tpu.memory_space<smem>>
    %400 = vector.broadcast %399 : f32 to vector<16x128xf32>
    %401 = arith.mulf %400, %109 : vector<16x128xf32>
    %402 = arith.addf %398, %401 : vector<16x128xf32>
    %c66 = arith.constant 66 : index
    %403 = memref.load %arg2[%c66] : memref<144xf32, #tpu.memory_space<smem>>
    %404 = vector.broadcast %403 : f32 to vector<16x128xf32>
    %405 = arith.mulf %404, %110 : vector<16x128xf32>
    %406 = arith.addf %402, %405 : vector<16x128xf32>
    %c74 = arith.constant 74 : index
    %407 = memref.load %arg2[%c74] : memref<144xf32, #tpu.memory_space<smem>>
    %408 = vector.broadcast %407 : f32 to vector<16x128xf32>
    %409 = arith.mulf %408, %111 : vector<16x128xf32>
    %410 = arith.addf %406, %409 : vector<16x128xf32>
    %c82 = arith.constant 82 : index
    %411 = memref.load %arg2[%c82] : memref<144xf32, #tpu.memory_space<smem>>
    %412 = vector.broadcast %411 : f32 to vector<16x128xf32>
    %413 = arith.mulf %412, %134 : vector<16x128xf32>
    %414 = arith.addf %410, %413 : vector<16x128xf32>
    %c90 = arith.constant 90 : index
    %415 = memref.load %arg2[%c90] : memref<144xf32, #tpu.memory_space<smem>>
    %416 = vector.broadcast %415 : f32 to vector<16x128xf32>
    %417 = arith.mulf %416, %137 : vector<16x128xf32>
    %418 = arith.addf %414, %417 : vector<16x128xf32>
    %c98 = arith.constant 98 : index
    %419 = memref.load %arg2[%c98] : memref<144xf32, #tpu.memory_space<smem>>
    %420 = vector.broadcast %419 : f32 to vector<16x128xf32>
    %421 = arith.mulf %420, %161 : vector<16x128xf32>
    %422 = arith.addf %418, %421 : vector<16x128xf32>
    %c106 = arith.constant 106 : index
    %423 = memref.load %arg2[%c106] : memref<144xf32, #tpu.memory_space<smem>>
    %424 = vector.broadcast %423 : f32 to vector<16x128xf32>
    %425 = arith.mulf %424, %164 : vector<16x128xf32>
    %426 = arith.addf %422, %425 : vector<16x128xf32>
    %c114 = arith.constant 114 : index
    %427 = memref.load %arg2[%c114] : memref<144xf32, #tpu.memory_space<smem>>
    %428 = vector.broadcast %427 : f32 to vector<16x128xf32>
    %429 = arith.mulf %428, %187 : vector<16x128xf32>
    %430 = arith.addf %426, %429 : vector<16x128xf32>
    %c122 = arith.constant 122 : index
    %431 = memref.load %arg2[%c122] : memref<144xf32, #tpu.memory_space<smem>>
    %432 = vector.broadcast %431 : f32 to vector<16x128xf32>
    %433 = arith.mulf %432, %190 : vector<16x128xf32>
    %434 = arith.addf %430, %433 : vector<16x128xf32>
    %c130 = arith.constant 130 : index
    %435 = memref.load %arg2[%c130] : memref<144xf32, #tpu.memory_space<smem>>
    %436 = vector.broadcast %435 : f32 to vector<16x128xf32>
    %437 = arith.mulf %436, %214 : vector<16x128xf32>
    %438 = arith.addf %434, %437 : vector<16x128xf32>
    %c138 = arith.constant 138 : index
    %439 = memref.load %arg2[%c138] : memref<144xf32, #tpu.memory_space<smem>>
    %440 = vector.broadcast %439 : f32 to vector<16x128xf32>
    %441 = arith.mulf %440, %217 : vector<16x128xf32>
    %442 = arith.addf %438, %441 : vector<16x128xf32>
    %c2_92 = arith.constant 2 : index
    %443 = memref.load %arg3[%c2_92] : memref<8xf32, #tpu.memory_space<smem>>
    %444 = vector.broadcast %443 : f32 to vector<16x128xf32>
    %445 = arith.addf %442, %444 : vector<16x128xf32>
    %cst_93 = arith.constant 0.000000e+00 : f32
    %446 = vector.broadcast %cst_93 : f32 to vector<16x128xf32>
    %c3 = arith.constant 3 : index
    %447 = memref.load %arg2[%c3] : memref<144xf32, #tpu.memory_space<smem>>
    %448 = vector.broadcast %447 : f32 to vector<16x128xf32>
    %449 = arith.mulf %448, %27 : vector<16x128xf32>
    %450 = arith.addf %446, %449 : vector<16x128xf32>
    %c11 = arith.constant 11 : index
    %451 = memref.load %arg2[%c11] : memref<144xf32, #tpu.memory_space<smem>>
    %452 = vector.broadcast %451 : f32 to vector<16x128xf32>
    %453 = arith.mulf %452, %30 : vector<16x128xf32>
    %454 = arith.addf %450, %453 : vector<16x128xf32>
    %c19 = arith.constant 19 : index
    %455 = memref.load %arg2[%c19] : memref<144xf32, #tpu.memory_space<smem>>
    %456 = vector.broadcast %455 : f32 to vector<16x128xf32>
    %457 = arith.mulf %456, %53 : vector<16x128xf32>
    %458 = arith.addf %454, %457 : vector<16x128xf32>
    %c27 = arith.constant 27 : index
    %459 = memref.load %arg2[%c27] : memref<144xf32, #tpu.memory_space<smem>>
    %460 = vector.broadcast %459 : f32 to vector<16x128xf32>
    %461 = arith.mulf %460, %56 : vector<16x128xf32>
    %462 = arith.addf %458, %461 : vector<16x128xf32>
    %c35 = arith.constant 35 : index
    %463 = memref.load %arg2[%c35] : memref<144xf32, #tpu.memory_space<smem>>
    %464 = vector.broadcast %463 : f32 to vector<16x128xf32>
    %465 = arith.mulf %464, %80 : vector<16x128xf32>
    %466 = arith.addf %462, %465 : vector<16x128xf32>
    %c43 = arith.constant 43 : index
    %467 = memref.load %arg2[%c43] : memref<144xf32, #tpu.memory_space<smem>>
    %468 = vector.broadcast %467 : f32 to vector<16x128xf32>
    %469 = arith.mulf %468, %83 : vector<16x128xf32>
    %470 = arith.addf %466, %469 : vector<16x128xf32>
    %c51 = arith.constant 51 : index
    %471 = memref.load %arg2[%c51] : memref<144xf32, #tpu.memory_space<smem>>
    %472 = vector.broadcast %471 : f32 to vector<16x128xf32>
    %473 = arith.mulf %472, %106 : vector<16x128xf32>
    %474 = arith.addf %470, %473 : vector<16x128xf32>
    %c59 = arith.constant 59 : index
    %475 = memref.load %arg2[%c59] : memref<144xf32, #tpu.memory_space<smem>>
    %476 = vector.broadcast %475 : f32 to vector<16x128xf32>
    %477 = arith.mulf %476, %109 : vector<16x128xf32>
    %478 = arith.addf %474, %477 : vector<16x128xf32>
    %c67 = arith.constant 67 : index
    %479 = memref.load %arg2[%c67] : memref<144xf32, #tpu.memory_space<smem>>
    %480 = vector.broadcast %479 : f32 to vector<16x128xf32>
    %481 = arith.mulf %480, %110 : vector<16x128xf32>
    %482 = arith.addf %478, %481 : vector<16x128xf32>
    %c75 = arith.constant 75 : index
    %483 = memref.load %arg2[%c75] : memref<144xf32, #tpu.memory_space<smem>>
    %484 = vector.broadcast %483 : f32 to vector<16x128xf32>
    %485 = arith.mulf %484, %111 : vector<16x128xf32>
    %486 = arith.addf %482, %485 : vector<16x128xf32>
    %c83 = arith.constant 83 : index
    %487 = memref.load %arg2[%c83] : memref<144xf32, #tpu.memory_space<smem>>
    %488 = vector.broadcast %487 : f32 to vector<16x128xf32>
    %489 = arith.mulf %488, %134 : vector<16x128xf32>
    %490 = arith.addf %486, %489 : vector<16x128xf32>
    %c91 = arith.constant 91 : index
    %491 = memref.load %arg2[%c91] : memref<144xf32, #tpu.memory_space<smem>>
    %492 = vector.broadcast %491 : f32 to vector<16x128xf32>
    %493 = arith.mulf %492, %137 : vector<16x128xf32>
    %494 = arith.addf %490, %493 : vector<16x128xf32>
    %c99 = arith.constant 99 : index
    %495 = memref.load %arg2[%c99] : memref<144xf32, #tpu.memory_space<smem>>
    %496 = vector.broadcast %495 : f32 to vector<16x128xf32>
    %497 = arith.mulf %496, %161 : vector<16x128xf32>
    %498 = arith.addf %494, %497 : vector<16x128xf32>
    %c107 = arith.constant 107 : index
    %499 = memref.load %arg2[%c107] : memref<144xf32, #tpu.memory_space<smem>>
    %500 = vector.broadcast %499 : f32 to vector<16x128xf32>
    %501 = arith.mulf %500, %164 : vector<16x128xf32>
    %502 = arith.addf %498, %501 : vector<16x128xf32>
    %c115 = arith.constant 115 : index
    %503 = memref.load %arg2[%c115] : memref<144xf32, #tpu.memory_space<smem>>
    %504 = vector.broadcast %503 : f32 to vector<16x128xf32>
    %505 = arith.mulf %504, %187 : vector<16x128xf32>
    %506 = arith.addf %502, %505 : vector<16x128xf32>
    %c123 = arith.constant 123 : index
    %507 = memref.load %arg2[%c123] : memref<144xf32, #tpu.memory_space<smem>>
    %508 = vector.broadcast %507 : f32 to vector<16x128xf32>
    %509 = arith.mulf %508, %190 : vector<16x128xf32>
    %510 = arith.addf %506, %509 : vector<16x128xf32>
    %c131 = arith.constant 131 : index
    %511 = memref.load %arg2[%c131] : memref<144xf32, #tpu.memory_space<smem>>
    %512 = vector.broadcast %511 : f32 to vector<16x128xf32>
    %513 = arith.mulf %512, %214 : vector<16x128xf32>
    %514 = arith.addf %510, %513 : vector<16x128xf32>
    %c139 = arith.constant 139 : index
    %515 = memref.load %arg2[%c139] : memref<144xf32, #tpu.memory_space<smem>>
    %516 = vector.broadcast %515 : f32 to vector<16x128xf32>
    %517 = arith.mulf %516, %217 : vector<16x128xf32>
    %518 = arith.addf %514, %517 : vector<16x128xf32>
    %c3_94 = arith.constant 3 : index
    %519 = memref.load %arg3[%c3_94] : memref<8xf32, #tpu.memory_space<smem>>
    %520 = vector.broadcast %519 : f32 to vector<16x128xf32>
    %521 = arith.addf %518, %520 : vector<16x128xf32>
    %cst_95 = arith.constant 0.000000e+00 : f32
    %522 = vector.broadcast %cst_95 : f32 to vector<16x128xf32>
    %c4 = arith.constant 4 : index
    %523 = memref.load %arg2[%c4] : memref<144xf32, #tpu.memory_space<smem>>
    %524 = vector.broadcast %523 : f32 to vector<16x128xf32>
    %525 = arith.mulf %524, %27 : vector<16x128xf32>
    %526 = arith.addf %522, %525 : vector<16x128xf32>
    %c12 = arith.constant 12 : index
    %527 = memref.load %arg2[%c12] : memref<144xf32, #tpu.memory_space<smem>>
    %528 = vector.broadcast %527 : f32 to vector<16x128xf32>
    %529 = arith.mulf %528, %30 : vector<16x128xf32>
    %530 = arith.addf %526, %529 : vector<16x128xf32>
    %c20 = arith.constant 20 : index
    %531 = memref.load %arg2[%c20] : memref<144xf32, #tpu.memory_space<smem>>
    %532 = vector.broadcast %531 : f32 to vector<16x128xf32>
    %533 = arith.mulf %532, %53 : vector<16x128xf32>
    %534 = arith.addf %530, %533 : vector<16x128xf32>
    %c28 = arith.constant 28 : index
    %535 = memref.load %arg2[%c28] : memref<144xf32, #tpu.memory_space<smem>>
    %536 = vector.broadcast %535 : f32 to vector<16x128xf32>
    %537 = arith.mulf %536, %56 : vector<16x128xf32>
    %538 = arith.addf %534, %537 : vector<16x128xf32>
    %c36 = arith.constant 36 : index
    %539 = memref.load %arg2[%c36] : memref<144xf32, #tpu.memory_space<smem>>
    %540 = vector.broadcast %539 : f32 to vector<16x128xf32>
    %541 = arith.mulf %540, %80 : vector<16x128xf32>
    %542 = arith.addf %538, %541 : vector<16x128xf32>
    %c44 = arith.constant 44 : index
    %543 = memref.load %arg2[%c44] : memref<144xf32, #tpu.memory_space<smem>>
    %544 = vector.broadcast %543 : f32 to vector<16x128xf32>
    %545 = arith.mulf %544, %83 : vector<16x128xf32>
    %546 = arith.addf %542, %545 : vector<16x128xf32>
    %c52 = arith.constant 52 : index
    %547 = memref.load %arg2[%c52] : memref<144xf32, #tpu.memory_space<smem>>
    %548 = vector.broadcast %547 : f32 to vector<16x128xf32>
    %549 = arith.mulf %548, %106 : vector<16x128xf32>
    %550 = arith.addf %546, %549 : vector<16x128xf32>
    %c60 = arith.constant 60 : index
    %551 = memref.load %arg2[%c60] : memref<144xf32, #tpu.memory_space<smem>>
    %552 = vector.broadcast %551 : f32 to vector<16x128xf32>
    %553 = arith.mulf %552, %109 : vector<16x128xf32>
    %554 = arith.addf %550, %553 : vector<16x128xf32>
    %c68 = arith.constant 68 : index
    %555 = memref.load %arg2[%c68] : memref<144xf32, #tpu.memory_space<smem>>
    %556 = vector.broadcast %555 : f32 to vector<16x128xf32>
    %557 = arith.mulf %556, %110 : vector<16x128xf32>
    %558 = arith.addf %554, %557 : vector<16x128xf32>
    %c76 = arith.constant 76 : index
    %559 = memref.load %arg2[%c76] : memref<144xf32, #tpu.memory_space<smem>>
    %560 = vector.broadcast %559 : f32 to vector<16x128xf32>
    %561 = arith.mulf %560, %111 : vector<16x128xf32>
    %562 = arith.addf %558, %561 : vector<16x128xf32>
    %c84 = arith.constant 84 : index
    %563 = memref.load %arg2[%c84] : memref<144xf32, #tpu.memory_space<smem>>
    %564 = vector.broadcast %563 : f32 to vector<16x128xf32>
    %565 = arith.mulf %564, %134 : vector<16x128xf32>
    %566 = arith.addf %562, %565 : vector<16x128xf32>
    %c92 = arith.constant 92 : index
    %567 = memref.load %arg2[%c92] : memref<144xf32, #tpu.memory_space<smem>>
    %568 = vector.broadcast %567 : f32 to vector<16x128xf32>
    %569 = arith.mulf %568, %137 : vector<16x128xf32>
    %570 = arith.addf %566, %569 : vector<16x128xf32>
    %c100 = arith.constant 100 : index
    %571 = memref.load %arg2[%c100] : memref<144xf32, #tpu.memory_space<smem>>
    %572 = vector.broadcast %571 : f32 to vector<16x128xf32>
    %573 = arith.mulf %572, %161 : vector<16x128xf32>
    %574 = arith.addf %570, %573 : vector<16x128xf32>
    %c108 = arith.constant 108 : index
    %575 = memref.load %arg2[%c108] : memref<144xf32, #tpu.memory_space<smem>>
    %576 = vector.broadcast %575 : f32 to vector<16x128xf32>
    %577 = arith.mulf %576, %164 : vector<16x128xf32>
    %578 = arith.addf %574, %577 : vector<16x128xf32>
    %c116 = arith.constant 116 : index
    %579 = memref.load %arg2[%c116] : memref<144xf32, #tpu.memory_space<smem>>
    %580 = vector.broadcast %579 : f32 to vector<16x128xf32>
    %581 = arith.mulf %580, %187 : vector<16x128xf32>
    %582 = arith.addf %578, %581 : vector<16x128xf32>
    %c124 = arith.constant 124 : index
    %583 = memref.load %arg2[%c124] : memref<144xf32, #tpu.memory_space<smem>>
    %584 = vector.broadcast %583 : f32 to vector<16x128xf32>
    %585 = arith.mulf %584, %190 : vector<16x128xf32>
    %586 = arith.addf %582, %585 : vector<16x128xf32>
    %c132 = arith.constant 132 : index
    %587 = memref.load %arg2[%c132] : memref<144xf32, #tpu.memory_space<smem>>
    %588 = vector.broadcast %587 : f32 to vector<16x128xf32>
    %589 = arith.mulf %588, %214 : vector<16x128xf32>
    %590 = arith.addf %586, %589 : vector<16x128xf32>
    %c140 = arith.constant 140 : index
    %591 = memref.load %arg2[%c140] : memref<144xf32, #tpu.memory_space<smem>>
    %592 = vector.broadcast %591 : f32 to vector<16x128xf32>
    %593 = arith.mulf %592, %217 : vector<16x128xf32>
    %594 = arith.addf %590, %593 : vector<16x128xf32>
    %c4_96 = arith.constant 4 : index
    %595 = memref.load %arg3[%c4_96] : memref<8xf32, #tpu.memory_space<smem>>
    %596 = vector.broadcast %595 : f32 to vector<16x128xf32>
    %597 = arith.addf %594, %596 : vector<16x128xf32>
    %cst_97 = arith.constant 0.000000e+00 : f32
    %598 = vector.broadcast %cst_97 : f32 to vector<16x128xf32>
    %c5 = arith.constant 5 : index
    %599 = memref.load %arg2[%c5] : memref<144xf32, #tpu.memory_space<smem>>
    %600 = vector.broadcast %599 : f32 to vector<16x128xf32>
    %601 = arith.mulf %600, %27 : vector<16x128xf32>
    %602 = arith.addf %598, %601 : vector<16x128xf32>
    %c13 = arith.constant 13 : index
    %603 = memref.load %arg2[%c13] : memref<144xf32, #tpu.memory_space<smem>>
    %604 = vector.broadcast %603 : f32 to vector<16x128xf32>
    %605 = arith.mulf %604, %30 : vector<16x128xf32>
    %606 = arith.addf %602, %605 : vector<16x128xf32>
    %c21 = arith.constant 21 : index
    %607 = memref.load %arg2[%c21] : memref<144xf32, #tpu.memory_space<smem>>
    %608 = vector.broadcast %607 : f32 to vector<16x128xf32>
    %609 = arith.mulf %608, %53 : vector<16x128xf32>
    %610 = arith.addf %606, %609 : vector<16x128xf32>
    %c29 = arith.constant 29 : index
    %611 = memref.load %arg2[%c29] : memref<144xf32, #tpu.memory_space<smem>>
    %612 = vector.broadcast %611 : f32 to vector<16x128xf32>
    %613 = arith.mulf %612, %56 : vector<16x128xf32>
    %614 = arith.addf %610, %613 : vector<16x128xf32>
    %c37 = arith.constant 37 : index
    %615 = memref.load %arg2[%c37] : memref<144xf32, #tpu.memory_space<smem>>
    %616 = vector.broadcast %615 : f32 to vector<16x128xf32>
    %617 = arith.mulf %616, %80 : vector<16x128xf32>
    %618 = arith.addf %614, %617 : vector<16x128xf32>
    %c45 = arith.constant 45 : index
    %619 = memref.load %arg2[%c45] : memref<144xf32, #tpu.memory_space<smem>>
    %620 = vector.broadcast %619 : f32 to vector<16x128xf32>
    %621 = arith.mulf %620, %83 : vector<16x128xf32>
    %622 = arith.addf %618, %621 : vector<16x128xf32>
    %c53 = arith.constant 53 : index
    %623 = memref.load %arg2[%c53] : memref<144xf32, #tpu.memory_space<smem>>
    %624 = vector.broadcast %623 : f32 to vector<16x128xf32>
    %625 = arith.mulf %624, %106 : vector<16x128xf32>
    %626 = arith.addf %622, %625 : vector<16x128xf32>
    %c61 = arith.constant 61 : index
    %627 = memref.load %arg2[%c61] : memref<144xf32, #tpu.memory_space<smem>>
    %628 = vector.broadcast %627 : f32 to vector<16x128xf32>
    %629 = arith.mulf %628, %109 : vector<16x128xf32>
    %630 = arith.addf %626, %629 : vector<16x128xf32>
    %c69 = arith.constant 69 : index
    %631 = memref.load %arg2[%c69] : memref<144xf32, #tpu.memory_space<smem>>
    %632 = vector.broadcast %631 : f32 to vector<16x128xf32>
    %633 = arith.mulf %632, %110 : vector<16x128xf32>
    %634 = arith.addf %630, %633 : vector<16x128xf32>
    %c77 = arith.constant 77 : index
    %635 = memref.load %arg2[%c77] : memref<144xf32, #tpu.memory_space<smem>>
    %636 = vector.broadcast %635 : f32 to vector<16x128xf32>
    %637 = arith.mulf %636, %111 : vector<16x128xf32>
    %638 = arith.addf %634, %637 : vector<16x128xf32>
    %c85 = arith.constant 85 : index
    %639 = memref.load %arg2[%c85] : memref<144xf32, #tpu.memory_space<smem>>
    %640 = vector.broadcast %639 : f32 to vector<16x128xf32>
    %641 = arith.mulf %640, %134 : vector<16x128xf32>
    %642 = arith.addf %638, %641 : vector<16x128xf32>
    %c93 = arith.constant 93 : index
    %643 = memref.load %arg2[%c93] : memref<144xf32, #tpu.memory_space<smem>>
    %644 = vector.broadcast %643 : f32 to vector<16x128xf32>
    %645 = arith.mulf %644, %137 : vector<16x128xf32>
    %646 = arith.addf %642, %645 : vector<16x128xf32>
    %c101 = arith.constant 101 : index
    %647 = memref.load %arg2[%c101] : memref<144xf32, #tpu.memory_space<smem>>
    %648 = vector.broadcast %647 : f32 to vector<16x128xf32>
    %649 = arith.mulf %648, %161 : vector<16x128xf32>
    %650 = arith.addf %646, %649 : vector<16x128xf32>
    %c109 = arith.constant 109 : index
    %651 = memref.load %arg2[%c109] : memref<144xf32, #tpu.memory_space<smem>>
    %652 = vector.broadcast %651 : f32 to vector<16x128xf32>
    %653 = arith.mulf %652, %164 : vector<16x128xf32>
    %654 = arith.addf %650, %653 : vector<16x128xf32>
    %c117 = arith.constant 117 : index
    %655 = memref.load %arg2[%c117] : memref<144xf32, #tpu.memory_space<smem>>
    %656 = vector.broadcast %655 : f32 to vector<16x128xf32>
    %657 = arith.mulf %656, %187 : vector<16x128xf32>
    %658 = arith.addf %654, %657 : vector<16x128xf32>
    %c125 = arith.constant 125 : index
    %659 = memref.load %arg2[%c125] : memref<144xf32, #tpu.memory_space<smem>>
    %660 = vector.broadcast %659 : f32 to vector<16x128xf32>
    %661 = arith.mulf %660, %190 : vector<16x128xf32>
    %662 = arith.addf %658, %661 : vector<16x128xf32>
    %c133 = arith.constant 133 : index
    %663 = memref.load %arg2[%c133] : memref<144xf32, #tpu.memory_space<smem>>
    %664 = vector.broadcast %663 : f32 to vector<16x128xf32>
    %665 = arith.mulf %664, %214 : vector<16x128xf32>
    %666 = arith.addf %662, %665 : vector<16x128xf32>
    %c141 = arith.constant 141 : index
    %667 = memref.load %arg2[%c141] : memref<144xf32, #tpu.memory_space<smem>>
    %668 = vector.broadcast %667 : f32 to vector<16x128xf32>
    %669 = arith.mulf %668, %217 : vector<16x128xf32>
    %670 = arith.addf %666, %669 : vector<16x128xf32>
    %c5_98 = arith.constant 5 : index
    %671 = memref.load %arg3[%c5_98] : memref<8xf32, #tpu.memory_space<smem>>
    %672 = vector.broadcast %671 : f32 to vector<16x128xf32>
    %673 = arith.addf %670, %672 : vector<16x128xf32>
    %cst_99 = arith.constant 0.000000e+00 : f32
    %674 = vector.broadcast %cst_99 : f32 to vector<16x128xf32>
    %c6 = arith.constant 6 : index
    %675 = memref.load %arg2[%c6] : memref<144xf32, #tpu.memory_space<smem>>
    %676 = vector.broadcast %675 : f32 to vector<16x128xf32>
    %677 = arith.mulf %676, %27 : vector<16x128xf32>
    %678 = arith.addf %674, %677 : vector<16x128xf32>
    %c14 = arith.constant 14 : index
    %679 = memref.load %arg2[%c14] : memref<144xf32, #tpu.memory_space<smem>>
    %680 = vector.broadcast %679 : f32 to vector<16x128xf32>
    %681 = arith.mulf %680, %30 : vector<16x128xf32>
    %682 = arith.addf %678, %681 : vector<16x128xf32>
    %c22 = arith.constant 22 : index
    %683 = memref.load %arg2[%c22] : memref<144xf32, #tpu.memory_space<smem>>
    %684 = vector.broadcast %683 : f32 to vector<16x128xf32>
    %685 = arith.mulf %684, %53 : vector<16x128xf32>
    %686 = arith.addf %682, %685 : vector<16x128xf32>
    %c30 = arith.constant 30 : index
    %687 = memref.load %arg2[%c30] : memref<144xf32, #tpu.memory_space<smem>>
    %688 = vector.broadcast %687 : f32 to vector<16x128xf32>
    %689 = arith.mulf %688, %56 : vector<16x128xf32>
    %690 = arith.addf %686, %689 : vector<16x128xf32>
    %c38 = arith.constant 38 : index
    %691 = memref.load %arg2[%c38] : memref<144xf32, #tpu.memory_space<smem>>
    %692 = vector.broadcast %691 : f32 to vector<16x128xf32>
    %693 = arith.mulf %692, %80 : vector<16x128xf32>
    %694 = arith.addf %690, %693 : vector<16x128xf32>
    %c46 = arith.constant 46 : index
    %695 = memref.load %arg2[%c46] : memref<144xf32, #tpu.memory_space<smem>>
    %696 = vector.broadcast %695 : f32 to vector<16x128xf32>
    %697 = arith.mulf %696, %83 : vector<16x128xf32>
    %698 = arith.addf %694, %697 : vector<16x128xf32>
    %c54 = arith.constant 54 : index
    %699 = memref.load %arg2[%c54] : memref<144xf32, #tpu.memory_space<smem>>
    %700 = vector.broadcast %699 : f32 to vector<16x128xf32>
    %701 = arith.mulf %700, %106 : vector<16x128xf32>
    %702 = arith.addf %698, %701 : vector<16x128xf32>
    %c62 = arith.constant 62 : index
    %703 = memref.load %arg2[%c62] : memref<144xf32, #tpu.memory_space<smem>>
    %704 = vector.broadcast %703 : f32 to vector<16x128xf32>
    %705 = arith.mulf %704, %109 : vector<16x128xf32>
    %706 = arith.addf %702, %705 : vector<16x128xf32>
    %c70 = arith.constant 70 : index
    %707 = memref.load %arg2[%c70] : memref<144xf32, #tpu.memory_space<smem>>
    %708 = vector.broadcast %707 : f32 to vector<16x128xf32>
    %709 = arith.mulf %708, %110 : vector<16x128xf32>
    %710 = arith.addf %706, %709 : vector<16x128xf32>
    %c78 = arith.constant 78 : index
    %711 = memref.load %arg2[%c78] : memref<144xf32, #tpu.memory_space<smem>>
    %712 = vector.broadcast %711 : f32 to vector<16x128xf32>
    %713 = arith.mulf %712, %111 : vector<16x128xf32>
    %714 = arith.addf %710, %713 : vector<16x128xf32>
    %c86 = arith.constant 86 : index
    %715 = memref.load %arg2[%c86] : memref<144xf32, #tpu.memory_space<smem>>
    %716 = vector.broadcast %715 : f32 to vector<16x128xf32>
    %717 = arith.mulf %716, %134 : vector<16x128xf32>
    %718 = arith.addf %714, %717 : vector<16x128xf32>
    %c94 = arith.constant 94 : index
    %719 = memref.load %arg2[%c94] : memref<144xf32, #tpu.memory_space<smem>>
    %720 = vector.broadcast %719 : f32 to vector<16x128xf32>
    %721 = arith.mulf %720, %137 : vector<16x128xf32>
    %722 = arith.addf %718, %721 : vector<16x128xf32>
    %c102 = arith.constant 102 : index
    %723 = memref.load %arg2[%c102] : memref<144xf32, #tpu.memory_space<smem>>
    %724 = vector.broadcast %723 : f32 to vector<16x128xf32>
    %725 = arith.mulf %724, %161 : vector<16x128xf32>
    %726 = arith.addf %722, %725 : vector<16x128xf32>
    %c110 = arith.constant 110 : index
    %727 = memref.load %arg2[%c110] : memref<144xf32, #tpu.memory_space<smem>>
    %728 = vector.broadcast %727 : f32 to vector<16x128xf32>
    %729 = arith.mulf %728, %164 : vector<16x128xf32>
    %730 = arith.addf %726, %729 : vector<16x128xf32>
    %c118 = arith.constant 118 : index
    %731 = memref.load %arg2[%c118] : memref<144xf32, #tpu.memory_space<smem>>
    %732 = vector.broadcast %731 : f32 to vector<16x128xf32>
    %733 = arith.mulf %732, %187 : vector<16x128xf32>
    %734 = arith.addf %730, %733 : vector<16x128xf32>
    %c126 = arith.constant 126 : index
    %735 = memref.load %arg2[%c126] : memref<144xf32, #tpu.memory_space<smem>>
    %736 = vector.broadcast %735 : f32 to vector<16x128xf32>
    %737 = arith.mulf %736, %190 : vector<16x128xf32>
    %738 = arith.addf %734, %737 : vector<16x128xf32>
    %c134 = arith.constant 134 : index
    %739 = memref.load %arg2[%c134] : memref<144xf32, #tpu.memory_space<smem>>
    %740 = vector.broadcast %739 : f32 to vector<16x128xf32>
    %741 = arith.mulf %740, %214 : vector<16x128xf32>
    %742 = arith.addf %738, %741 : vector<16x128xf32>
    %c142 = arith.constant 142 : index
    %743 = memref.load %arg2[%c142] : memref<144xf32, #tpu.memory_space<smem>>
    %744 = vector.broadcast %743 : f32 to vector<16x128xf32>
    %745 = arith.mulf %744, %217 : vector<16x128xf32>
    %746 = arith.addf %742, %745 : vector<16x128xf32>
    %c6_100 = arith.constant 6 : index
    %747 = memref.load %arg3[%c6_100] : memref<8xf32, #tpu.memory_space<smem>>
    %748 = vector.broadcast %747 : f32 to vector<16x128xf32>
    %749 = arith.addf %746, %748 : vector<16x128xf32>
    %cst_101 = arith.constant 0.000000e+00 : f32
    %750 = vector.broadcast %cst_101 : f32 to vector<16x128xf32>
    %c7 = arith.constant 7 : index
    %751 = memref.load %arg2[%c7] : memref<144xf32, #tpu.memory_space<smem>>
    %752 = vector.broadcast %751 : f32 to vector<16x128xf32>
    %753 = arith.mulf %752, %27 : vector<16x128xf32>
    %754 = arith.addf %750, %753 : vector<16x128xf32>
    %c15 = arith.constant 15 : index
    %755 = memref.load %arg2[%c15] : memref<144xf32, #tpu.memory_space<smem>>
    %756 = vector.broadcast %755 : f32 to vector<16x128xf32>
    %757 = arith.mulf %756, %30 : vector<16x128xf32>
    %758 = arith.addf %754, %757 : vector<16x128xf32>
    %c23 = arith.constant 23 : index
    %759 = memref.load %arg2[%c23] : memref<144xf32, #tpu.memory_space<smem>>
    %760 = vector.broadcast %759 : f32 to vector<16x128xf32>
    %761 = arith.mulf %760, %53 : vector<16x128xf32>
    %762 = arith.addf %758, %761 : vector<16x128xf32>
    %c31 = arith.constant 31 : index
    %763 = memref.load %arg2[%c31] : memref<144xf32, #tpu.memory_space<smem>>
    %764 = vector.broadcast %763 : f32 to vector<16x128xf32>
    %765 = arith.mulf %764, %56 : vector<16x128xf32>
    %766 = arith.addf %762, %765 : vector<16x128xf32>
    %c39 = arith.constant 39 : index
    %767 = memref.load %arg2[%c39] : memref<144xf32, #tpu.memory_space<smem>>
    %768 = vector.broadcast %767 : f32 to vector<16x128xf32>
    %769 = arith.mulf %768, %80 : vector<16x128xf32>
    %770 = arith.addf %766, %769 : vector<16x128xf32>
    %c47 = arith.constant 47 : index
    %771 = memref.load %arg2[%c47] : memref<144xf32, #tpu.memory_space<smem>>
    %772 = vector.broadcast %771 : f32 to vector<16x128xf32>
    %773 = arith.mulf %772, %83 : vector<16x128xf32>
    %774 = arith.addf %770, %773 : vector<16x128xf32>
    %c55 = arith.constant 55 : index
    %775 = memref.load %arg2[%c55] : memref<144xf32, #tpu.memory_space<smem>>
    %776 = vector.broadcast %775 : f32 to vector<16x128xf32>
    %777 = arith.mulf %776, %106 : vector<16x128xf32>
    %778 = arith.addf %774, %777 : vector<16x128xf32>
    %c63 = arith.constant 63 : index
    %779 = memref.load %arg2[%c63] : memref<144xf32, #tpu.memory_space<smem>>
    %780 = vector.broadcast %779 : f32 to vector<16x128xf32>
    %781 = arith.mulf %780, %109 : vector<16x128xf32>
    %782 = arith.addf %778, %781 : vector<16x128xf32>
    %c71 = arith.constant 71 : index
    %783 = memref.load %arg2[%c71] : memref<144xf32, #tpu.memory_space<smem>>
    %784 = vector.broadcast %783 : f32 to vector<16x128xf32>
    %785 = arith.mulf %784, %110 : vector<16x128xf32>
    %786 = arith.addf %782, %785 : vector<16x128xf32>
    %c79 = arith.constant 79 : index
    %787 = memref.load %arg2[%c79] : memref<144xf32, #tpu.memory_space<smem>>
    %788 = vector.broadcast %787 : f32 to vector<16x128xf32>
    %789 = arith.mulf %788, %111 : vector<16x128xf32>
    %790 = arith.addf %786, %789 : vector<16x128xf32>
    %c87 = arith.constant 87 : index
    %791 = memref.load %arg2[%c87] : memref<144xf32, #tpu.memory_space<smem>>
    %792 = vector.broadcast %791 : f32 to vector<16x128xf32>
    %793 = arith.mulf %792, %134 : vector<16x128xf32>
    %794 = arith.addf %790, %793 : vector<16x128xf32>
    %c95 = arith.constant 95 : index
    %795 = memref.load %arg2[%c95] : memref<144xf32, #tpu.memory_space<smem>>
    %796 = vector.broadcast %795 : f32 to vector<16x128xf32>
    %797 = arith.mulf %796, %137 : vector<16x128xf32>
    %798 = arith.addf %794, %797 : vector<16x128xf32>
    %c103 = arith.constant 103 : index
    %799 = memref.load %arg2[%c103] : memref<144xf32, #tpu.memory_space<smem>>
    %800 = vector.broadcast %799 : f32 to vector<16x128xf32>
    %801 = arith.mulf %800, %161 : vector<16x128xf32>
    %802 = arith.addf %798, %801 : vector<16x128xf32>
    %c111 = arith.constant 111 : index
    %803 = memref.load %arg2[%c111] : memref<144xf32, #tpu.memory_space<smem>>
    %804 = vector.broadcast %803 : f32 to vector<16x128xf32>
    %805 = arith.mulf %804, %164 : vector<16x128xf32>
    %806 = arith.addf %802, %805 : vector<16x128xf32>
    %c119 = arith.constant 119 : index
    %807 = memref.load %arg2[%c119] : memref<144xf32, #tpu.memory_space<smem>>
    %808 = vector.broadcast %807 : f32 to vector<16x128xf32>
    %809 = arith.mulf %808, %187 : vector<16x128xf32>
    %810 = arith.addf %806, %809 : vector<16x128xf32>
    %c127 = arith.constant 127 : index
    %811 = memref.load %arg2[%c127] : memref<144xf32, #tpu.memory_space<smem>>
    %812 = vector.broadcast %811 : f32 to vector<16x128xf32>
    %813 = arith.mulf %812, %190 : vector<16x128xf32>
    %814 = arith.addf %810, %813 : vector<16x128xf32>
    %c135 = arith.constant 135 : index
    %815 = memref.load %arg2[%c135] : memref<144xf32, #tpu.memory_space<smem>>
    %816 = vector.broadcast %815 : f32 to vector<16x128xf32>
    %817 = arith.mulf %816, %214 : vector<16x128xf32>
    %818 = arith.addf %814, %817 : vector<16x128xf32>
    %c143 = arith.constant 143 : index
    %819 = memref.load %arg2[%c143] : memref<144xf32, #tpu.memory_space<smem>>
    %820 = vector.broadcast %819 : f32 to vector<16x128xf32>
    %821 = arith.mulf %820, %217 : vector<16x128xf32>
    %822 = arith.addf %818, %821 : vector<16x128xf32>
    %c7_102 = arith.constant 7 : index
    %823 = memref.load %arg3[%c7_102] : memref<8xf32, #tpu.memory_space<smem>>
    %824 = vector.broadcast %823 : f32 to vector<16x128xf32>
    %825 = arith.addf %822, %824 : vector<16x128xf32>
    %826 = tpu.concatenate %293, %369, %445, %521, %597, %673, %749, %825 in 0 : vector<16x128xf32>, vector<16x128xf32>, vector<16x128xf32>, vector<16x128xf32>, vector<16x128xf32>, vector<16x128xf32>, vector<16x128xf32>, vector<16x128xf32> -> vector<128x128xf32>
    %cst_103 = arith.constant 0.000000e+00 : f32
    %827 = vector.broadcast %cst_103 : f32 to vector<128x128xf32>
    %828 = arith.maximumf %826, %827 : vector<128x128xf32>
    %829 = tpu.iota {dimensions = array<i32: 0>} : vector<16x128xi32>
    %830 = tpu.iota {dimensions = array<i32: 1>} : vector<16x128xi32>
    %c1_i32_104 = arith.constant 1 : i32
    %831 = tpu.dynamic_rotate %828 by %c1_i32_104 dim 0 : vector<128x128xf32>, i32 -> vector<128x128xf32>
    %c1_i32_105 = arith.constant 1 : i32
    %832 = tpu.dynamic_rotate %831 by %c1_i32_105 dim 1 : vector<128x128xf32>, i32 -> vector<128x128xf32>
    %c-1_i32_106 = arith.constant -1 : i32
    %833 = vector.broadcast %c-1_i32_106 : i32 to vector<16x128xi32>
    %834 = arith.addi %829, %833 : vector<16x128xi32>
    %c0_i32_107 = arith.constant 0 : i32
    %835 = vector.broadcast %c0_i32_107 : i32 to vector<16x128xi32>
    %836 = arith.cmpi sge, %834, %835 : vector<16x128xi32>
    %c-1_i32_108 = arith.constant -1 : i32
    %837 = vector.broadcast %c-1_i32_108 : i32 to vector<16x128xi32>
    %838 = arith.addi %829, %837 : vector<16x128xi32>
    %c16_i32_109 = arith.constant 16 : i32
    %839 = vector.broadcast %c16_i32_109 : i32 to vector<16x128xi32>
    %840 = arith.cmpi slt, %838, %839 : vector<16x128xi32>
    %841 = arith.andi %836, %840 : vector<16x128xi1>
    %c-1_i32_110 = arith.constant -1 : i32
    %842 = vector.broadcast %c-1_i32_110 : i32 to vector<16x128xi32>
    %843 = arith.addi %830, %842 : vector<16x128xi32>
    %c0_i32_111 = arith.constant 0 : i32
    %844 = vector.broadcast %c0_i32_111 : i32 to vector<16x128xi32>
    %845 = arith.cmpi sge, %843, %844 : vector<16x128xi32>
    %846 = arith.andi %841, %845 : vector<16x128xi1>
    %c-1_i32_112 = arith.constant -1 : i32
    %847 = vector.broadcast %c-1_i32_112 : i32 to vector<16x128xi32>
    %848 = arith.addi %830, %847 : vector<16x128xi32>
    %c128_i32_113 = arith.constant 128 : i32
    %849 = vector.broadcast %c128_i32_113 : i32 to vector<16x128xi32>
    %850 = arith.cmpi slt, %848, %849 : vector<16x128xi32>
    %851 = arith.andi %846, %850 : vector<16x128xi1>
    %852 = vector.extract_strided_slice %832 {offsets = [0, 0], sizes = [16, 128], strides = [1, 1]} : vector<128x128xf32> to vector<16x128xf32>
    %cst_114 = arith.constant 0.000000e+00 : f32
    %853 = vector.broadcast %cst_114 : f32 to vector<16x128xf32>
    %854 = arith.select %851, %852, %853 : vector<16x128xi1>, vector<16x128xf32>
    %855 = vector.extract_strided_slice %832 {offsets = [16, 0], sizes = [16, 128], strides = [1, 1]} : vector<128x128xf32> to vector<16x128xf32>
    %cst_115 = arith.constant 0.000000e+00 : f32
    %856 = vector.broadcast %cst_115 : f32 to vector<16x128xf32>
    %857 = arith.select %851, %855, %856 : vector<16x128xi1>, vector<16x128xf32>
    %858 = vector.extract_strided_slice %832 {offsets = [32, 0], sizes = [16, 128], strides = [1, 1]} : vector<128x128xf32> to vector<16x128xf32>
    %cst_116 = arith.constant 0.000000e+00 : f32
    %859 = vector.broadcast %cst_116 : f32 to vector<16x128xf32>
    %860 = arith.select %851, %858, %859 : vector<16x128xi1>, vector<16x128xf32>
    %861 = vector.extract_strided_slice %832 {offsets = [48, 0], sizes = [16, 128], strides = [1, 1]} : vector<128x128xf32> to vector<16x128xf32>
    %cst_117 = arith.constant 0.000000e+00 : f32
    %862 = vector.broadcast %cst_117 : f32 to vector<16x128xf32>
    %863 = arith.select %851, %861, %862 : vector<16x128xi1>, vector<16x128xf32>
    %864 = vector.extract_strided_slice %832 {offsets = [64, 0], sizes = [16, 128], strides = [1, 1]} : vector<128x128xf32> to vector<16x128xf32>
    %cst_118 = arith.constant 0.000000e+00 : f32
    %865 = vector.broadcast %cst_118 : f32 to vector<16x128xf32>
    %866 = arith.select %851, %864, %865 : vector<16x128xi1>, vector<16x128xf32>
    %867 = vector.extract_strided_slice %832 {offsets = [80, 0], sizes = [16, 128], strides = [1, 1]} : vector<128x128xf32> to vector<16x128xf32>
    %cst_119 = arith.constant 0.000000e+00 : f32
    %868 = vector.broadcast %cst_119 : f32 to vector<16x128xf32>
    %869 = arith.select %851, %867, %868 : vector<16x128xi1>, vector<16x128xf32>
    %870 = vector.extract_strided_slice %832 {offsets = [96, 0], sizes = [16, 128], strides = [1, 1]} : vector<128x128xf32> to vector<16x128xf32>
    %cst_120 = arith.constant 0.000000e+00 : f32
    %871 = vector.broadcast %cst_120 : f32 to vector<16x128xf32>
    %872 = arith.select %851, %870, %871 : vector<16x128xi1>, vector<16x128xf32>
    %873 = vector.extract_strided_slice %832 {offsets = [112, 0], sizes = [16, 128], strides = [1, 1]} : vector<128x128xf32> to vector<16x128xf32>
    %cst_121 = arith.constant 0.000000e+00 : f32
    %874 = vector.broadcast %cst_121 : f32 to vector<16x128xf32>
    %875 = arith.select %851, %873, %874 : vector<16x128xi1>, vector<16x128xf32>
    %c1_i32_122 = arith.constant 1 : i32
    %876 = tpu.dynamic_rotate %828 by %c1_i32_122 dim 0 : vector<128x128xf32>, i32 -> vector<128x128xf32>
    %c-1_i32_123 = arith.constant -1 : i32
    %877 = vector.broadcast %c-1_i32_123 : i32 to vector<16x128xi32>
    %878 = arith.addi %829, %877 : vector<16x128xi32>
    %c0_i32_124 = arith.constant 0 : i32
    %879 = vector.broadcast %c0_i32_124 : i32 to vector<16x128xi32>
    %880 = arith.cmpi sge, %878, %879 : vector<16x128xi32>
    %c-1_i32_125 = arith.constant -1 : i32
    %881 = vector.broadcast %c-1_i32_125 : i32 to vector<16x128xi32>
    %882 = arith.addi %829, %881 : vector<16x128xi32>
    %c16_i32_126 = arith.constant 16 : i32
    %883 = vector.broadcast %c16_i32_126 : i32 to vector<16x128xi32>
    %884 = arith.cmpi slt, %882, %883 : vector<16x128xi32>
    %885 = arith.andi %880, %884 : vector<16x128xi1>
    %c0_i32_127 = arith.constant 0 : i32
    %886 = vector.broadcast %c0_i32_127 : i32 to vector<16x128xi32>
    %887 = arith.addi %830, %886 : vector<16x128xi32>
    %c0_i32_128 = arith.constant 0 : i32
    %888 = vector.broadcast %c0_i32_128 : i32 to vector<16x128xi32>
    %889 = arith.cmpi sge, %887, %888 : vector<16x128xi32>
    %890 = arith.andi %885, %889 : vector<16x128xi1>
    %c0_i32_129 = arith.constant 0 : i32
    %891 = vector.broadcast %c0_i32_129 : i32 to vector<16x128xi32>
    %892 = arith.addi %830, %891 : vector<16x128xi32>
    %c128_i32_130 = arith.constant 128 : i32
    %893 = vector.broadcast %c128_i32_130 : i32 to vector<16x128xi32>
    %894 = arith.cmpi slt, %892, %893 : vector<16x128xi32>
    %895 = arith.andi %890, %894 : vector<16x128xi1>
    %896 = vector.extract_strided_slice %876 {offsets = [0, 0], sizes = [16, 128], strides = [1, 1]} : vector<128x128xf32> to vector<16x128xf32>
    %cst_131 = arith.constant 0.000000e+00 : f32
    %897 = vector.broadcast %cst_131 : f32 to vector<16x128xf32>
    %898 = arith.select %895, %896, %897 : vector<16x128xi1>, vector<16x128xf32>
    %899 = vector.extract_strided_slice %876 {offsets = [16, 0], sizes = [16, 128], strides = [1, 1]} : vector<128x128xf32> to vector<16x128xf32>
    %cst_132 = arith.constant 0.000000e+00 : f32
    %900 = vector.broadcast %cst_132 : f32 to vector<16x128xf32>
    %901 = arith.select %895, %899, %900 : vector<16x128xi1>, vector<16x128xf32>
    %902 = vector.extract_strided_slice %876 {offsets = [32, 0], sizes = [16, 128], strides = [1, 1]} : vector<128x128xf32> to vector<16x128xf32>
    %cst_133 = arith.constant 0.000000e+00 : f32
    %903 = vector.broadcast %cst_133 : f32 to vector<16x128xf32>
    %904 = arith.select %895, %902, %903 : vector<16x128xi1>, vector<16x128xf32>
    %905 = vector.extract_strided_slice %876 {offsets = [48, 0], sizes = [16, 128], strides = [1, 1]} : vector<128x128xf32> to vector<16x128xf32>
    %cst_134 = arith.constant 0.000000e+00 : f32
    %906 = vector.broadcast %cst_134 : f32 to vector<16x128xf32>
    %907 = arith.select %895, %905, %906 : vector<16x128xi1>, vector<16x128xf32>
    %908 = vector.extract_strided_slice %876 {offsets = [64, 0], sizes = [16, 128], strides = [1, 1]} : vector<128x128xf32> to vector<16x128xf32>
    %cst_135 = arith.constant 0.000000e+00 : f32
    %909 = vector.broadcast %cst_135 : f32 to vector<16x128xf32>
    %910 = arith.select %895, %908, %909 : vector<16x128xi1>, vector<16x128xf32>
    %911 = vector.extract_strided_slice %876 {offsets = [80, 0], sizes = [16, 128], strides = [1, 1]} : vector<128x128xf32> to vector<16x128xf32>
    %cst_136 = arith.constant 0.000000e+00 : f32
    %912 = vector.broadcast %cst_136 : f32 to vector<16x128xf32>
    %913 = arith.select %895, %911, %912 : vector<16x128xi1>, vector<16x128xf32>
    %914 = vector.extract_strided_slice %876 {offsets = [96, 0], sizes = [16, 128], strides = [1, 1]} : vector<128x128xf32> to vector<16x128xf32>
    %cst_137 = arith.constant 0.000000e+00 : f32
    %915 = vector.broadcast %cst_137 : f32 to vector<16x128xf32>
    %916 = arith.select %895, %914, %915 : vector<16x128xi1>, vector<16x128xf32>
    %917 = vector.extract_strided_slice %876 {offsets = [112, 0], sizes = [16, 128], strides = [1, 1]} : vector<128x128xf32> to vector<16x128xf32>
    %cst_138 = arith.constant 0.000000e+00 : f32
    %918 = vector.broadcast %cst_138 : f32 to vector<16x128xf32>
    %919 = arith.select %895, %917, %918 : vector<16x128xi1>, vector<16x128xf32>
    %c1_i32_139 = arith.constant 1 : i32
    %920 = tpu.dynamic_rotate %828 by %c1_i32_139 dim 0 : vector<128x128xf32>, i32 -> vector<128x128xf32>
    %c127_i32_140 = arith.constant 127 : i32
    %921 = tpu.dynamic_rotate %920 by %c127_i32_140 dim 1 : vector<128x128xf32>, i32 -> vector<128x128xf32>
    %c-1_i32_141 = arith.constant -1 : i32
    %922 = vector.broadcast %c-1_i32_141 : i32 to vector<16x128xi32>
    %923 = arith.addi %829, %922 : vector<16x128xi32>
    %c0_i32_142 = arith.constant 0 : i32
    %924 = vector.broadcast %c0_i32_142 : i32 to vector<16x128xi32>
    %925 = arith.cmpi sge, %923, %924 : vector<16x128xi32>
    %c-1_i32_143 = arith.constant -1 : i32
    %926 = vector.broadcast %c-1_i32_143 : i32 to vector<16x128xi32>
    %927 = arith.addi %829, %926 : vector<16x128xi32>
    %c16_i32_144 = arith.constant 16 : i32
    %928 = vector.broadcast %c16_i32_144 : i32 to vector<16x128xi32>
    %929 = arith.cmpi slt, %927, %928 : vector<16x128xi32>
    %930 = arith.andi %925, %929 : vector<16x128xi1>
    %c1_i32_145 = arith.constant 1 : i32
    %931 = vector.broadcast %c1_i32_145 : i32 to vector<16x128xi32>
    %932 = arith.addi %830, %931 : vector<16x128xi32>
    %c0_i32_146 = arith.constant 0 : i32
    %933 = vector.broadcast %c0_i32_146 : i32 to vector<16x128xi32>
    %934 = arith.cmpi sge, %932, %933 : vector<16x128xi32>
    %935 = arith.andi %930, %934 : vector<16x128xi1>
    %c1_i32_147 = arith.constant 1 : i32
    %936 = vector.broadcast %c1_i32_147 : i32 to vector<16x128xi32>
    %937 = arith.addi %830, %936 : vector<16x128xi32>
    %c128_i32_148 = arith.constant 128 : i32
    %938 = vector.broadcast %c128_i32_148 : i32 to vector<16x128xi32>
    %939 = arith.cmpi slt, %937, %938 : vector<16x128xi32>
    %940 = arith.andi %935, %939 : vector<16x128xi1>
    %941 = vector.extract_strided_slice %921 {offsets = [0, 0], sizes = [16, 128], strides = [1, 1]} : vector<128x128xf32> to vector<16x128xf32>
    %cst_149 = arith.constant 0.000000e+00 : f32
    %942 = vector.broadcast %cst_149 : f32 to vector<16x128xf32>
    %943 = arith.select %940, %941, %942 : vector<16x128xi1>, vector<16x128xf32>
    %944 = vector.extract_strided_slice %921 {offsets = [16, 0], sizes = [16, 128], strides = [1, 1]} : vector<128x128xf32> to vector<16x128xf32>
    %cst_150 = arith.constant 0.000000e+00 : f32
    %945 = vector.broadcast %cst_150 : f32 to vector<16x128xf32>
    %946 = arith.select %940, %944, %945 : vector<16x128xi1>, vector<16x128xf32>
    %947 = vector.extract_strided_slice %921 {offsets = [32, 0], sizes = [16, 128], strides = [1, 1]} : vector<128x128xf32> to vector<16x128xf32>
    %cst_151 = arith.constant 0.000000e+00 : f32
    %948 = vector.broadcast %cst_151 : f32 to vector<16x128xf32>
    %949 = arith.select %940, %947, %948 : vector<16x128xi1>, vector<16x128xf32>
    %950 = vector.extract_strided_slice %921 {offsets = [48, 0], sizes = [16, 128], strides = [1, 1]} : vector<128x128xf32> to vector<16x128xf32>
    %cst_152 = arith.constant 0.000000e+00 : f32
    %951 = vector.broadcast %cst_152 : f32 to vector<16x128xf32>
    %952 = arith.select %940, %950, %951 : vector<16x128xi1>, vector<16x128xf32>
    %953 = vector.extract_strided_slice %921 {offsets = [64, 0], sizes = [16, 128], strides = [1, 1]} : vector<128x128xf32> to vector<16x128xf32>
    %cst_153 = arith.constant 0.000000e+00 : f32
    %954 = vector.broadcast %cst_153 : f32 to vector<16x128xf32>
    %955 = arith.select %940, %953, %954 : vector<16x128xi1>, vector<16x128xf32>
    %956 = vector.extract_strided_slice %921 {offsets = [80, 0], sizes = [16, 128], strides = [1, 1]} : vector<128x128xf32> to vector<16x128xf32>
    %cst_154 = arith.constant 0.000000e+00 : f32
    %957 = vector.broadcast %cst_154 : f32 to vector<16x128xf32>
    %958 = arith.select %940, %956, %957 : vector<16x128xi1>, vector<16x128xf32>
    %959 = vector.extract_strided_slice %921 {offsets = [96, 0], sizes = [16, 128], strides = [1, 1]} : vector<128x128xf32> to vector<16x128xf32>
    %cst_155 = arith.constant 0.000000e+00 : f32
    %960 = vector.broadcast %cst_155 : f32 to vector<16x128xf32>
    %961 = arith.select %940, %959, %960 : vector<16x128xi1>, vector<16x128xf32>
    %962 = vector.extract_strided_slice %921 {offsets = [112, 0], sizes = [16, 128], strides = [1, 1]} : vector<128x128xf32> to vector<16x128xf32>
    %cst_156 = arith.constant 0.000000e+00 : f32
    %963 = vector.broadcast %cst_156 : f32 to vector<16x128xf32>
    %964 = arith.select %940, %962, %963 : vector<16x128xi1>, vector<16x128xf32>
    %c1_i32_157 = arith.constant 1 : i32
    %965 = tpu.dynamic_rotate %828 by %c1_i32_157 dim 1 : vector<128x128xf32>, i32 -> vector<128x128xf32>
    %c0_i32_158 = arith.constant 0 : i32
    %966 = vector.broadcast %c0_i32_158 : i32 to vector<16x128xi32>
    %967 = arith.addi %829, %966 : vector<16x128xi32>
    %c0_i32_159 = arith.constant 0 : i32
    %968 = vector.broadcast %c0_i32_159 : i32 to vector<16x128xi32>
    %969 = arith.cmpi sge, %967, %968 : vector<16x128xi32>
    %c0_i32_160 = arith.constant 0 : i32
    %970 = vector.broadcast %c0_i32_160 : i32 to vector<16x128xi32>
    %971 = arith.addi %829, %970 : vector<16x128xi32>
    %c16_i32_161 = arith.constant 16 : i32
    %972 = vector.broadcast %c16_i32_161 : i32 to vector<16x128xi32>
    %973 = arith.cmpi slt, %971, %972 : vector<16x128xi32>
    %974 = arith.andi %969, %973 : vector<16x128xi1>
    %c-1_i32_162 = arith.constant -1 : i32
    %975 = vector.broadcast %c-1_i32_162 : i32 to vector<16x128xi32>
    %976 = arith.addi %830, %975 : vector<16x128xi32>
    %c0_i32_163 = arith.constant 0 : i32
    %977 = vector.broadcast %c0_i32_163 : i32 to vector<16x128xi32>
    %978 = arith.cmpi sge, %976, %977 : vector<16x128xi32>
    %979 = arith.andi %974, %978 : vector<16x128xi1>
    %c-1_i32_164 = arith.constant -1 : i32
    %980 = vector.broadcast %c-1_i32_164 : i32 to vector<16x128xi32>
    %981 = arith.addi %830, %980 : vector<16x128xi32>
    %c128_i32_165 = arith.constant 128 : i32
    %982 = vector.broadcast %c128_i32_165 : i32 to vector<16x128xi32>
    %983 = arith.cmpi slt, %981, %982 : vector<16x128xi32>
    %984 = arith.andi %979, %983 : vector<16x128xi1>
    %985 = vector.extract_strided_slice %965 {offsets = [0, 0], sizes = [16, 128], strides = [1, 1]} : vector<128x128xf32> to vector<16x128xf32>
    %cst_166 = arith.constant 0.000000e+00 : f32
    %986 = vector.broadcast %cst_166 : f32 to vector<16x128xf32>
    %987 = arith.select %984, %985, %986 : vector<16x128xi1>, vector<16x128xf32>
    %988 = vector.extract_strided_slice %965 {offsets = [16, 0], sizes = [16, 128], strides = [1, 1]} : vector<128x128xf32> to vector<16x128xf32>
    %cst_167 = arith.constant 0.000000e+00 : f32
    %989 = vector.broadcast %cst_167 : f32 to vector<16x128xf32>
    %990 = arith.select %984, %988, %989 : vector<16x128xi1>, vector<16x128xf32>
    %991 = vector.extract_strided_slice %965 {offsets = [32, 0], sizes = [16, 128], strides = [1, 1]} : vector<128x128xf32> to vector<16x128xf32>
    %cst_168 = arith.constant 0.000000e+00 : f32
    %992 = vector.broadcast %cst_168 : f32 to vector<16x128xf32>
    %993 = arith.select %984, %991, %992 : vector<16x128xi1>, vector<16x128xf32>
    %994 = vector.extract_strided_slice %965 {offsets = [48, 0], sizes = [16, 128], strides = [1, 1]} : vector<128x128xf32> to vector<16x128xf32>
    %cst_169 = arith.constant 0.000000e+00 : f32
    %995 = vector.broadcast %cst_169 : f32 to vector<16x128xf32>
    %996 = arith.select %984, %994, %995 : vector<16x128xi1>, vector<16x128xf32>
    %997 = vector.extract_strided_slice %965 {offsets = [64, 0], sizes = [16, 128], strides = [1, 1]} : vector<128x128xf32> to vector<16x128xf32>
    %cst_170 = arith.constant 0.000000e+00 : f32
    %998 = vector.broadcast %cst_170 : f32 to vector<16x128xf32>
    %999 = arith.select %984, %997, %998 : vector<16x128xi1>, vector<16x128xf32>
    %1000 = vector.extract_strided_slice %965 {offsets = [80, 0], sizes = [16, 128], strides = [1, 1]} : vector<128x128xf32> to vector<16x128xf32>
    %cst_171 = arith.constant 0.000000e+00 : f32
    %1001 = vector.broadcast %cst_171 : f32 to vector<16x128xf32>
    %1002 = arith.select %984, %1000, %1001 : vector<16x128xi1>, vector<16x128xf32>
    %1003 = vector.extract_strided_slice %965 {offsets = [96, 0], sizes = [16, 128], strides = [1, 1]} : vector<128x128xf32> to vector<16x128xf32>
    %cst_172 = arith.constant 0.000000e+00 : f32
    %1004 = vector.broadcast %cst_172 : f32 to vector<16x128xf32>
    %1005 = arith.select %984, %1003, %1004 : vector<16x128xi1>, vector<16x128xf32>
    %1006 = vector.extract_strided_slice %965 {offsets = [112, 0], sizes = [16, 128], strides = [1, 1]} : vector<128x128xf32> to vector<16x128xf32>
    %cst_173 = arith.constant 0.000000e+00 : f32
    %1007 = vector.broadcast %cst_173 : f32 to vector<16x128xf32>
    %1008 = arith.select %984, %1006, %1007 : vector<16x128xi1>, vector<16x128xf32>
    %1009 = vector.extract_strided_slice %828 {offsets = [0, 0], sizes = [16, 128], strides = [1, 1]} : vector<128x128xf32> to vector<16x128xf32>
    %1010 = vector.extract_strided_slice %828 {offsets = [16, 0], sizes = [16, 128], strides = [1, 1]} : vector<128x128xf32> to vector<16x128xf32>
    %1011 = vector.extract_strided_slice %828 {offsets = [32, 0], sizes = [16, 128], strides = [1, 1]} : vector<128x128xf32> to vector<16x128xf32>
    %1012 = vector.extract_strided_slice %828 {offsets = [48, 0], sizes = [16, 128], strides = [1, 1]} : vector<128x128xf32> to vector<16x128xf32>
    %1013 = vector.extract_strided_slice %828 {offsets = [64, 0], sizes = [16, 128], strides = [1, 1]} : vector<128x128xf32> to vector<16x128xf32>
    %1014 = vector.extract_strided_slice %828 {offsets = [80, 0], sizes = [16, 128], strides = [1, 1]} : vector<128x128xf32> to vector<16x128xf32>
    %1015 = vector.extract_strided_slice %828 {offsets = [96, 0], sizes = [16, 128], strides = [1, 1]} : vector<128x128xf32> to vector<16x128xf32>
    %1016 = vector.extract_strided_slice %828 {offsets = [112, 0], sizes = [16, 128], strides = [1, 1]} : vector<128x128xf32> to vector<16x128xf32>
    %c127_i32_174 = arith.constant 127 : i32
    %1017 = tpu.dynamic_rotate %828 by %c127_i32_174 dim 1 : vector<128x128xf32>, i32 -> vector<128x128xf32>
    %c0_i32_175 = arith.constant 0 : i32
    %1018 = vector.broadcast %c0_i32_175 : i32 to vector<16x128xi32>
    %1019 = arith.addi %829, %1018 : vector<16x128xi32>
    %c0_i32_176 = arith.constant 0 : i32
    %1020 = vector.broadcast %c0_i32_176 : i32 to vector<16x128xi32>
    %1021 = arith.cmpi sge, %1019, %1020 : vector<16x128xi32>
    %c0_i32_177 = arith.constant 0 : i32
    %1022 = vector.broadcast %c0_i32_177 : i32 to vector<16x128xi32>
    %1023 = arith.addi %829, %1022 : vector<16x128xi32>
    %c16_i32_178 = arith.constant 16 : i32
    %1024 = vector.broadcast %c16_i32_178 : i32 to vector<16x128xi32>
    %1025 = arith.cmpi slt, %1023, %1024 : vector<16x128xi32>
    %1026 = arith.andi %1021, %1025 : vector<16x128xi1>
    %c1_i32_179 = arith.constant 1 : i32
    %1027 = vector.broadcast %c1_i32_179 : i32 to vector<16x128xi32>
    %1028 = arith.addi %830, %1027 : vector<16x128xi32>
    %c0_i32_180 = arith.constant 0 : i32
    %1029 = vector.broadcast %c0_i32_180 : i32 to vector<16x128xi32>
    %1030 = arith.cmpi sge, %1028, %1029 : vector<16x128xi32>
    %1031 = arith.andi %1026, %1030 : vector<16x128xi1>
    %c1_i32_181 = arith.constant 1 : i32
    %1032 = vector.broadcast %c1_i32_181 : i32 to vector<16x128xi32>
    %1033 = arith.addi %830, %1032 : vector<16x128xi32>
    %c128_i32_182 = arith.constant 128 : i32
    %1034 = vector.broadcast %c128_i32_182 : i32 to vector<16x128xi32>
    %1035 = arith.cmpi slt, %1033, %1034 : vector<16x128xi32>
    %1036 = arith.andi %1031, %1035 : vector<16x128xi1>
    %1037 = vector.extract_strided_slice %1017 {offsets = [0, 0], sizes = [16, 128], strides = [1, 1]} : vector<128x128xf32> to vector<16x128xf32>
    %cst_183 = arith.constant 0.000000e+00 : f32
    %1038 = vector.broadcast %cst_183 : f32 to vector<16x128xf32>
    %1039 = arith.select %1036, %1037, %1038 : vector<16x128xi1>, vector<16x128xf32>
    %1040 = vector.extract_strided_slice %1017 {offsets = [16, 0], sizes = [16, 128], strides = [1, 1]} : vector<128x128xf32> to vector<16x128xf32>
    %cst_184 = arith.constant 0.000000e+00 : f32
    %1041 = vector.broadcast %cst_184 : f32 to vector<16x128xf32>
    %1042 = arith.select %1036, %1040, %1041 : vector<16x128xi1>, vector<16x128xf32>
    %1043 = vector.extract_strided_slice %1017 {offsets = [32, 0], sizes = [16, 128], strides = [1, 1]} : vector<128x128xf32> to vector<16x128xf32>
    %cst_185 = arith.constant 0.000000e+00 : f32
    %1044 = vector.broadcast %cst_185 : f32 to vector<16x128xf32>
    %1045 = arith.select %1036, %1043, %1044 : vector<16x128xi1>, vector<16x128xf32>
    %1046 = vector.extract_strided_slice %1017 {offsets = [48, 0], sizes = [16, 128], strides = [1, 1]} : vector<128x128xf32> to vector<16x128xf32>
    %cst_186 = arith.constant 0.000000e+00 : f32
    %1047 = vector.broadcast %cst_186 : f32 to vector<16x128xf32>
    %1048 = arith.select %1036, %1046, %1047 : vector<16x128xi1>, vector<16x128xf32>
    %1049 = vector.extract_strided_slice %1017 {offsets = [64, 0], sizes = [16, 128], strides = [1, 1]} : vector<128x128xf32> to vector<16x128xf32>
    %cst_187 = arith.constant 0.000000e+00 : f32
    %1050 = vector.broadcast %cst_187 : f32 to vector<16x128xf32>
    %1051 = arith.select %1036, %1049, %1050 : vector<16x128xi1>, vector<16x128xf32>
    %1052 = vector.extract_strided_slice %1017 {offsets = [80, 0], sizes = [16, 128], strides = [1, 1]} : vector<128x128xf32> to vector<16x128xf32>
    %cst_188 = arith.constant 0.000000e+00 : f32
    %1053 = vector.broadcast %cst_188 : f32 to vector<16x128xf32>
    %1054 = arith.select %1036, %1052, %1053 : vector<16x128xi1>, vector<16x128xf32>
    %1055 = vector.extract_strided_slice %1017 {offsets = [96, 0], sizes = [16, 128], strides = [1, 1]} : vector<128x128xf32> to vector<16x128xf32>
    %cst_189 = arith.constant 0.000000e+00 : f32
    %1056 = vector.broadcast %cst_189 : f32 to vector<16x128xf32>
    %1057 = arith.select %1036, %1055, %1056 : vector<16x128xi1>, vector<16x128xf32>
    %1058 = vector.extract_strided_slice %1017 {offsets = [112, 0], sizes = [16, 128], strides = [1, 1]} : vector<128x128xf32> to vector<16x128xf32>
    %cst_190 = arith.constant 0.000000e+00 : f32
    %1059 = vector.broadcast %cst_190 : f32 to vector<16x128xf32>
    %1060 = arith.select %1036, %1058, %1059 : vector<16x128xi1>, vector<16x128xf32>
    %c127_i32_191 = arith.constant 127 : i32
    %1061 = tpu.dynamic_rotate %828 by %c127_i32_191 dim 0 : vector<128x128xf32>, i32 -> vector<128x128xf32>
    %c1_i32_192 = arith.constant 1 : i32
    %1062 = tpu.dynamic_rotate %1061 by %c1_i32_192 dim 1 : vector<128x128xf32>, i32 -> vector<128x128xf32>
    %c1_i32_193 = arith.constant 1 : i32
    %1063 = vector.broadcast %c1_i32_193 : i32 to vector<16x128xi32>
    %1064 = arith.addi %829, %1063 : vector<16x128xi32>
    %c0_i32_194 = arith.constant 0 : i32
    %1065 = vector.broadcast %c0_i32_194 : i32 to vector<16x128xi32>
    %1066 = arith.cmpi sge, %1064, %1065 : vector<16x128xi32>
    %c1_i32_195 = arith.constant 1 : i32
    %1067 = vector.broadcast %c1_i32_195 : i32 to vector<16x128xi32>
    %1068 = arith.addi %829, %1067 : vector<16x128xi32>
    %c16_i32_196 = arith.constant 16 : i32
    %1069 = vector.broadcast %c16_i32_196 : i32 to vector<16x128xi32>
    %1070 = arith.cmpi slt, %1068, %1069 : vector<16x128xi32>
    %1071 = arith.andi %1066, %1070 : vector<16x128xi1>
    %c-1_i32_197 = arith.constant -1 : i32
    %1072 = vector.broadcast %c-1_i32_197 : i32 to vector<16x128xi32>
    %1073 = arith.addi %830, %1072 : vector<16x128xi32>
    %c0_i32_198 = arith.constant 0 : i32
    %1074 = vector.broadcast %c0_i32_198 : i32 to vector<16x128xi32>
    %1075 = arith.cmpi sge, %1073, %1074 : vector<16x128xi32>
    %1076 = arith.andi %1071, %1075 : vector<16x128xi1>
    %c-1_i32_199 = arith.constant -1 : i32
    %1077 = vector.broadcast %c-1_i32_199 : i32 to vector<16x128xi32>
    %1078 = arith.addi %830, %1077 : vector<16x128xi32>
    %c128_i32_200 = arith.constant 128 : i32
    %1079 = vector.broadcast %c128_i32_200 : i32 to vector<16x128xi32>
    %1080 = arith.cmpi slt, %1078, %1079 : vector<16x128xi32>
    %1081 = arith.andi %1076, %1080 : vector<16x128xi1>
    %1082 = vector.extract_strided_slice %1062 {offsets = [0, 0], sizes = [16, 128], strides = [1, 1]} : vector<128x128xf32> to vector<16x128xf32>
    %cst_201 = arith.constant 0.000000e+00 : f32
    %1083 = vector.broadcast %cst_201 : f32 to vector<16x128xf32>
    %1084 = arith.select %1081, %1082, %1083 : vector<16x128xi1>, vector<16x128xf32>
    %1085 = vector.extract_strided_slice %1062 {offsets = [16, 0], sizes = [16, 128], strides = [1, 1]} : vector<128x128xf32> to vector<16x128xf32>
    %cst_202 = arith.constant 0.000000e+00 : f32
    %1086 = vector.broadcast %cst_202 : f32 to vector<16x128xf32>
    %1087 = arith.select %1081, %1085, %1086 : vector<16x128xi1>, vector<16x128xf32>
    %1088 = vector.extract_strided_slice %1062 {offsets = [32, 0], sizes = [16, 128], strides = [1, 1]} : vector<128x128xf32> to vector<16x128xf32>
    %cst_203 = arith.constant 0.000000e+00 : f32
    %1089 = vector.broadcast %cst_203 : f32 to vector<16x128xf32>
    %1090 = arith.select %1081, %1088, %1089 : vector<16x128xi1>, vector<16x128xf32>
    %1091 = vector.extract_strided_slice %1062 {offsets = [48, 0], sizes = [16, 128], strides = [1, 1]} : vector<128x128xf32> to vector<16x128xf32>
    %cst_204 = arith.constant 0.000000e+00 : f32
    %1092 = vector.broadcast %cst_204 : f32 to vector<16x128xf32>
    %1093 = arith.select %1081, %1091, %1092 : vector<16x128xi1>, vector<16x128xf32>
    %1094 = vector.extract_strided_slice %1062 {offsets = [64, 0], sizes = [16, 128], strides = [1, 1]} : vector<128x128xf32> to vector<16x128xf32>
    %cst_205 = arith.constant 0.000000e+00 : f32
    %1095 = vector.broadcast %cst_205 : f32 to vector<16x128xf32>
    %1096 = arith.select %1081, %1094, %1095 : vector<16x128xi1>, vector<16x128xf32>
    %1097 = vector.extract_strided_slice %1062 {offsets = [80, 0], sizes = [16, 128], strides = [1, 1]} : vector<128x128xf32> to vector<16x128xf32>
    %cst_206 = arith.constant 0.000000e+00 : f32
    %1098 = vector.broadcast %cst_206 : f32 to vector<16x128xf32>
    %1099 = arith.select %1081, %1097, %1098 : vector<16x128xi1>, vector<16x128xf32>
    %1100 = vector.extract_strided_slice %1062 {offsets = [96, 0], sizes = [16, 128], strides = [1, 1]} : vector<128x128xf32> to vector<16x128xf32>
    %cst_207 = arith.constant 0.000000e+00 : f32
    %1101 = vector.broadcast %cst_207 : f32 to vector<16x128xf32>
    %1102 = arith.select %1081, %1100, %1101 : vector<16x128xi1>, vector<16x128xf32>
    %1103 = vector.extract_strided_slice %1062 {offsets = [112, 0], sizes = [16, 128], strides = [1, 1]} : vector<128x128xf32> to vector<16x128xf32>
    %cst_208 = arith.constant 0.000000e+00 : f32
    %1104 = vector.broadcast %cst_208 : f32 to vector<16x128xf32>
    %1105 = arith.select %1081, %1103, %1104 : vector<16x128xi1>, vector<16x128xf32>
    %c127_i32_209 = arith.constant 127 : i32
    %1106 = tpu.dynamic_rotate %828 by %c127_i32_209 dim 0 : vector<128x128xf32>, i32 -> vector<128x128xf32>
    %c1_i32_210 = arith.constant 1 : i32
    %1107 = vector.broadcast %c1_i32_210 : i32 to vector<16x128xi32>
    %1108 = arith.addi %829, %1107 : vector<16x128xi32>
    %c0_i32_211 = arith.constant 0 : i32
    %1109 = vector.broadcast %c0_i32_211 : i32 to vector<16x128xi32>
    %1110 = arith.cmpi sge, %1108, %1109 : vector<16x128xi32>
    %c1_i32_212 = arith.constant 1 : i32
    %1111 = vector.broadcast %c1_i32_212 : i32 to vector<16x128xi32>
    %1112 = arith.addi %829, %1111 : vector<16x128xi32>
    %c16_i32_213 = arith.constant 16 : i32
    %1113 = vector.broadcast %c16_i32_213 : i32 to vector<16x128xi32>
    %1114 = arith.cmpi slt, %1112, %1113 : vector<16x128xi32>
    %1115 = arith.andi %1110, %1114 : vector<16x128xi1>
    %c0_i32_214 = arith.constant 0 : i32
    %1116 = vector.broadcast %c0_i32_214 : i32 to vector<16x128xi32>
    %1117 = arith.addi %830, %1116 : vector<16x128xi32>
    %c0_i32_215 = arith.constant 0 : i32
    %1118 = vector.broadcast %c0_i32_215 : i32 to vector<16x128xi32>
    %1119 = arith.cmpi sge, %1117, %1118 : vector<16x128xi32>
    %1120 = arith.andi %1115, %1119 : vector<16x128xi1>
    %c0_i32_216 = arith.constant 0 : i32
    %1121 = vector.broadcast %c0_i32_216 : i32 to vector<16x128xi32>
    %1122 = arith.addi %830, %1121 : vector<16x128xi32>
    %c128_i32_217 = arith.constant 128 : i32
    %1123 = vector.broadcast %c128_i32_217 : i32 to vector<16x128xi32>
    %1124 = arith.cmpi slt, %1122, %1123 : vector<16x128xi32>
    %1125 = arith.andi %1120, %1124 : vector<16x128xi1>
    %1126 = vector.extract_strided_slice %1106 {offsets = [0, 0], sizes = [16, 128], strides = [1, 1]} : vector<128x128xf32> to vector<16x128xf32>
    %cst_218 = arith.constant 0.000000e+00 : f32
    %1127 = vector.broadcast %cst_218 : f32 to vector<16x128xf32>
    %1128 = arith.select %1125, %1126, %1127 : vector<16x128xi1>, vector<16x128xf32>
    %1129 = vector.extract_strided_slice %1106 {offsets = [16, 0], sizes = [16, 128], strides = [1, 1]} : vector<128x128xf32> to vector<16x128xf32>
    %cst_219 = arith.constant 0.000000e+00 : f32
    %1130 = vector.broadcast %cst_219 : f32 to vector<16x128xf32>
    %1131 = arith.select %1125, %1129, %1130 : vector<16x128xi1>, vector<16x128xf32>
    %1132 = vector.extract_strided_slice %1106 {offsets = [32, 0], sizes = [16, 128], strides = [1, 1]} : vector<128x128xf32> to vector<16x128xf32>
    %cst_220 = arith.constant 0.000000e+00 : f32
    %1133 = vector.broadcast %cst_220 : f32 to vector<16x128xf32>
    %1134 = arith.select %1125, %1132, %1133 : vector<16x128xi1>, vector<16x128xf32>
    %1135 = vector.extract_strided_slice %1106 {offsets = [48, 0], sizes = [16, 128], strides = [1, 1]} : vector<128x128xf32> to vector<16x128xf32>
    %cst_221 = arith.constant 0.000000e+00 : f32
    %1136 = vector.broadcast %cst_221 : f32 to vector<16x128xf32>
    %1137 = arith.select %1125, %1135, %1136 : vector<16x128xi1>, vector<16x128xf32>
    %1138 = vector.extract_strided_slice %1106 {offsets = [64, 0], sizes = [16, 128], strides = [1, 1]} : vector<128x128xf32> to vector<16x128xf32>
    %cst_222 = arith.constant 0.000000e+00 : f32
    %1139 = vector.broadcast %cst_222 : f32 to vector<16x128xf32>
    %1140 = arith.select %1125, %1138, %1139 : vector<16x128xi1>, vector<16x128xf32>
    %1141 = vector.extract_strided_slice %1106 {offsets = [80, 0], sizes = [16, 128], strides = [1, 1]} : vector<128x128xf32> to vector<16x128xf32>
    %cst_223 = arith.constant 0.000000e+00 : f32
    %1142 = vector.broadcast %cst_223 : f32 to vector<16x128xf32>
    %1143 = arith.select %1125, %1141, %1142 : vector<16x128xi1>, vector<16x128xf32>
    %1144 = vector.extract_strided_slice %1106 {offsets = [96, 0], sizes = [16, 128], strides = [1, 1]} : vector<128x128xf32> to vector<16x128xf32>
    %cst_224 = arith.constant 0.000000e+00 : f32
    %1145 = vector.broadcast %cst_224 : f32 to vector<16x128xf32>
    %1146 = arith.select %1125, %1144, %1145 : vector<16x128xi1>, vector<16x128xf32>
    %1147 = vector.extract_strided_slice %1106 {offsets = [112, 0], sizes = [16, 128], strides = [1, 1]} : vector<128x128xf32> to vector<16x128xf32>
    %cst_225 = arith.constant 0.000000e+00 : f32
    %1148 = vector.broadcast %cst_225 : f32 to vector<16x128xf32>
    %1149 = arith.select %1125, %1147, %1148 : vector<16x128xi1>, vector<16x128xf32>
    %c127_i32_226 = arith.constant 127 : i32
    %1150 = tpu.dynamic_rotate %828 by %c127_i32_226 dim 0 : vector<128x128xf32>, i32 -> vector<128x128xf32>
    %c127_i32_227 = arith.constant 127 : i32
    %1151 = tpu.dynamic_rotate %1150 by %c127_i32_227 dim 1 : vector<128x128xf32>, i32 -> vector<128x128xf32>
    %c1_i32_228 = arith.constant 1 : i32
    %1152 = vector.broadcast %c1_i32_228 : i32 to vector<16x128xi32>
    %1153 = arith.addi %829, %1152 : vector<16x128xi32>
    %c0_i32_229 = arith.constant 0 : i32
    %1154 = vector.broadcast %c0_i32_229 : i32 to vector<16x128xi32>
    %1155 = arith.cmpi sge, %1153, %1154 : vector<16x128xi32>
    %c1_i32_230 = arith.constant 1 : i32
    %1156 = vector.broadcast %c1_i32_230 : i32 to vector<16x128xi32>
    %1157 = arith.addi %829, %1156 : vector<16x128xi32>
    %c16_i32_231 = arith.constant 16 : i32
    %1158 = vector.broadcast %c16_i32_231 : i32 to vector<16x128xi32>
    %1159 = arith.cmpi slt, %1157, %1158 : vector<16x128xi32>
    %1160 = arith.andi %1155, %1159 : vector<16x128xi1>
    %c1_i32_232 = arith.constant 1 : i32
    %1161 = vector.broadcast %c1_i32_232 : i32 to vector<16x128xi32>
    %1162 = arith.addi %830, %1161 : vector<16x128xi32>
    %c0_i32_233 = arith.constant 0 : i32
    %1163 = vector.broadcast %c0_i32_233 : i32 to vector<16x128xi32>
    %1164 = arith.cmpi sge, %1162, %1163 : vector<16x128xi32>
    %1165 = arith.andi %1160, %1164 : vector<16x128xi1>
    %c1_i32_234 = arith.constant 1 : i32
    %1166 = vector.broadcast %c1_i32_234 : i32 to vector<16x128xi32>
    %1167 = arith.addi %830, %1166 : vector<16x128xi32>
    %c128_i32_235 = arith.constant 128 : i32
    %1168 = vector.broadcast %c128_i32_235 : i32 to vector<16x128xi32>
    %1169 = arith.cmpi slt, %1167, %1168 : vector<16x128xi32>
    %1170 = arith.andi %1165, %1169 : vector<16x128xi1>
    %1171 = vector.extract_strided_slice %1151 {offsets = [0, 0], sizes = [16, 128], strides = [1, 1]} : vector<128x128xf32> to vector<16x128xf32>
    %cst_236 = arith.constant 0.000000e+00 : f32
    %1172 = vector.broadcast %cst_236 : f32 to vector<16x128xf32>
    %1173 = arith.select %1170, %1171, %1172 : vector<16x128xi1>, vector<16x128xf32>
    %1174 = vector.extract_strided_slice %1151 {offsets = [16, 0], sizes = [16, 128], strides = [1, 1]} : vector<128x128xf32> to vector<16x128xf32>
    %cst_237 = arith.constant 0.000000e+00 : f32
    %1175 = vector.broadcast %cst_237 : f32 to vector<16x128xf32>
    %1176 = arith.select %1170, %1174, %1175 : vector<16x128xi1>, vector<16x128xf32>
    %1177 = vector.extract_strided_slice %1151 {offsets = [32, 0], sizes = [16, 128], strides = [1, 1]} : vector<128x128xf32> to vector<16x128xf32>
    %cst_238 = arith.constant 0.000000e+00 : f32
    %1178 = vector.broadcast %cst_238 : f32 to vector<16x128xf32>
    %1179 = arith.select %1170, %1177, %1178 : vector<16x128xi1>, vector<16x128xf32>
    %1180 = vector.extract_strided_slice %1151 {offsets = [48, 0], sizes = [16, 128], strides = [1, 1]} : vector<128x128xf32> to vector<16x128xf32>
    %cst_239 = arith.constant 0.000000e+00 : f32
    %1181 = vector.broadcast %cst_239 : f32 to vector<16x128xf32>
    %1182 = arith.select %1170, %1180, %1181 : vector<16x128xi1>, vector<16x128xf32>
    %1183 = vector.extract_strided_slice %1151 {offsets = [64, 0], sizes = [16, 128], strides = [1, 1]} : vector<128x128xf32> to vector<16x128xf32>
    %cst_240 = arith.constant 0.000000e+00 : f32
    %1184 = vector.broadcast %cst_240 : f32 to vector<16x128xf32>
    %1185 = arith.select %1170, %1183, %1184 : vector<16x128xi1>, vector<16x128xf32>
    %1186 = vector.extract_strided_slice %1151 {offsets = [80, 0], sizes = [16, 128], strides = [1, 1]} : vector<128x128xf32> to vector<16x128xf32>
    %cst_241 = arith.constant 0.000000e+00 : f32
    %1187 = vector.broadcast %cst_241 : f32 to vector<16x128xf32>
    %1188 = arith.select %1170, %1186, %1187 : vector<16x128xi1>, vector<16x128xf32>
    %1189 = vector.extract_strided_slice %1151 {offsets = [96, 0], sizes = [16, 128], strides = [1, 1]} : vector<128x128xf32> to vector<16x128xf32>
    %cst_242 = arith.constant 0.000000e+00 : f32
    %1190 = vector.broadcast %cst_242 : f32 to vector<16x128xf32>
    %1191 = arith.select %1170, %1189, %1190 : vector<16x128xi1>, vector<16x128xf32>
    %1192 = vector.extract_strided_slice %1151 {offsets = [112, 0], sizes = [16, 128], strides = [1, 1]} : vector<128x128xf32> to vector<16x128xf32>
    %cst_243 = arith.constant 0.000000e+00 : f32
    %1193 = vector.broadcast %cst_243 : f32 to vector<16x128xf32>
    %1194 = arith.select %1170, %1192, %1193 : vector<16x128xi1>, vector<16x128xf32>
    %cst_244 = arith.constant 0.000000e+00 : f32
    %1195 = vector.broadcast %cst_244 : f32 to vector<16x128xf32>
    %c0_245 = arith.constant 0 : index
    %1196 = memref.load %arg4[%c0_245] : memref<144xf32, #tpu.memory_space<smem>>
    %1197 = vector.broadcast %1196 : f32 to vector<16x128xf32>
    %1198 = arith.mulf %1197, %854 : vector<16x128xf32>
    %1199 = arith.addf %1195, %1198 : vector<16x128xf32>
    %c2_246 = arith.constant 2 : index
    %1200 = memref.load %arg4[%c2_246] : memref<144xf32, #tpu.memory_space<smem>>
    %1201 = vector.broadcast %1200 : f32 to vector<16x128xf32>
    %1202 = arith.mulf %1201, %857 : vector<16x128xf32>
    %1203 = arith.addf %1199, %1202 : vector<16x128xf32>
    %c4_247 = arith.constant 4 : index
    %1204 = memref.load %arg4[%c4_247] : memref<144xf32, #tpu.memory_space<smem>>
    %1205 = vector.broadcast %1204 : f32 to vector<16x128xf32>
    %1206 = arith.mulf %1205, %860 : vector<16x128xf32>
    %1207 = arith.addf %1203, %1206 : vector<16x128xf32>
    %c6_248 = arith.constant 6 : index
    %1208 = memref.load %arg4[%c6_248] : memref<144xf32, #tpu.memory_space<smem>>
    %1209 = vector.broadcast %1208 : f32 to vector<16x128xf32>
    %1210 = arith.mulf %1209, %863 : vector<16x128xf32>
    %1211 = arith.addf %1207, %1210 : vector<16x128xf32>
    %c8_249 = arith.constant 8 : index
    %1212 = memref.load %arg4[%c8_249] : memref<144xf32, #tpu.memory_space<smem>>
    %1213 = vector.broadcast %1212 : f32 to vector<16x128xf32>
    %1214 = arith.mulf %1213, %866 : vector<16x128xf32>
    %1215 = arith.addf %1211, %1214 : vector<16x128xf32>
    %c10_250 = arith.constant 10 : index
    %1216 = memref.load %arg4[%c10_250] : memref<144xf32, #tpu.memory_space<smem>>
    %1217 = vector.broadcast %1216 : f32 to vector<16x128xf32>
    %1218 = arith.mulf %1217, %869 : vector<16x128xf32>
    %1219 = arith.addf %1215, %1218 : vector<16x128xf32>
    %c12_251 = arith.constant 12 : index
    %1220 = memref.load %arg4[%c12_251] : memref<144xf32, #tpu.memory_space<smem>>
    %1221 = vector.broadcast %1220 : f32 to vector<16x128xf32>
    %1222 = arith.mulf %1221, %872 : vector<16x128xf32>
    %1223 = arith.addf %1219, %1222 : vector<16x128xf32>
    %c14_252 = arith.constant 14 : index
    %1224 = memref.load %arg4[%c14_252] : memref<144xf32, #tpu.memory_space<smem>>
    %1225 = vector.broadcast %1224 : f32 to vector<16x128xf32>
    %1226 = arith.mulf %1225, %875 : vector<16x128xf32>
    %1227 = arith.addf %1223, %1226 : vector<16x128xf32>
    %c16_253 = arith.constant 16 : index
    %1228 = memref.load %arg4[%c16_253] : memref<144xf32, #tpu.memory_space<smem>>
    %1229 = vector.broadcast %1228 : f32 to vector<16x128xf32>
    %1230 = arith.mulf %1229, %898 : vector<16x128xf32>
    %1231 = arith.addf %1227, %1230 : vector<16x128xf32>
    %c18_254 = arith.constant 18 : index
    %1232 = memref.load %arg4[%c18_254] : memref<144xf32, #tpu.memory_space<smem>>
    %1233 = vector.broadcast %1232 : f32 to vector<16x128xf32>
    %1234 = arith.mulf %1233, %901 : vector<16x128xf32>
    %1235 = arith.addf %1231, %1234 : vector<16x128xf32>
    %c20_255 = arith.constant 20 : index
    %1236 = memref.load %arg4[%c20_255] : memref<144xf32, #tpu.memory_space<smem>>
    %1237 = vector.broadcast %1236 : f32 to vector<16x128xf32>
    %1238 = arith.mulf %1237, %904 : vector<16x128xf32>
    %1239 = arith.addf %1235, %1238 : vector<16x128xf32>
    %c22_256 = arith.constant 22 : index
    %1240 = memref.load %arg4[%c22_256] : memref<144xf32, #tpu.memory_space<smem>>
    %1241 = vector.broadcast %1240 : f32 to vector<16x128xf32>
    %1242 = arith.mulf %1241, %907 : vector<16x128xf32>
    %1243 = arith.addf %1239, %1242 : vector<16x128xf32>
    %c24_257 = arith.constant 24 : index
    %1244 = memref.load %arg4[%c24_257] : memref<144xf32, #tpu.memory_space<smem>>
    %1245 = vector.broadcast %1244 : f32 to vector<16x128xf32>
    %1246 = arith.mulf %1245, %910 : vector<16x128xf32>
    %1247 = arith.addf %1243, %1246 : vector<16x128xf32>
    %c26_258 = arith.constant 26 : index
    %1248 = memref.load %arg4[%c26_258] : memref<144xf32, #tpu.memory_space<smem>>
    %1249 = vector.broadcast %1248 : f32 to vector<16x128xf32>
    %1250 = arith.mulf %1249, %913 : vector<16x128xf32>
    %1251 = arith.addf %1247, %1250 : vector<16x128xf32>
    %c28_259 = arith.constant 28 : index
    %1252 = memref.load %arg4[%c28_259] : memref<144xf32, #tpu.memory_space<smem>>
    %1253 = vector.broadcast %1252 : f32 to vector<16x128xf32>
    %1254 = arith.mulf %1253, %916 : vector<16x128xf32>
    %1255 = arith.addf %1251, %1254 : vector<16x128xf32>
    %c30_260 = arith.constant 30 : index
    %1256 = memref.load %arg4[%c30_260] : memref<144xf32, #tpu.memory_space<smem>>
    %1257 = vector.broadcast %1256 : f32 to vector<16x128xf32>
    %1258 = arith.mulf %1257, %919 : vector<16x128xf32>
    %1259 = arith.addf %1255, %1258 : vector<16x128xf32>
    %c32_261 = arith.constant 32 : index
    %1260 = memref.load %arg4[%c32_261] : memref<144xf32, #tpu.memory_space<smem>>
    %1261 = vector.broadcast %1260 : f32 to vector<16x128xf32>
    %1262 = arith.mulf %1261, %943 : vector<16x128xf32>
    %1263 = arith.addf %1259, %1262 : vector<16x128xf32>
    %c34_262 = arith.constant 34 : index
    %1264 = memref.load %arg4[%c34_262] : memref<144xf32, #tpu.memory_space<smem>>
    %1265 = vector.broadcast %1264 : f32 to vector<16x128xf32>
    %1266 = arith.mulf %1265, %946 : vector<16x128xf32>
    %1267 = arith.addf %1263, %1266 : vector<16x128xf32>
    %c36_263 = arith.constant 36 : index
    %1268 = memref.load %arg4[%c36_263] : memref<144xf32, #tpu.memory_space<smem>>
    %1269 = vector.broadcast %1268 : f32 to vector<16x128xf32>
    %1270 = arith.mulf %1269, %949 : vector<16x128xf32>
    %1271 = arith.addf %1267, %1270 : vector<16x128xf32>
    %c38_264 = arith.constant 38 : index
    %1272 = memref.load %arg4[%c38_264] : memref<144xf32, #tpu.memory_space<smem>>
    %1273 = vector.broadcast %1272 : f32 to vector<16x128xf32>
    %1274 = arith.mulf %1273, %952 : vector<16x128xf32>
    %1275 = arith.addf %1271, %1274 : vector<16x128xf32>
    %c40_265 = arith.constant 40 : index
    %1276 = memref.load %arg4[%c40_265] : memref<144xf32, #tpu.memory_space<smem>>
    %1277 = vector.broadcast %1276 : f32 to vector<16x128xf32>
    %1278 = arith.mulf %1277, %955 : vector<16x128xf32>
    %1279 = arith.addf %1275, %1278 : vector<16x128xf32>
    %c42_266 = arith.constant 42 : index
    %1280 = memref.load %arg4[%c42_266] : memref<144xf32, #tpu.memory_space<smem>>
    %1281 = vector.broadcast %1280 : f32 to vector<16x128xf32>
    %1282 = arith.mulf %1281, %958 : vector<16x128xf32>
    %1283 = arith.addf %1279, %1282 : vector<16x128xf32>
    %c44_267 = arith.constant 44 : index
    %1284 = memref.load %arg4[%c44_267] : memref<144xf32, #tpu.memory_space<smem>>
    %1285 = vector.broadcast %1284 : f32 to vector<16x128xf32>
    %1286 = arith.mulf %1285, %961 : vector<16x128xf32>
    %1287 = arith.addf %1283, %1286 : vector<16x128xf32>
    %c46_268 = arith.constant 46 : index
    %1288 = memref.load %arg4[%c46_268] : memref<144xf32, #tpu.memory_space<smem>>
    %1289 = vector.broadcast %1288 : f32 to vector<16x128xf32>
    %1290 = arith.mulf %1289, %964 : vector<16x128xf32>
    %1291 = arith.addf %1287, %1290 : vector<16x128xf32>
    %c48_269 = arith.constant 48 : index
    %1292 = memref.load %arg4[%c48_269] : memref<144xf32, #tpu.memory_space<smem>>
    %1293 = vector.broadcast %1292 : f32 to vector<16x128xf32>
    %1294 = arith.mulf %1293, %987 : vector<16x128xf32>
    %1295 = arith.addf %1291, %1294 : vector<16x128xf32>
    %c50_270 = arith.constant 50 : index
    %1296 = memref.load %arg4[%c50_270] : memref<144xf32, #tpu.memory_space<smem>>
    %1297 = vector.broadcast %1296 : f32 to vector<16x128xf32>
    %1298 = arith.mulf %1297, %990 : vector<16x128xf32>
    %1299 = arith.addf %1295, %1298 : vector<16x128xf32>
    %c52_271 = arith.constant 52 : index
    %1300 = memref.load %arg4[%c52_271] : memref<144xf32, #tpu.memory_space<smem>>
    %1301 = vector.broadcast %1300 : f32 to vector<16x128xf32>
    %1302 = arith.mulf %1301, %993 : vector<16x128xf32>
    %1303 = arith.addf %1299, %1302 : vector<16x128xf32>
    %c54_272 = arith.constant 54 : index
    %1304 = memref.load %arg4[%c54_272] : memref<144xf32, #tpu.memory_space<smem>>
    %1305 = vector.broadcast %1304 : f32 to vector<16x128xf32>
    %1306 = arith.mulf %1305, %996 : vector<16x128xf32>
    %1307 = arith.addf %1303, %1306 : vector<16x128xf32>
    %c56_273 = arith.constant 56 : index
    %1308 = memref.load %arg4[%c56_273] : memref<144xf32, #tpu.memory_space<smem>>
    %1309 = vector.broadcast %1308 : f32 to vector<16x128xf32>
    %1310 = arith.mulf %1309, %999 : vector<16x128xf32>
    %1311 = arith.addf %1307, %1310 : vector<16x128xf32>
    %c58_274 = arith.constant 58 : index
    %1312 = memref.load %arg4[%c58_274] : memref<144xf32, #tpu.memory_space<smem>>
    %1313 = vector.broadcast %1312 : f32 to vector<16x128xf32>
    %1314 = arith.mulf %1313, %1002 : vector<16x128xf32>
    %1315 = arith.addf %1311, %1314 : vector<16x128xf32>
    %c60_275 = arith.constant 60 : index
    %1316 = memref.load %arg4[%c60_275] : memref<144xf32, #tpu.memory_space<smem>>
    %1317 = vector.broadcast %1316 : f32 to vector<16x128xf32>
    %1318 = arith.mulf %1317, %1005 : vector<16x128xf32>
    %1319 = arith.addf %1315, %1318 : vector<16x128xf32>
    %c62_276 = arith.constant 62 : index
    %1320 = memref.load %arg4[%c62_276] : memref<144xf32, #tpu.memory_space<smem>>
    %1321 = vector.broadcast %1320 : f32 to vector<16x128xf32>
    %1322 = arith.mulf %1321, %1008 : vector<16x128xf32>
    %1323 = arith.addf %1319, %1322 : vector<16x128xf32>
    %c64_277 = arith.constant 64 : index
    %1324 = memref.load %arg4[%c64_277] : memref<144xf32, #tpu.memory_space<smem>>
    %1325 = vector.broadcast %1324 : f32 to vector<16x128xf32>
    %1326 = arith.mulf %1325, %1009 : vector<16x128xf32>
    %1327 = arith.addf %1323, %1326 : vector<16x128xf32>
    %c66_278 = arith.constant 66 : index
    %1328 = memref.load %arg4[%c66_278] : memref<144xf32, #tpu.memory_space<smem>>
    %1329 = vector.broadcast %1328 : f32 to vector<16x128xf32>
    %1330 = arith.mulf %1329, %1010 : vector<16x128xf32>
    %1331 = arith.addf %1327, %1330 : vector<16x128xf32>
    %c68_279 = arith.constant 68 : index
    %1332 = memref.load %arg4[%c68_279] : memref<144xf32, #tpu.memory_space<smem>>
    %1333 = vector.broadcast %1332 : f32 to vector<16x128xf32>
    %1334 = arith.mulf %1333, %1011 : vector<16x128xf32>
    %1335 = arith.addf %1331, %1334 : vector<16x128xf32>
    %c70_280 = arith.constant 70 : index
    %1336 = memref.load %arg4[%c70_280] : memref<144xf32, #tpu.memory_space<smem>>
    %1337 = vector.broadcast %1336 : f32 to vector<16x128xf32>
    %1338 = arith.mulf %1337, %1012 : vector<16x128xf32>
    %1339 = arith.addf %1335, %1338 : vector<16x128xf32>
    %c72_281 = arith.constant 72 : index
    %1340 = memref.load %arg4[%c72_281] : memref<144xf32, #tpu.memory_space<smem>>
    %1341 = vector.broadcast %1340 : f32 to vector<16x128xf32>
    %1342 = arith.mulf %1341, %1013 : vector<16x128xf32>
    %1343 = arith.addf %1339, %1342 : vector<16x128xf32>
    %c74_282 = arith.constant 74 : index
    %1344 = memref.load %arg4[%c74_282] : memref<144xf32, #tpu.memory_space<smem>>
    %1345 = vector.broadcast %1344 : f32 to vector<16x128xf32>
    %1346 = arith.mulf %1345, %1014 : vector<16x128xf32>
    %1347 = arith.addf %1343, %1346 : vector<16x128xf32>
    %c76_283 = arith.constant 76 : index
    %1348 = memref.load %arg4[%c76_283] : memref<144xf32, #tpu.memory_space<smem>>
    %1349 = vector.broadcast %1348 : f32 to vector<16x128xf32>
    %1350 = arith.mulf %1349, %1015 : vector<16x128xf32>
    %1351 = arith.addf %1347, %1350 : vector<16x128xf32>
    %c78_284 = arith.constant 78 : index
    %1352 = memref.load %arg4[%c78_284] : memref<144xf32, #tpu.memory_space<smem>>
    %1353 = vector.broadcast %1352 : f32 to vector<16x128xf32>
    %1354 = arith.mulf %1353, %1016 : vector<16x128xf32>
    %1355 = arith.addf %1351, %1354 : vector<16x128xf32>
    %c80_285 = arith.constant 80 : index
    %1356 = memref.load %arg4[%c80_285] : memref<144xf32, #tpu.memory_space<smem>>
    %1357 = vector.broadcast %1356 : f32 to vector<16x128xf32>
    %1358 = arith.mulf %1357, %1039 : vector<16x128xf32>
    %1359 = arith.addf %1355, %1358 : vector<16x128xf32>
    %c82_286 = arith.constant 82 : index
    %1360 = memref.load %arg4[%c82_286] : memref<144xf32, #tpu.memory_space<smem>>
    %1361 = vector.broadcast %1360 : f32 to vector<16x128xf32>
    %1362 = arith.mulf %1361, %1042 : vector<16x128xf32>
    %1363 = arith.addf %1359, %1362 : vector<16x128xf32>
    %c84_287 = arith.constant 84 : index
    %1364 = memref.load %arg4[%c84_287] : memref<144xf32, #tpu.memory_space<smem>>
    %1365 = vector.broadcast %1364 : f32 to vector<16x128xf32>
    %1366 = arith.mulf %1365, %1045 : vector<16x128xf32>
    %1367 = arith.addf %1363, %1366 : vector<16x128xf32>
    %c86_288 = arith.constant 86 : index
    %1368 = memref.load %arg4[%c86_288] : memref<144xf32, #tpu.memory_space<smem>>
    %1369 = vector.broadcast %1368 : f32 to vector<16x128xf32>
    %1370 = arith.mulf %1369, %1048 : vector<16x128xf32>
    %1371 = arith.addf %1367, %1370 : vector<16x128xf32>
    %c88_289 = arith.constant 88 : index
    %1372 = memref.load %arg4[%c88_289] : memref<144xf32, #tpu.memory_space<smem>>
    %1373 = vector.broadcast %1372 : f32 to vector<16x128xf32>
    %1374 = arith.mulf %1373, %1051 : vector<16x128xf32>
    %1375 = arith.addf %1371, %1374 : vector<16x128xf32>
    %c90_290 = arith.constant 90 : index
    %1376 = memref.load %arg4[%c90_290] : memref<144xf32, #tpu.memory_space<smem>>
    %1377 = vector.broadcast %1376 : f32 to vector<16x128xf32>
    %1378 = arith.mulf %1377, %1054 : vector<16x128xf32>
    %1379 = arith.addf %1375, %1378 : vector<16x128xf32>
    %c92_291 = arith.constant 92 : index
    %1380 = memref.load %arg4[%c92_291] : memref<144xf32, #tpu.memory_space<smem>>
    %1381 = vector.broadcast %1380 : f32 to vector<16x128xf32>
    %1382 = arith.mulf %1381, %1057 : vector<16x128xf32>
    %1383 = arith.addf %1379, %1382 : vector<16x128xf32>
    %c94_292 = arith.constant 94 : index
    %1384 = memref.load %arg4[%c94_292] : memref<144xf32, #tpu.memory_space<smem>>
    %1385 = vector.broadcast %1384 : f32 to vector<16x128xf32>
    %1386 = arith.mulf %1385, %1060 : vector<16x128xf32>
    %1387 = arith.addf %1383, %1386 : vector<16x128xf32>
    %c96_293 = arith.constant 96 : index
    %1388 = memref.load %arg4[%c96_293] : memref<144xf32, #tpu.memory_space<smem>>
    %1389 = vector.broadcast %1388 : f32 to vector<16x128xf32>
    %1390 = arith.mulf %1389, %1084 : vector<16x128xf32>
    %1391 = arith.addf %1387, %1390 : vector<16x128xf32>
    %c98_294 = arith.constant 98 : index
    %1392 = memref.load %arg4[%c98_294] : memref<144xf32, #tpu.memory_space<smem>>
    %1393 = vector.broadcast %1392 : f32 to vector<16x128xf32>
    %1394 = arith.mulf %1393, %1087 : vector<16x128xf32>
    %1395 = arith.addf %1391, %1394 : vector<16x128xf32>
    %c100_295 = arith.constant 100 : index
    %1396 = memref.load %arg4[%c100_295] : memref<144xf32, #tpu.memory_space<smem>>
    %1397 = vector.broadcast %1396 : f32 to vector<16x128xf32>
    %1398 = arith.mulf %1397, %1090 : vector<16x128xf32>
    %1399 = arith.addf %1395, %1398 : vector<16x128xf32>
    %c102_296 = arith.constant 102 : index
    %1400 = memref.load %arg4[%c102_296] : memref<144xf32, #tpu.memory_space<smem>>
    %1401 = vector.broadcast %1400 : f32 to vector<16x128xf32>
    %1402 = arith.mulf %1401, %1093 : vector<16x128xf32>
    %1403 = arith.addf %1399, %1402 : vector<16x128xf32>
    %c104_297 = arith.constant 104 : index
    %1404 = memref.load %arg4[%c104_297] : memref<144xf32, #tpu.memory_space<smem>>
    %1405 = vector.broadcast %1404 : f32 to vector<16x128xf32>
    %1406 = arith.mulf %1405, %1096 : vector<16x128xf32>
    %1407 = arith.addf %1403, %1406 : vector<16x128xf32>
    %c106_298 = arith.constant 106 : index
    %1408 = memref.load %arg4[%c106_298] : memref<144xf32, #tpu.memory_space<smem>>
    %1409 = vector.broadcast %1408 : f32 to vector<16x128xf32>
    %1410 = arith.mulf %1409, %1099 : vector<16x128xf32>
    %1411 = arith.addf %1407, %1410 : vector<16x128xf32>
    %c108_299 = arith.constant 108 : index
    %1412 = memref.load %arg4[%c108_299] : memref<144xf32, #tpu.memory_space<smem>>
    %1413 = vector.broadcast %1412 : f32 to vector<16x128xf32>
    %1414 = arith.mulf %1413, %1102 : vector<16x128xf32>
    %1415 = arith.addf %1411, %1414 : vector<16x128xf32>
    %c110_300 = arith.constant 110 : index
    %1416 = memref.load %arg4[%c110_300] : memref<144xf32, #tpu.memory_space<smem>>
    %1417 = vector.broadcast %1416 : f32 to vector<16x128xf32>
    %1418 = arith.mulf %1417, %1105 : vector<16x128xf32>
    %1419 = arith.addf %1415, %1418 : vector<16x128xf32>
    %c112_301 = arith.constant 112 : index
    %1420 = memref.load %arg4[%c112_301] : memref<144xf32, #tpu.memory_space<smem>>
    %1421 = vector.broadcast %1420 : f32 to vector<16x128xf32>
    %1422 = arith.mulf %1421, %1128 : vector<16x128xf32>
    %1423 = arith.addf %1419, %1422 : vector<16x128xf32>
    %c114_302 = arith.constant 114 : index
    %1424 = memref.load %arg4[%c114_302] : memref<144xf32, #tpu.memory_space<smem>>
    %1425 = vector.broadcast %1424 : f32 to vector<16x128xf32>
    %1426 = arith.mulf %1425, %1131 : vector<16x128xf32>
    %1427 = arith.addf %1423, %1426 : vector<16x128xf32>
    %c116_303 = arith.constant 116 : index
    %1428 = memref.load %arg4[%c116_303] : memref<144xf32, #tpu.memory_space<smem>>
    %1429 = vector.broadcast %1428 : f32 to vector<16x128xf32>
    %1430 = arith.mulf %1429, %1134 : vector<16x128xf32>
    %1431 = arith.addf %1427, %1430 : vector<16x128xf32>
    %c118_304 = arith.constant 118 : index
    %1432 = memref.load %arg4[%c118_304] : memref<144xf32, #tpu.memory_space<smem>>
    %1433 = vector.broadcast %1432 : f32 to vector<16x128xf32>
    %1434 = arith.mulf %1433, %1137 : vector<16x128xf32>
    %1435 = arith.addf %1431, %1434 : vector<16x128xf32>
    %c120_305 = arith.constant 120 : index
    %1436 = memref.load %arg4[%c120_305] : memref<144xf32, #tpu.memory_space<smem>>
    %1437 = vector.broadcast %1436 : f32 to vector<16x128xf32>
    %1438 = arith.mulf %1437, %1140 : vector<16x128xf32>
    %1439 = arith.addf %1435, %1438 : vector<16x128xf32>
    %c122_306 = arith.constant 122 : index
    %1440 = memref.load %arg4[%c122_306] : memref<144xf32, #tpu.memory_space<smem>>
    %1441 = vector.broadcast %1440 : f32 to vector<16x128xf32>
    %1442 = arith.mulf %1441, %1143 : vector<16x128xf32>
    %1443 = arith.addf %1439, %1442 : vector<16x128xf32>
    %c124_307 = arith.constant 124 : index
    %1444 = memref.load %arg4[%c124_307] : memref<144xf32, #tpu.memory_space<smem>>
    %1445 = vector.broadcast %1444 : f32 to vector<16x128xf32>
    %1446 = arith.mulf %1445, %1146 : vector<16x128xf32>
    %1447 = arith.addf %1443, %1446 : vector<16x128xf32>
    %c126_308 = arith.constant 126 : index
    %1448 = memref.load %arg4[%c126_308] : memref<144xf32, #tpu.memory_space<smem>>
    %1449 = vector.broadcast %1448 : f32 to vector<16x128xf32>
    %1450 = arith.mulf %1449, %1149 : vector<16x128xf32>
    %1451 = arith.addf %1447, %1450 : vector<16x128xf32>
    %c128_309 = arith.constant 128 : index
    %1452 = memref.load %arg4[%c128_309] : memref<144xf32, #tpu.memory_space<smem>>
    %1453 = vector.broadcast %1452 : f32 to vector<16x128xf32>
    %1454 = arith.mulf %1453, %1173 : vector<16x128xf32>
    %1455 = arith.addf %1451, %1454 : vector<16x128xf32>
    %c130_310 = arith.constant 130 : index
    %1456 = memref.load %arg4[%c130_310] : memref<144xf32, #tpu.memory_space<smem>>
    %1457 = vector.broadcast %1456 : f32 to vector<16x128xf32>
    %1458 = arith.mulf %1457, %1176 : vector<16x128xf32>
    %1459 = arith.addf %1455, %1458 : vector<16x128xf32>
    %c132_311 = arith.constant 132 : index
    %1460 = memref.load %arg4[%c132_311] : memref<144xf32, #tpu.memory_space<smem>>
    %1461 = vector.broadcast %1460 : f32 to vector<16x128xf32>
    %1462 = arith.mulf %1461, %1179 : vector<16x128xf32>
    %1463 = arith.addf %1459, %1462 : vector<16x128xf32>
    %c134_312 = arith.constant 134 : index
    %1464 = memref.load %arg4[%c134_312] : memref<144xf32, #tpu.memory_space<smem>>
    %1465 = vector.broadcast %1464 : f32 to vector<16x128xf32>
    %1466 = arith.mulf %1465, %1182 : vector<16x128xf32>
    %1467 = arith.addf %1463, %1466 : vector<16x128xf32>
    %c136_313 = arith.constant 136 : index
    %1468 = memref.load %arg4[%c136_313] : memref<144xf32, #tpu.memory_space<smem>>
    %1469 = vector.broadcast %1468 : f32 to vector<16x128xf32>
    %1470 = arith.mulf %1469, %1185 : vector<16x128xf32>
    %1471 = arith.addf %1467, %1470 : vector<16x128xf32>
    %c138_314 = arith.constant 138 : index
    %1472 = memref.load %arg4[%c138_314] : memref<144xf32, #tpu.memory_space<smem>>
    %1473 = vector.broadcast %1472 : f32 to vector<16x128xf32>
    %1474 = arith.mulf %1473, %1188 : vector<16x128xf32>
    %1475 = arith.addf %1471, %1474 : vector<16x128xf32>
    %c140_315 = arith.constant 140 : index
    %1476 = memref.load %arg4[%c140_315] : memref<144xf32, #tpu.memory_space<smem>>
    %1477 = vector.broadcast %1476 : f32 to vector<16x128xf32>
    %1478 = arith.mulf %1477, %1191 : vector<16x128xf32>
    %1479 = arith.addf %1475, %1478 : vector<16x128xf32>
    %c142_316 = arith.constant 142 : index
    %1480 = memref.load %arg4[%c142_316] : memref<144xf32, #tpu.memory_space<smem>>
    %1481 = vector.broadcast %1480 : f32 to vector<16x128xf32>
    %1482 = arith.mulf %1481, %1194 : vector<16x128xf32>
    %1483 = arith.addf %1479, %1482 : vector<16x128xf32>
    %c0_317 = arith.constant 0 : index
    %1484 = memref.load %arg5[%c0_317] : memref<2xf32, #tpu.memory_space<smem>>
    %1485 = vector.broadcast %1484 : f32 to vector<16x128xf32>
    %1486 = arith.addf %1483, %1485 : vector<16x128xf32>
    %cst_318 = arith.constant 0.000000e+00 : f32
    %1487 = vector.broadcast %cst_318 : f32 to vector<16x128xf32>
    %c1_319 = arith.constant 1 : index
    %1488 = memref.load %arg4[%c1_319] : memref<144xf32, #tpu.memory_space<smem>>
    %1489 = vector.broadcast %1488 : f32 to vector<16x128xf32>
    %1490 = arith.mulf %1489, %854 : vector<16x128xf32>
    %1491 = arith.addf %1487, %1490 : vector<16x128xf32>
    %c3_320 = arith.constant 3 : index
    %1492 = memref.load %arg4[%c3_320] : memref<144xf32, #tpu.memory_space<smem>>
    %1493 = vector.broadcast %1492 : f32 to vector<16x128xf32>
    %1494 = arith.mulf %1493, %857 : vector<16x128xf32>
    %1495 = arith.addf %1491, %1494 : vector<16x128xf32>
    %c5_321 = arith.constant 5 : index
    %1496 = memref.load %arg4[%c5_321] : memref<144xf32, #tpu.memory_space<smem>>
    %1497 = vector.broadcast %1496 : f32 to vector<16x128xf32>
    %1498 = arith.mulf %1497, %860 : vector<16x128xf32>
    %1499 = arith.addf %1495, %1498 : vector<16x128xf32>
    %c7_322 = arith.constant 7 : index
    %1500 = memref.load %arg4[%c7_322] : memref<144xf32, #tpu.memory_space<smem>>
    %1501 = vector.broadcast %1500 : f32 to vector<16x128xf32>
    %1502 = arith.mulf %1501, %863 : vector<16x128xf32>
    %1503 = arith.addf %1499, %1502 : vector<16x128xf32>
    %c9_323 = arith.constant 9 : index
    %1504 = memref.load %arg4[%c9_323] : memref<144xf32, #tpu.memory_space<smem>>
    %1505 = vector.broadcast %1504 : f32 to vector<16x128xf32>
    %1506 = arith.mulf %1505, %866 : vector<16x128xf32>
    %1507 = arith.addf %1503, %1506 : vector<16x128xf32>
    %c11_324 = arith.constant 11 : index
    %1508 = memref.load %arg4[%c11_324] : memref<144xf32, #tpu.memory_space<smem>>
    %1509 = vector.broadcast %1508 : f32 to vector<16x128xf32>
    %1510 = arith.mulf %1509, %869 : vector<16x128xf32>
    %1511 = arith.addf %1507, %1510 : vector<16x128xf32>
    %c13_325 = arith.constant 13 : index
    %1512 = memref.load %arg4[%c13_325] : memref<144xf32, #tpu.memory_space<smem>>
    %1513 = vector.broadcast %1512 : f32 to vector<16x128xf32>
    %1514 = arith.mulf %1513, %872 : vector<16x128xf32>
    %1515 = arith.addf %1511, %1514 : vector<16x128xf32>
    %c15_326 = arith.constant 15 : index
    %1516 = memref.load %arg4[%c15_326] : memref<144xf32, #tpu.memory_space<smem>>
    %1517 = vector.broadcast %1516 : f32 to vector<16x128xf32>
    %1518 = arith.mulf %1517, %875 : vector<16x128xf32>
    %1519 = arith.addf %1515, %1518 : vector<16x128xf32>
    %c17_327 = arith.constant 17 : index
    %1520 = memref.load %arg4[%c17_327] : memref<144xf32, #tpu.memory_space<smem>>
    %1521 = vector.broadcast %1520 : f32 to vector<16x128xf32>
    %1522 = arith.mulf %1521, %898 : vector<16x128xf32>
    %1523 = arith.addf %1519, %1522 : vector<16x128xf32>
    %c19_328 = arith.constant 19 : index
    %1524 = memref.load %arg4[%c19_328] : memref<144xf32, #tpu.memory_space<smem>>
    %1525 = vector.broadcast %1524 : f32 to vector<16x128xf32>
    %1526 = arith.mulf %1525, %901 : vector<16x128xf32>
    %1527 = arith.addf %1523, %1526 : vector<16x128xf32>
    %c21_329 = arith.constant 21 : index
    %1528 = memref.load %arg4[%c21_329] : memref<144xf32, #tpu.memory_space<smem>>
    %1529 = vector.broadcast %1528 : f32 to vector<16x128xf32>
    %1530 = arith.mulf %1529, %904 : vector<16x128xf32>
    %1531 = arith.addf %1527, %1530 : vector<16x128xf32>
    %c23_330 = arith.constant 23 : index
    %1532 = memref.load %arg4[%c23_330] : memref<144xf32, #tpu.memory_space<smem>>
    %1533 = vector.broadcast %1532 : f32 to vector<16x128xf32>
    %1534 = arith.mulf %1533, %907 : vector<16x128xf32>
    %1535 = arith.addf %1531, %1534 : vector<16x128xf32>
    %c25_331 = arith.constant 25 : index
    %1536 = memref.load %arg4[%c25_331] : memref<144xf32, #tpu.memory_space<smem>>
    %1537 = vector.broadcast %1536 : f32 to vector<16x128xf32>
    %1538 = arith.mulf %1537, %910 : vector<16x128xf32>
    %1539 = arith.addf %1535, %1538 : vector<16x128xf32>
    %c27_332 = arith.constant 27 : index
    %1540 = memref.load %arg4[%c27_332] : memref<144xf32, #tpu.memory_space<smem>>
    %1541 = vector.broadcast %1540 : f32 to vector<16x128xf32>
    %1542 = arith.mulf %1541, %913 : vector<16x128xf32>
    %1543 = arith.addf %1539, %1542 : vector<16x128xf32>
    %c29_333 = arith.constant 29 : index
    %1544 = memref.load %arg4[%c29_333] : memref<144xf32, #tpu.memory_space<smem>>
    %1545 = vector.broadcast %1544 : f32 to vector<16x128xf32>
    %1546 = arith.mulf %1545, %916 : vector<16x128xf32>
    %1547 = arith.addf %1543, %1546 : vector<16x128xf32>
    %c31_334 = arith.constant 31 : index
    %1548 = memref.load %arg4[%c31_334] : memref<144xf32, #tpu.memory_space<smem>>
    %1549 = vector.broadcast %1548 : f32 to vector<16x128xf32>
    %1550 = arith.mulf %1549, %919 : vector<16x128xf32>
    %1551 = arith.addf %1547, %1550 : vector<16x128xf32>
    %c33_335 = arith.constant 33 : index
    %1552 = memref.load %arg4[%c33_335] : memref<144xf32, #tpu.memory_space<smem>>
    %1553 = vector.broadcast %1552 : f32 to vector<16x128xf32>
    %1554 = arith.mulf %1553, %943 : vector<16x128xf32>
    %1555 = arith.addf %1551, %1554 : vector<16x128xf32>
    %c35_336 = arith.constant 35 : index
    %1556 = memref.load %arg4[%c35_336] : memref<144xf32, #tpu.memory_space<smem>>
    %1557 = vector.broadcast %1556 : f32 to vector<16x128xf32>
    %1558 = arith.mulf %1557, %946 : vector<16x128xf32>
    %1559 = arith.addf %1555, %1558 : vector<16x128xf32>
    %c37_337 = arith.constant 37 : index
    %1560 = memref.load %arg4[%c37_337] : memref<144xf32, #tpu.memory_space<smem>>
    %1561 = vector.broadcast %1560 : f32 to vector<16x128xf32>
    %1562 = arith.mulf %1561, %949 : vector<16x128xf32>
    %1563 = arith.addf %1559, %1562 : vector<16x128xf32>
    %c39_338 = arith.constant 39 : index
    %1564 = memref.load %arg4[%c39_338] : memref<144xf32, #tpu.memory_space<smem>>
    %1565 = vector.broadcast %1564 : f32 to vector<16x128xf32>
    %1566 = arith.mulf %1565, %952 : vector<16x128xf32>
    %1567 = arith.addf %1563, %1566 : vector<16x128xf32>
    %c41_339 = arith.constant 41 : index
    %1568 = memref.load %arg4[%c41_339] : memref<144xf32, #tpu.memory_space<smem>>
    %1569 = vector.broadcast %1568 : f32 to vector<16x128xf32>
    %1570 = arith.mulf %1569, %955 : vector<16x128xf32>
    %1571 = arith.addf %1567, %1570 : vector<16x128xf32>
    %c43_340 = arith.constant 43 : index
    %1572 = memref.load %arg4[%c43_340] : memref<144xf32, #tpu.memory_space<smem>>
    %1573 = vector.broadcast %1572 : f32 to vector<16x128xf32>
    %1574 = arith.mulf %1573, %958 : vector<16x128xf32>
    %1575 = arith.addf %1571, %1574 : vector<16x128xf32>
    %c45_341 = arith.constant 45 : index
    %1576 = memref.load %arg4[%c45_341] : memref<144xf32, #tpu.memory_space<smem>>
    %1577 = vector.broadcast %1576 : f32 to vector<16x128xf32>
    %1578 = arith.mulf %1577, %961 : vector<16x128xf32>
    %1579 = arith.addf %1575, %1578 : vector<16x128xf32>
    %c47_342 = arith.constant 47 : index
    %1580 = memref.load %arg4[%c47_342] : memref<144xf32, #tpu.memory_space<smem>>
    %1581 = vector.broadcast %1580 : f32 to vector<16x128xf32>
    %1582 = arith.mulf %1581, %964 : vector<16x128xf32>
    %1583 = arith.addf %1579, %1582 : vector<16x128xf32>
    %c49_343 = arith.constant 49 : index
    %1584 = memref.load %arg4[%c49_343] : memref<144xf32, #tpu.memory_space<smem>>
    %1585 = vector.broadcast %1584 : f32 to vector<16x128xf32>
    %1586 = arith.mulf %1585, %987 : vector<16x128xf32>
    %1587 = arith.addf %1583, %1586 : vector<16x128xf32>
    %c51_344 = arith.constant 51 : index
    %1588 = memref.load %arg4[%c51_344] : memref<144xf32, #tpu.memory_space<smem>>
    %1589 = vector.broadcast %1588 : f32 to vector<16x128xf32>
    %1590 = arith.mulf %1589, %990 : vector<16x128xf32>
    %1591 = arith.addf %1587, %1590 : vector<16x128xf32>
    %c53_345 = arith.constant 53 : index
    %1592 = memref.load %arg4[%c53_345] : memref<144xf32, #tpu.memory_space<smem>>
    %1593 = vector.broadcast %1592 : f32 to vector<16x128xf32>
    %1594 = arith.mulf %1593, %993 : vector<16x128xf32>
    %1595 = arith.addf %1591, %1594 : vector<16x128xf32>
    %c55_346 = arith.constant 55 : index
    %1596 = memref.load %arg4[%c55_346] : memref<144xf32, #tpu.memory_space<smem>>
    %1597 = vector.broadcast %1596 : f32 to vector<16x128xf32>
    %1598 = arith.mulf %1597, %996 : vector<16x128xf32>
    %1599 = arith.addf %1595, %1598 : vector<16x128xf32>
    %c57_347 = arith.constant 57 : index
    %1600 = memref.load %arg4[%c57_347] : memref<144xf32, #tpu.memory_space<smem>>
    %1601 = vector.broadcast %1600 : f32 to vector<16x128xf32>
    %1602 = arith.mulf %1601, %999 : vector<16x128xf32>
    %1603 = arith.addf %1599, %1602 : vector<16x128xf32>
    %c59_348 = arith.constant 59 : index
    %1604 = memref.load %arg4[%c59_348] : memref<144xf32, #tpu.memory_space<smem>>
    %1605 = vector.broadcast %1604 : f32 to vector<16x128xf32>
    %1606 = arith.mulf %1605, %1002 : vector<16x128xf32>
    %1607 = arith.addf %1603, %1606 : vector<16x128xf32>
    %c61_349 = arith.constant 61 : index
    %1608 = memref.load %arg4[%c61_349] : memref<144xf32, #tpu.memory_space<smem>>
    %1609 = vector.broadcast %1608 : f32 to vector<16x128xf32>
    %1610 = arith.mulf %1609, %1005 : vector<16x128xf32>
    %1611 = arith.addf %1607, %1610 : vector<16x128xf32>
    %c63_350 = arith.constant 63 : index
    %1612 = memref.load %arg4[%c63_350] : memref<144xf32, #tpu.memory_space<smem>>
    %1613 = vector.broadcast %1612 : f32 to vector<16x128xf32>
    %1614 = arith.mulf %1613, %1008 : vector<16x128xf32>
    %1615 = arith.addf %1611, %1614 : vector<16x128xf32>
    %c65_351 = arith.constant 65 : index
    %1616 = memref.load %arg4[%c65_351] : memref<144xf32, #tpu.memory_space<smem>>
    %1617 = vector.broadcast %1616 : f32 to vector<16x128xf32>
    %1618 = arith.mulf %1617, %1009 : vector<16x128xf32>
    %1619 = arith.addf %1615, %1618 : vector<16x128xf32>
    %c67_352 = arith.constant 67 : index
    %1620 = memref.load %arg4[%c67_352] : memref<144xf32, #tpu.memory_space<smem>>
    %1621 = vector.broadcast %1620 : f32 to vector<16x128xf32>
    %1622 = arith.mulf %1621, %1010 : vector<16x128xf32>
    %1623 = arith.addf %1619, %1622 : vector<16x128xf32>
    %c69_353 = arith.constant 69 : index
    %1624 = memref.load %arg4[%c69_353] : memref<144xf32, #tpu.memory_space<smem>>
    %1625 = vector.broadcast %1624 : f32 to vector<16x128xf32>
    %1626 = arith.mulf %1625, %1011 : vector<16x128xf32>
    %1627 = arith.addf %1623, %1626 : vector<16x128xf32>
    %c71_354 = arith.constant 71 : index
    %1628 = memref.load %arg4[%c71_354] : memref<144xf32, #tpu.memory_space<smem>>
    %1629 = vector.broadcast %1628 : f32 to vector<16x128xf32>
    %1630 = arith.mulf %1629, %1012 : vector<16x128xf32>
    %1631 = arith.addf %1627, %1630 : vector<16x128xf32>
    %c73_355 = arith.constant 73 : index
    %1632 = memref.load %arg4[%c73_355] : memref<144xf32, #tpu.memory_space<smem>>
    %1633 = vector.broadcast %1632 : f32 to vector<16x128xf32>
    %1634 = arith.mulf %1633, %1013 : vector<16x128xf32>
    %1635 = arith.addf %1631, %1634 : vector<16x128xf32>
    %c75_356 = arith.constant 75 : index
    %1636 = memref.load %arg4[%c75_356] : memref<144xf32, #tpu.memory_space<smem>>
    %1637 = vector.broadcast %1636 : f32 to vector<16x128xf32>
    %1638 = arith.mulf %1637, %1014 : vector<16x128xf32>
    %1639 = arith.addf %1635, %1638 : vector<16x128xf32>
    %c77_357 = arith.constant 77 : index
    %1640 = memref.load %arg4[%c77_357] : memref<144xf32, #tpu.memory_space<smem>>
    %1641 = vector.broadcast %1640 : f32 to vector<16x128xf32>
    %1642 = arith.mulf %1641, %1015 : vector<16x128xf32>
    %1643 = arith.addf %1639, %1642 : vector<16x128xf32>
    %c79_358 = arith.constant 79 : index
    %1644 = memref.load %arg4[%c79_358] : memref<144xf32, #tpu.memory_space<smem>>
    %1645 = vector.broadcast %1644 : f32 to vector<16x128xf32>
    %1646 = arith.mulf %1645, %1016 : vector<16x128xf32>
    %1647 = arith.addf %1643, %1646 : vector<16x128xf32>
    %c81_359 = arith.constant 81 : index
    %1648 = memref.load %arg4[%c81_359] : memref<144xf32, #tpu.memory_space<smem>>
    %1649 = vector.broadcast %1648 : f32 to vector<16x128xf32>
    %1650 = arith.mulf %1649, %1039 : vector<16x128xf32>
    %1651 = arith.addf %1647, %1650 : vector<16x128xf32>
    %c83_360 = arith.constant 83 : index
    %1652 = memref.load %arg4[%c83_360] : memref<144xf32, #tpu.memory_space<smem>>
    %1653 = vector.broadcast %1652 : f32 to vector<16x128xf32>
    %1654 = arith.mulf %1653, %1042 : vector<16x128xf32>
    %1655 = arith.addf %1651, %1654 : vector<16x128xf32>
    %c85_361 = arith.constant 85 : index
    %1656 = memref.load %arg4[%c85_361] : memref<144xf32, #tpu.memory_space<smem>>
    %1657 = vector.broadcast %1656 : f32 to vector<16x128xf32>
    %1658 = arith.mulf %1657, %1045 : vector<16x128xf32>
    %1659 = arith.addf %1655, %1658 : vector<16x128xf32>
    %c87_362 = arith.constant 87 : index
    %1660 = memref.load %arg4[%c87_362] : memref<144xf32, #tpu.memory_space<smem>>
    %1661 = vector.broadcast %1660 : f32 to vector<16x128xf32>
    %1662 = arith.mulf %1661, %1048 : vector<16x128xf32>
    %1663 = arith.addf %1659, %1662 : vector<16x128xf32>
    %c89_363 = arith.constant 89 : index
    %1664 = memref.load %arg4[%c89_363] : memref<144xf32, #tpu.memory_space<smem>>
    %1665 = vector.broadcast %1664 : f32 to vector<16x128xf32>
    %1666 = arith.mulf %1665, %1051 : vector<16x128xf32>
    %1667 = arith.addf %1663, %1666 : vector<16x128xf32>
    %c91_364 = arith.constant 91 : index
    %1668 = memref.load %arg4[%c91_364] : memref<144xf32, #tpu.memory_space<smem>>
    %1669 = vector.broadcast %1668 : f32 to vector<16x128xf32>
    %1670 = arith.mulf %1669, %1054 : vector<16x128xf32>
    %1671 = arith.addf %1667, %1670 : vector<16x128xf32>
    %c93_365 = arith.constant 93 : index
    %1672 = memref.load %arg4[%c93_365] : memref<144xf32, #tpu.memory_space<smem>>
    %1673 = vector.broadcast %1672 : f32 to vector<16x128xf32>
    %1674 = arith.mulf %1673, %1057 : vector<16x128xf32>
    %1675 = arith.addf %1671, %1674 : vector<16x128xf32>
    %c95_366 = arith.constant 95 : index
    %1676 = memref.load %arg4[%c95_366] : memref<144xf32, #tpu.memory_space<smem>>
    %1677 = vector.broadcast %1676 : f32 to vector<16x128xf32>
    %1678 = arith.mulf %1677, %1060 : vector<16x128xf32>
    %1679 = arith.addf %1675, %1678 : vector<16x128xf32>
    %c97_367 = arith.constant 97 : index
    %1680 = memref.load %arg4[%c97_367] : memref<144xf32, #tpu.memory_space<smem>>
    %1681 = vector.broadcast %1680 : f32 to vector<16x128xf32>
    %1682 = arith.mulf %1681, %1084 : vector<16x128xf32>
    %1683 = arith.addf %1679, %1682 : vector<16x128xf32>
    %c99_368 = arith.constant 99 : index
    %1684 = memref.load %arg4[%c99_368] : memref<144xf32, #tpu.memory_space<smem>>
    %1685 = vector.broadcast %1684 : f32 to vector<16x128xf32>
    %1686 = arith.mulf %1685, %1087 : vector<16x128xf32>
    %1687 = arith.addf %1683, %1686 : vector<16x128xf32>
    %c101_369 = arith.constant 101 : index
    %1688 = memref.load %arg4[%c101_369] : memref<144xf32, #tpu.memory_space<smem>>
    %1689 = vector.broadcast %1688 : f32 to vector<16x128xf32>
    %1690 = arith.mulf %1689, %1090 : vector<16x128xf32>
    %1691 = arith.addf %1687, %1690 : vector<16x128xf32>
    %c103_370 = arith.constant 103 : index
    %1692 = memref.load %arg4[%c103_370] : memref<144xf32, #tpu.memory_space<smem>>
    %1693 = vector.broadcast %1692 : f32 to vector<16x128xf32>
    %1694 = arith.mulf %1693, %1093 : vector<16x128xf32>
    %1695 = arith.addf %1691, %1694 : vector<16x128xf32>
    %c105_371 = arith.constant 105 : index
    %1696 = memref.load %arg4[%c105_371] : memref<144xf32, #tpu.memory_space<smem>>
    %1697 = vector.broadcast %1696 : f32 to vector<16x128xf32>
    %1698 = arith.mulf %1697, %1096 : vector<16x128xf32>
    %1699 = arith.addf %1695, %1698 : vector<16x128xf32>
    %c107_372 = arith.constant 107 : index
    %1700 = memref.load %arg4[%c107_372] : memref<144xf32, #tpu.memory_space<smem>>
    %1701 = vector.broadcast %1700 : f32 to vector<16x128xf32>
    %1702 = arith.mulf %1701, %1099 : vector<16x128xf32>
    %1703 = arith.addf %1699, %1702 : vector<16x128xf32>
    %c109_373 = arith.constant 109 : index
    %1704 = memref.load %arg4[%c109_373] : memref<144xf32, #tpu.memory_space<smem>>
    %1705 = vector.broadcast %1704 : f32 to vector<16x128xf32>
    %1706 = arith.mulf %1705, %1102 : vector<16x128xf32>
    %1707 = arith.addf %1703, %1706 : vector<16x128xf32>
    %c111_374 = arith.constant 111 : index
    %1708 = memref.load %arg4[%c111_374] : memref<144xf32, #tpu.memory_space<smem>>
    %1709 = vector.broadcast %1708 : f32 to vector<16x128xf32>
    %1710 = arith.mulf %1709, %1105 : vector<16x128xf32>
    %1711 = arith.addf %1707, %1710 : vector<16x128xf32>
    %c113_375 = arith.constant 113 : index
    %1712 = memref.load %arg4[%c113_375] : memref<144xf32, #tpu.memory_space<smem>>
    %1713 = vector.broadcast %1712 : f32 to vector<16x128xf32>
    %1714 = arith.mulf %1713, %1128 : vector<16x128xf32>
    %1715 = arith.addf %1711, %1714 : vector<16x128xf32>
    %c115_376 = arith.constant 115 : index
    %1716 = memref.load %arg4[%c115_376] : memref<144xf32, #tpu.memory_space<smem>>
    %1717 = vector.broadcast %1716 : f32 to vector<16x128xf32>
    %1718 = arith.mulf %1717, %1131 : vector<16x128xf32>
    %1719 = arith.addf %1715, %1718 : vector<16x128xf32>
    %c117_377 = arith.constant 117 : index
    %1720 = memref.load %arg4[%c117_377] : memref<144xf32, #tpu.memory_space<smem>>
    %1721 = vector.broadcast %1720 : f32 to vector<16x128xf32>
    %1722 = arith.mulf %1721, %1134 : vector<16x128xf32>
    %1723 = arith.addf %1719, %1722 : vector<16x128xf32>
    %c119_378 = arith.constant 119 : index
    %1724 = memref.load %arg4[%c119_378] : memref<144xf32, #tpu.memory_space<smem>>
    %1725 = vector.broadcast %1724 : f32 to vector<16x128xf32>
    %1726 = arith.mulf %1725, %1137 : vector<16x128xf32>
    %1727 = arith.addf %1723, %1726 : vector<16x128xf32>
    %c121_379 = arith.constant 121 : index
    %1728 = memref.load %arg4[%c121_379] : memref<144xf32, #tpu.memory_space<smem>>
    %1729 = vector.broadcast %1728 : f32 to vector<16x128xf32>
    %1730 = arith.mulf %1729, %1140 : vector<16x128xf32>
    %1731 = arith.addf %1727, %1730 : vector<16x128xf32>
    %c123_380 = arith.constant 123 : index
    %1732 = memref.load %arg4[%c123_380] : memref<144xf32, #tpu.memory_space<smem>>
    %1733 = vector.broadcast %1732 : f32 to vector<16x128xf32>
    %1734 = arith.mulf %1733, %1143 : vector<16x128xf32>
    %1735 = arith.addf %1731, %1734 : vector<16x128xf32>
    %c125_381 = arith.constant 125 : index
    %1736 = memref.load %arg4[%c125_381] : memref<144xf32, #tpu.memory_space<smem>>
    %1737 = vector.broadcast %1736 : f32 to vector<16x128xf32>
    %1738 = arith.mulf %1737, %1146 : vector<16x128xf32>
    %1739 = arith.addf %1735, %1738 : vector<16x128xf32>
    %c127_382 = arith.constant 127 : index
    %1740 = memref.load %arg4[%c127_382] : memref<144xf32, #tpu.memory_space<smem>>
    %1741 = vector.broadcast %1740 : f32 to vector<16x128xf32>
    %1742 = arith.mulf %1741, %1149 : vector<16x128xf32>
    %1743 = arith.addf %1739, %1742 : vector<16x128xf32>
    %c129_383 = arith.constant 129 : index
    %1744 = memref.load %arg4[%c129_383] : memref<144xf32, #tpu.memory_space<smem>>
    %1745 = vector.broadcast %1744 : f32 to vector<16x128xf32>
    %1746 = arith.mulf %1745, %1173 : vector<16x128xf32>
    %1747 = arith.addf %1743, %1746 : vector<16x128xf32>
    %c131_384 = arith.constant 131 : index
    %1748 = memref.load %arg4[%c131_384] : memref<144xf32, #tpu.memory_space<smem>>
    %1749 = vector.broadcast %1748 : f32 to vector<16x128xf32>
    %1750 = arith.mulf %1749, %1176 : vector<16x128xf32>
    %1751 = arith.addf %1747, %1750 : vector<16x128xf32>
    %c133_385 = arith.constant 133 : index
    %1752 = memref.load %arg4[%c133_385] : memref<144xf32, #tpu.memory_space<smem>>
    %1753 = vector.broadcast %1752 : f32 to vector<16x128xf32>
    %1754 = arith.mulf %1753, %1179 : vector<16x128xf32>
    %1755 = arith.addf %1751, %1754 : vector<16x128xf32>
    %c135_386 = arith.constant 135 : index
    %1756 = memref.load %arg4[%c135_386] : memref<144xf32, #tpu.memory_space<smem>>
    %1757 = vector.broadcast %1756 : f32 to vector<16x128xf32>
    %1758 = arith.mulf %1757, %1182 : vector<16x128xf32>
    %1759 = arith.addf %1755, %1758 : vector<16x128xf32>
    %c137_387 = arith.constant 137 : index
    %1760 = memref.load %arg4[%c137_387] : memref<144xf32, #tpu.memory_space<smem>>
    %1761 = vector.broadcast %1760 : f32 to vector<16x128xf32>
    %1762 = arith.mulf %1761, %1185 : vector<16x128xf32>
    %1763 = arith.addf %1759, %1762 : vector<16x128xf32>
    %c139_388 = arith.constant 139 : index
    %1764 = memref.load %arg4[%c139_388] : memref<144xf32, #tpu.memory_space<smem>>
    %1765 = vector.broadcast %1764 : f32 to vector<16x128xf32>
    %1766 = arith.mulf %1765, %1188 : vector<16x128xf32>
    %1767 = arith.addf %1763, %1766 : vector<16x128xf32>
    %c141_389 = arith.constant 141 : index
    %1768 = memref.load %arg4[%c141_389] : memref<144xf32, #tpu.memory_space<smem>>
    %1769 = vector.broadcast %1768 : f32 to vector<16x128xf32>
    %1770 = arith.mulf %1769, %1191 : vector<16x128xf32>
    %1771 = arith.addf %1767, %1770 : vector<16x128xf32>
    %c143_390 = arith.constant 143 : index
    %1772 = memref.load %arg4[%c143_390] : memref<144xf32, #tpu.memory_space<smem>>
    %1773 = vector.broadcast %1772 : f32 to vector<16x128xf32>
    %1774 = arith.mulf %1773, %1194 : vector<16x128xf32>
    %1775 = arith.addf %1771, %1774 : vector<16x128xf32>
    %c1_391 = arith.constant 1 : index
    %1776 = memref.load %arg5[%c1_391] : memref<2xf32, #tpu.memory_space<smem>>
    %1777 = vector.broadcast %1776 : f32 to vector<16x128xf32>
    %1778 = arith.addf %1775, %1777 : vector<16x128xf32>
    %1779 = tpu.concatenate %1486, %1778 in 0 : vector<16x128xf32>, vector<16x128xf32> -> vector<32x128xf32>
    %1780 = arith.index_cast %arg0 : i32 to index
    %1781 = memref.load %arg1[%1780] : memref<2xf32, #tpu.memory_space<smem>>
    %1782 = vector.broadcast %1781 : f32 to vector<32x128xf32>
    %1783 = arith.mulf %1779, %1782 : vector<32x128xf32>
    %c0_392 = arith.constant 0 : index
    %c0_393 = arith.constant 0 : index
    %c0_394 = arith.constant 0 : index
    %1784 = vector.load %arg7[%c0_392, %c0_393, %c0_394] : memref<1x32x128xf32, #tpu.memory_space<vmem>>, vector<1x32x128xf32>
    %1785 = vector.shape_cast %1784 : vector<1x32x128xf32> to vector<32x128xf32>
    %1786 = vector.shape_cast %1783 : vector<32x128xf32> to vector<1x32x128xf32>
    tpu.vector_store %arg7[%c0_392, %c0_393, %c0_394], %1786 {strides = array<i32>} : memref<1x32x128xf32, #tpu.memory_space<vmem>>, vector<1x32x128xf32>,
    return
  }
  func.func @transform_0(%arg0: i32, %arg1: memref<2xf32, #tpu.memory_space<smem>>, %arg2: memref<144xf32, #tpu.memory_space<smem>>, %arg3: memref<8xf32, #tpu.memory_space<smem>>, %arg4: memref<144xf32, #tpu.memory_space<smem>>, %arg5: memref<2xf32, #tpu.memory_space<smem>>) -> (i32, i32, i32) {
    %c0_i32 = arith.constant 0 : i32
    %c0_i32_0 = arith.constant 0 : i32
    %c0_i32_1 = arith.constant 0 : i32
    return %arg0, %c0_i32, %c0_i32_0 : i32, i32, i32
  }
  func.func @transform_1(%arg0: i32, %arg1: memref<2xf32, #tpu.memory_space<smem>>, %arg2: memref<144xf32, #tpu.memory_space<smem>>, %arg3: memref<8xf32, #tpu.memory_space<smem>>, %arg4: memref<144xf32, #tpu.memory_space<smem>>, %arg5: memref<2xf32, #tpu.memory_space<smem>>) -> (i32, i32, i32) {
    %c0_i32 = arith.constant 0 : i32
    %c0_i32_0 = arith.constant 0 : i32
    %c0_i32_1 = arith.constant 0 : i32
    return %arg0, %c0_i32, %c0_i32_0 : i32, i32, i32
  }
}

</mosaic_0001>

<llo_original>
// kernel: tpu_custom_call.1
$region0: #{tpu_custom_call.1}
  #allocation0 [shape = 'u32[]', space=smem, size = 0x4, offset = 0x4, fixed_abs, tag = 'smem constant byte address 0x4 - core index']
  #allocation1 [shape = 'u32[72,128]{1,0:T(1,128)}', space=vmem, size = 0x9000, scoped, tag = 'internal scratch']
  #allocation2 [shape = 's32[1]{0}', space=sflag, size = 0x4, scoped, tag = 'scoped memory for tpu_custom_call.1']
  #allocation3 [shape = 'u8[512]{0}', space=smem, size = 0x200, scoped, tag = 'prefetched SMEM operand 0']
  #allocation4 [shape = 'u8[1024]{0}', space=smem, size = 0x400, scoped, tag = 'prefetched SMEM operand 1']
  #allocation5 [shape = 'u8[512]{0}', space=smem, size = 0x200, scoped, tag = 'prefetched SMEM operand 2']
  #allocation6 [shape = 'u8[1024]{0}', space=smem, size = 0x400, scoped, tag = 'prefetched SMEM operand 3']
  #allocation7 [shape = 'u8[512]{0}', space=smem, size = 0x200, scoped, tag = 'prefetched SMEM operand 4']
  %s0 = inlined_call_operand.hbm [shape: f32[2], index: 0, kind: input, shape index: {}]
  %s1 = inlined_call_operand.hbm [shape: f32[144], index: 1, kind: input, shape index: {}]
  %s2 = inlined_call_operand.hbm [shape: f32[8], index: 2, kind: input, shape index: {}]
  %s3 = inlined_call_operand.vmem [shape: f32[144], index: 3, kind: input, shape index: {}]
  %s4 = inlined_call_operand.vmem [shape: f32[2], index: 4, kind: input, shape index: {}]
  %s5 = inlined_call_operand.hbm [shape: f32[2,32,128], index: 5, kind: input, shape index: {}]
  %s6 = inlined_call_operand.hbm [shape: f32[2,32,128], index: 6, kind: output, shape index: {}]
  %s7 = sld [smem:[#allocation0]]
  $region41: #{tpu_custom_call.1} parent=0
    _
  %s9 = ssub.s32 1, %s7
  %s10 = scalar_select 0, %s9, %s7
  %s12 = sshll.u32 %s0, 4
  %s13 = int_to_ptr.hbm [resolvable:$true] %s12
  %15 = dma.hbm_to_smem %s13, 16, [#allocation3], [#allocation2]
  %s17 = sshll.u32 %s1, 4
  %s18 = int_to_ptr.hbm [resolvable:$true] %s17
  %20 = dma.hbm_to_smem %s18, 32, [#allocation4], [#allocation2]
  %s22 = sshll.u32 %s2, 4
  %s23 = int_to_ptr.hbm [resolvable:$true] %s22
  %25 = dma.hbm_to_smem %s23, 16, [#allocation5], [#allocation2]
  %s27 = sshll.u32 %s3, 4
  %s28 = int_to_ptr.vmem [resolvable:$true] %s27
  %30 = dma.vmem_to_smem %s28, 32, [#allocation6], [#allocation2]
  %s32 = sshll.u32 %s4, 4
  %s33 = int_to_ptr.vmem [resolvable:$true] %s32
  %35 = dma.vmem_to_smem %s33, 16, [#allocation7], [#allocation2]
  %37 = dma.done [#allocation2], 112
  %38 = sfence
  $region1: #{tpu_custom_call.1} parent=0
    #allocation8 [shape = 'u8[32768]{0}', space=vmem, size = 0x8000, scoped, tag = 'input window, operand 5']
    #allocation9 [shape = 's32[2]{0}', space=sflag, size = 0x8, scoped, tag = 'scoped memory for tpu_custom_call.1']
    #allocation10 [shape = 's32[2]{0}', space=sflag, size = 0x8, scoped, tag = 'scoped memory for tpu_custom_call.1']
    #allocation11 [shape = 'u8[32768]{0}', space=vmem, size = 0x8000, scoped, tag = 'output window, operand 0']
    %39 = vsyncpa [#allocation9], 0
    %s40 = scalar_lea.sflag [#allocation9], 1
    %41 = vsyncpa %s40, 0
    %42 = vsyncpa [#allocation10], 0
    %s43 = scalar_lea.sflag [#allocation10], 1
    %44 = vsyncpa %s43, 0
    loop: start=0, step=1, limit=4
    $region2: #{tpu_custom_call.1} parent=1 // loop_pre_header
      _
    $region3: #{tpu_custom_call.1} parent=1 // loop_header
      %s46 = sphi 0, %s50
      %p47 = scmp.ge.s32.totalorder %s46, 4
      %s56 = sphi 0, %s58
      %s59 = sphi 0, %s56
      %s60 = sphi 0, %s59
      %s76 = sphi 0, %s60
      %s82 = sphi 0, %s84
      %s85 = sphi 0, %s82
      %s86 = sphi 0, %s85
      %s102 = sphi 0, %s86
    $region4: #{tpu_custom_call.1} parent=1 // loop_header_branch
      %49 = sbr.rel (%p47) target = $region8
    $region5: #{tpu_custom_call.1} parent=1 // loop_body
      %s51 = ssub.s32 %s46, 1
      %s52 = ssub.s32 %s46, 2
      %s53 = sadd.s32 %s46, 1
      %s54 = ssub.s32 %s46, %s53
      %p55 = scmp.eq.s32.totalorder %s54, 0
      %s57 = sadd.s32 %s56, 1
      %s58 = scalar_select %p55, %s56, %s57
      %p61 = pneg %p55
      %p62 = scmp.eq.s32.totalorder %s46, 1
      %p63 = por %p61, %p62
      %p64 = scmp.ne.s32.totalorder %s56, %s59
      %p65 = scmp.eq.s32.totalorder %s46, 0
      %p66 = por %p64, %p65
      %p67 = scmp.ne.s32.totalorder %s56, %s59
      %p68 = scmp.eq.s32.totalorder %s51, 1
      %p69 = por %p67, %p68
      %p70 = scmp.ne.s32.totalorder %s59, %s60
      %p71 = scmp.eq.s32.totalorder %s51, 0
      %p72 = por %p70, %p71
      %p73 = scmp.ne.s32.totalorder %s59, %s60
      %p74 = scmp.eq.s32.totalorder %s52, 1
      %p75 = por %p73, %p74
      %p77 = scmp.ne.s32.totalorder %s60, %s76
      %p78 = scmp.eq.s32.totalorder %s52, 0
      %p79 = por %p77, %p78
      %s80 = ssub.s32 %s46, %s53
      %p81 = scmp.eq.s32.totalorder %s80, 0
      %s83 = sadd.s32 %s82, 1
      %s84 = scalar_select %p81, %s82, %s83
      %p87 = pneg %p81
      %p88 = scmp.eq.s32.totalorder %s46, 1
      %p89 = por %p87, %p88
      %p90 = scmp.ne.s32.totalorder %s82, %s85
      %p91 = scmp.eq.s32.totalorder %s46, 0
      %p92 = por %p90, %p91
      %p93 = scmp.ne.s32.totalorder %s82, %s85
      %p94 = scmp.eq.s32.totalorder %s51, 1
      %p95 = por %p93, %p94
      %p96 = scmp.ne.s32.totalorder %s85, %s86
      %p97 = scmp.eq.s32.totalorder %s51, 0
      %p98 = por %p96, %p97
      %p99 = scmp.ne.s32.totalorder %s85, %s86
      %p100 = scmp.eq.s32.totalorder %s52, 1
      %p101 = por %p99, %p100
      %p103 = scmp.ne.s32.totalorder %s86, %s102
      %p104 = scmp.eq.s32.totalorder %s52, 0
      %p105 = por %p103, %p104
      %p106 = scmp.le.s32.totalorder 1, %s46
      %p107 = scmp.lt.s32.totalorder %s46, 3
      %p108 = pnand %p106, %p107
      %p109 = pneg %p108
      // Predicated region
      $region9: #{tpu_custom_call.1} parent=5 // pred_check
        _
      $region10: #{tpu_custom_call.1} parent=5 // pred_check_branch
        %111 = sbr.rel (%p108) target = $region12
      $region11: #{tpu_custom_call.1} parent=5 // pred_region
        %s112 = ssub.s32 %s46, 1
      $region12: #{tpu_custom_call.1} parent=5 // pred_fallthru
        _
      %p113 = scmp.lt.s32.totalorder %s46, 2
      // Predicated region
      $region13: #{tpu_custom_call.1} parent=5 // pred_check
        %p114 = pneg %p113
      $region14: #{tpu_custom_call.1} parent=5 // pred_check_branch
        %116 = sbr.rel (%p114) target = $region16
      $region15: #{tpu_custom_call.1} parent=5 // pred_region
        // Predicated region
        $region17: #{tpu_custom_call.1} parent=15 // pred_check
          %p117 = pneg %p66
        $region18: #{tpu_custom_call.1} parent=15 // pred_check_branch
          %119 = sbr.rel (%p117) target = $region20
        $region19: #{tpu_custom_call.1} parent=15 // pred_region
          %s120 = sand.u32 %s56, 1
          %s121 = scalar_lea.sflag [#allocation9], %s120
          %s122 = sand.u32 %s56, 1
          %s123 = smul.addr %s122, 32
          %s124 = scalar_lea.vmem [#allocation8], %s123
          %126 = vsyncadd %s121, 0
          %s127 = smul.addr %s46, 4
          %s128 = smul.addr %s127, 8
          %s129 = scalar_lea.hbm %s5, %s128
          %s130 = sshll.u32 %s129, 4
          %s131 = int_to_ptr.hbm [resolvable:$true] %s130
          %s132 = sshll.u32 %s124, 4
          %s133 = int_to_ptr.vmem [resolvable:$true] %s132
          %138 = dma.hbm_to_vmem [thread:$0]  %s131, 512, %s133, %s121, 128, 128, 8
        $region20: #{tpu_custom_call.1} parent=15 // pred_fallthru
          _
      $region16: #{tpu_custom_call.1} parent=5 // pred_fallthru
        _
      %p139 = scmp.le.s32.totalorder 1, %s46
      %p140 = scmp.lt.s32.totalorder %s46, 3
      %p141 = pnand %p139, %p140
      %p142 = pneg %p141
      // Predicated region
      $region21: #{tpu_custom_call.1} parent=5 // pred_check
        _
      $region22: #{tpu_custom_call.1} parent=5 // pred_check_branch
        %144 = sbr.rel (%p141) target = $region24
      $region23: #{tpu_custom_call.1} parent=5 // pred_region
        %s145 = ssub.s32 %s46, 1
        %s146 = sand.u32 %s59, 1
        %s147 = scalar_lea.sflag [#allocation9], %s146
        %s148 = sand.u32 %s59, 1
        %s149 = smul.addr %s148, 32
        %s150 = scalar_lea.vmem [#allocation8], %s149
        // Predicated region
        $region25: #{tpu_custom_call.1} parent=23 // pred_check
          %p151 = pneg %p72
        $region26: #{tpu_custom_call.1} parent=23 // pred_check_branch
          %153 = sbr.rel (%p151) target = $region28
        $region27: #{tpu_custom_call.1} parent=23 // pred_region
          %155 = dma.done %s147, 512
        $region28: #{tpu_custom_call.1} parent=23 // pred_fallthru
          _
        %s156 = sand.u32 %s59, 1
        %s157 = scalar_lea.sflag [#allocation9], %s156
        %s158 = sand.u32 %s59, 1
        %s159 = smul.addr %s158, 32
        %s160 = scalar_lea.vmem [#allocation8], %s159
        %p161 = pneg %p72
        %p162 = pneg %p69
        %p163 = pneg %p98
        %p164 = pneg %p95
        %s165 = sand.u32 %s85, 1
        %s166 = scalar_lea.sflag [#allocation10], %s165
        %s167 = sand.u32 %s85, 1
        %s168 = smul.addr %s167, 32
        %s169 = scalar_lea.vmem [#allocation11], %s168
        %v170 = vld [vmem:[%s150] sm:$0xff]
        %v171 = vld [vmem:[%s150 + $0x8] sm:$0xff]
        %v172 = vld [vmem:[%s150 + $0x10] sm:$0xff]
        %v173 = vld [vmem:[%s150 + $0x18] sm:$0xff]
        %v174 = vlaneseq
        %v175 = vshrl.u32 %v174, 7
        %v176 = vadd.s32 %v175, 8
        %v177 = vlaneseq
        %v178 = vand.u32 %v177, 127
        %v179 = vrot.slane %v170, 7
        %v180 = vrot.slane %v171, 7
        %v181 = vrot.slane %v172, 7
        %v182 = vrot.slane %v173, 7
        %vm183 = vcmp.lt.s32.totalorder %v175, 1
        %v184 = vsel %vm183, %v181, %v182
        %v185 = vsel %vm183, %v180, %v181
        %v186 = vsel %vm183, %v179, %v180
        %v187 = vsel %vm183, %v182, %v179
        %188 = vrot.lane.b32.xlu0 %v187, 1
        %v189 = vpop.permute.xlu0 %188
        %190 = vrot.lane.b32.xlu0 %v186, 1
        %v191 = vpop.permute.xlu0 %190
        %192 = vrot.lane.b32.xlu0 %v185, 1
        %v193 = vpop.permute.xlu0 %192
        %194 = vrot.lane.b32.xlu0 %v184, 1
        %v195 = vpop.permute.xlu0 %194
        %v196 = vadd.s32 %v175, 4294967295
        %v197 = vadd.s32 %v176, 4294967295
        %vm198 = vcmp.ge.s32.totalorder %v196, 0
        %vm199 = vcmp.ge.s32.totalorder %v197, 0
        %vm200 = vcmp.lt.s32.totalorder %v196, 16
        %vm201 = vcmp.lt.s32.totalorder %v197, 16
        %vm202 = vmand %vm198, %vm200
        %vm203 = vmand %vm199, %vm201
        %v204 = vadd.s32 %v178, 4294967295
        %vm205 = vcmp.ge.s32.totalorder %v204, 0
        %vm206 = vmand %vm202, %vm205
        %vm207 = vmand %vm203, %vm205
        %vm208 = vcmp.lt.s32.totalorder %v204, 128
        %vm209 = vmand %vm206, %vm208
        %vm210 = vmand %vm207, %vm208
        %v211 = vsel %vm209, %v189, 0.0
        %v212 = vsel %vm210, %v191, 0.0
        %v213 = vsel %vm209, %v193, 0.0
        %v214 = vsel %vm210, %v195, 0.0
        %vm215 = vcmp.ge.s32.totalorder %v178, 0
        %vm216 = vmand %vm202, %vm215
        %vm217 = vmand %vm203, %vm215
        %vm218 = vcmp.lt.s32.totalorder %v178, 128
        %vm219 = vmand %vm216, %vm218
        %vm220 = vmand %vm217, %vm218
        %v221 = vsel %vm219, %v187, 0.0
        %v222 = vsel %vm220, %v186, 0.0
        %v223 = vsel %vm219, %v185, 0.0
        %v224 = vsel %vm220, %v184, 0.0
        %225 = vrot.lane.b32.xlu0 %v187, 127
        %v226 = vpop.permute.xlu0 %225
        %227 = vrot.lane.b32.xlu0 %v186, 127
        %v228 = vpop.permute.xlu0 %227
        %229 = vrot.lane.b32.xlu0 %v185, 127
        %v230 = vpop.permute.xlu0 %229
        %231 = vrot.lane.b32.xlu0 %v184, 127
        %v232 = vpop.permute.xlu0 %231
        %v233 = vadd.s32 %v178, 1
        %vm234 = vcmp.ge.s32.totalorder %v233, 0
        %vm235 = vmand %vm202, %vm234
        %vm236 = vmand %vm203, %vm234
        %vm237 = vcmp.lt.s32.totalorder %v233, 128
        %vm238 = vmand %vm235, %vm237
        %vm239 = vmand %vm236, %vm237
        %v240 = vsel %vm238, %v226, 0.0
        %v241 = vsel %vm239, %v228, 0.0
        %v242 = vsel %vm238, %v230, 0.0
        %v243 = vsel %vm239, %v232, 0.0
        %244 = vrot.lane.b32.xlu0 %v170, 1
        %v245 = vpop.permute.xlu0 %244
        %246 = vrot.lane.b32.xlu0 %v171, 1
        %v247 = vpop.permute.xlu0 %246
        %248 = vrot.lane.b32.xlu0 %v172, 1
        %v249 = vpop.permute.xlu0 %248
        %250 = vrot.lane.b32.xlu0 %v173, 1
        %v251 = vpop.permute.xlu0 %250
        %vm252 = vcmp.ge.s32.totalorder %v175, 0
        %vm253 = vcmp.ge.s32.totalorder %v176, 0
        %vm254 = vcmp.lt.s32.totalorder %v175, 16
        %vm255 = vcmp.lt.s32.totalorder %v176, 16
        %vm256 = vmand %vm252, %vm254
        %vm257 = vmand %vm253, %vm255
        %vm258 = vmand %vm256, %vm205
        %vm259 = vmand %vm257, %vm205
        %vm260 = vmand %vm258, %vm208
        %vm261 = vmand %vm259, %vm208
        %v262 = vsel %vm260, %v245, 0.0
        %v263 = vsel %vm261, %v247, 0.0
        %v264 = vsel %vm260, %v249, 0.0
        %v265 = vsel %vm261, %v251, 0.0
        %266 = vrot.lane.b32.xlu0 %v170, 127
        %v267 = vpop.permute.xlu0 %266
        %268 = vrot.lane.b32.xlu0 %v171, 127
        %v269 = vpop.permute.xlu0 %268
        %270 = vrot.lane.b32.xlu0 %v172, 127
        %v271 = vpop.permute.xlu0 %270
        %272 = vrot.lane.b32.xlu0 %v173, 127
        %v273 = vpop.permute.xlu0 %272
        %vm274 = vmand %vm256, %vm234
        %vm275 = vmand %vm257, %vm234
        %vm276 = vmand %vm274, %vm237
        %vm277 = vmand %vm275, %vm237
        %v278 = vsel %vm276, %v267, 0.0
        %v279 = vsel %vm277, %v269, 0.0
        %v280 = vsel %vm276, %v271, 0.0
        %v281 = vsel %vm277, %v273, 0.0
        %v282 = vrot.slane %v170, 1
        %v283 = vrot.slane %v171, 1
        %v284 = vrot.slane %v172, 1
        %v285 = vrot.slane %v173, 1
        %vm286 = vcmp.lt.s32.totalorder %v175, 7
        %v287 = vsel %vm286, %v284, %v285
        %v288 = vsel %vm286, %v283, %v284
        %v289 = vsel %vm286, %v282, %v283
        %v290 = vsel %vm286, %v285, %v282
        %291 = vrot.lane.b32.xlu0 %v289, 1
        %v292 = vpop.permute.xlu0 %291
        %293 = vrot.lane.b32.xlu0 %v288, 1
        %v294 = vpop.permute.xlu0 %293
        %295 = vrot.lane.b32.xlu0 %v287, 1
        %v296 = vpop.permute.xlu0 %295
        %297 = vrot.lane.b32.xlu0 %v290, 1
        %v298 = vpop.permute.xlu0 %297
        %v299 = vadd.s32 %v175, 1
        %v300 = vadd.s32 %v176, 1
        %vm301 = vcmp.ge.s32.totalorder %v299, 0
        %vm302 = vcmp.ge.s32.totalorder %v300, 0
        %vm303 = vcmp.lt.s32.totalorder %v299, 16
        %vm304 = vcmp.lt.s32.totalorder %v300, 16
        %vm305 = vmand %vm301, %vm303
        %vm306 = vmand %vm302, %vm304
        %vm307 = vmand %vm305, %vm205
        %vm308 = vmand %vm306, %vm205
        %vm309 = vmand %vm307, %vm208
        %vm310 = vmand %vm308, %vm208
        %v311 = vsel %vm309, %v292, 0.0
        %v312 = vsel %vm310, %v294, 0.0
        %v313 = vsel %vm309, %v296, 0.0
        %v314 = vsel %vm310, %v298, 0.0
        %vm315 = vmand %vm305, %vm215
        %vm316 = vmand %vm306, %vm215
        %vm317 = vmand %vm315, %vm218
        %vm318 = vmand %vm316, %vm218
        %v319 = vsel %vm317, %v289, 0.0
        %v320 = vsel %vm318, %v288, 0.0
        %v321 = vsel %vm317, %v287, 0.0
        %v322 = vsel %vm318, %v290, 0.0
        %323 = vrot.lane.b32.xlu0 %v289, 127
        %v324 = vpop.permute.xlu0 %323
        %325 = vrot.lane.b32.xlu0 %v288, 127
        %v326 = vpop.permute.xlu0 %325
        %327 = vrot.lane.b32.xlu0 %v287, 127
        %v328 = vpop.permute.xlu0 %327
        %329 = vrot.lane.b32.xlu0 %v290, 127
        %v330 = vpop.permute.xlu0 %329
        %vm331 = vmand %vm305, %vm234
        %vm332 = vmand %vm306, %vm234
        %vm333 = vmand %vm331, %vm237
        %vm334 = vmand %vm332, %vm237
        %v335 = vsel %vm333, %v324, 0.0
        %v336 = vsel %vm334, %v326, 0.0
        %v337 = vsel %vm333, %v328, 0.0
        %v338 = vsel %vm334, %v330, 0.0
        %s339 = sld [smem:[#allocation4]]
        %v340 = vstv %s339
        %v341 = vmul.f32 %v340, %v211
        %v342 = vmul.f32 %v340, %v212
        %v343 = vadd.f32 %v341, 0.0
        %v344 = vadd.f32 %v342, 0.0
        %s345 = sld [smem:[#allocation4 + $0x8]]
        %v346 = vstv %s345
        %v347 = vmul.f32 %v346, %v213
        %v348 = vmul.f32 %v346, %v214
        %v349 = vadd.f32 %v343, %v347
        %v350 = vadd.f32 %v344, %v348
        %s351 = sld [smem:[#allocation4 + $0x10]]
        %v352 = vstv %s351
        %v353 = vmul.f32 %v352, %v221
        %v354 = vmul.f32 %v352, %v222
        %v355 = vadd.f32 %v349, %v353
        %v356 = vadd.f32 %v350, %v354
        %s357 = sld [smem:[#allocation4 + $0x18]]
        %v358 = vstv %s357
        %v359 = vmul.f32 %v358, %v223
        %v360 = vmul.f32 %v358, %v224
        %v361 = vadd.f32 %v355, %v359
        %v362 = vadd.f32 %v356, %v360
        %s363 = sld [smem:[#allocation4 + $0x20]]
        %v364 = vstv %s363
        %v365 = vmul.f32 %v364, %v240
        %v366 = vmul.f32 %v364, %v241
        %v367 = vadd.f32 %v361, %v365
        %v368 = vadd.f32 %v362, %v366
        %s369 = sld [smem:[#allocation4 + $0x28]]
        %v370 = vstv %s369
        %v371 = vmul.f32 %v370, %v242
        %v372 = vmul.f32 %v370, %v243
        %v373 = vadd.f32 %v367, %v371
        %v374 = vadd.f32 %v368, %v372
        %s375 = sld [smem:[#allocation4 + $0x30]]
        %v376 = vstv %s375
        %v377 = vmul.f32 %v376, %v262
        %v378 = vmul.f32 %v376, %v263
        %v379 = vadd.f32 %v373, %v377
        %v380 = vadd.f32 %v374, %v378
        %s381 = sld [smem:[#allocation4 + $0x38]]
        %v382 = vstv %s381
        %v383 = vmul.f32 %v382, %v264
        %v384 = vmul.f32 %v382, %v265
        %v385 = vadd.f32 %v379, %v383
        %v386 = vadd.f32 %v380, %v384
        %s387 = sld [smem:[#allocation4 + $0x40]]
        %v388 = vstv %s387
        %v389 = vmul.f32 %v388, %v170
        %v390 = vmul.f32 %v388, %v171
        %v391 = vadd.f32 %v385, %v389
        %v392 = vadd.f32 %v386, %v390
        %s393 = sld [smem:[#allocation4 + $0x48]]
        %v394 = vstv %s393
        %v395 = vmul.f32 %v394, %v172
        %v396 = vmul.f32 %v394, %v173
        %v397 = vadd.f32 %v391, %v395
        %v398 = vadd.f32 %v392, %v396
        %s399 = sld [smem:[#allocation4 + $0x50]]
        %v400 = vstv %s399
        %v401 = vmul.f32 %v400, %v278
        %v402 = vmul.f32 %v400, %v279
        %v403 = vadd.f32 %v397, %v401
        %v404 = vadd.f32 %v398, %v402
        %s405 = sld [smem:[#allocation4 + $0x58]]
        %v406 = vstv %s405
        %v407 = vmul.f32 %v406, %v280
        %v408 = vmul.f32 %v406, %v281
        %v409 = vadd.f32 %v403, %v407
        %v410 = vadd.f32 %v404, %v408
        %s411 = sld [smem:[#allocation4 + $0x60]]
        %v412 = vstv %s411
        %v413 = vmul.f32 %v412, %v311
        %v414 = vmul.f32 %v412, %v312
        %v415 = vadd.f32 %v409, %v413
        %v416 = vadd.f32 %v410, %v414
        %s417 = sld [smem:[#allocation4 + $0x68]]
        %v418 = vstv %s417
        %v419 = vmul.f32 %v418, %v313
        %v420 = vmul.f32 %v418, %v314
        %v421 = vadd.f32 %v415, %v419
        %v422 = vadd.f32 %v416, %v420
        %s423 = sld [smem:[#allocation4 + $0x70]]
        %v424 = vstv %s423
        %v425 = vmul.f32 %v424, %v319
        %v426 = vmul.f32 %v424, %v320
        %v427 = vadd.f32 %v421, %v425
        %v428 = vadd.f32 %v422, %v426
        %s429 = sld [smem:[#allocation4 + $0x78]]
        %v430 = vstv %s429
        %v431 = vmul.f32 %v430, %v321
        %v432 = vmul.f32 %v430, %v322
        %v433 = vadd.f32 %v427, %v431
        %v434 = vadd.f32 %v428, %v432
        %s435 = sld [smem:[#allocation4 + $0x80]]
        %v436 = vstv %s435
        %v437 = vmul.f32 %v436, %v335
        %v438 = vmul.f32 %v436, %v336
        %v439 = vadd.f32 %v433, %v437
        %v440 = vadd.f32 %v434, %v438
        %s441 = sld [smem:[#allocation4 + $0x88]]
        %v442 = vstv %s441
        %v443 = vmul.f32 %v442, %v337
        %v444 = vmul.f32 %v442, %v338
        %v445 = vadd.f32 %v439, %v443
        %v446 = vadd.f32 %v440, %v444
        %s447 = sld [smem:[#allocation5]]
        %v448 = vstv %s447
        %v449 = vadd.f32 %v445, %v448
        %v450 = vadd.f32 %v446, %v448
        %s451 = sld [smem:[#allocation4 + $0x1]]
        %v452 = vstv %s451
        %v453 = vmul.f32 %v452, %v211
        %v454 = vmul.f32 %v452, %v212
        %v455 = vadd.f32 %v453, 0.0
        %v456 = vadd.f32 %v454, 0.0
        %s457 = sld [smem:[#allocation4 + $0x9]]
        %v458 = vstv %s457
        %v459 = vmul.f32 %v458, %v213
        %v460 = vmul.f32 %v458, %v214
        %v461 = vadd.f32 %v455, %v459
        %v462 = vadd.f32 %v456, %v460
        %s463 = sld [smem:[#allocation4 + $0x11]]
        %v464 = vstv %s463
        %v465 = vmul.f32 %v464, %v221
        %v466 = vmul.f32 %v464, %v222
        %v467 = vadd.f32 %v461, %v465
        %v468 = vadd.f32 %v462, %v466
        %s469 = sld [smem:[#allocation4 + $0x19]]
        %v470 = vstv %s469
        %v471 = vmul.f32 %v470, %v223
        %v472 = vmul.f32 %v470, %v224
        %v473 = vadd.f32 %v467, %v471
        %v474 = vadd.f32 %v468, %v472
        %s475 = sld [smem:[#allocation4 + $0x21]]
        %v476 = vstv %s475
        %v477 = vmul.f32 %v476, %v240
        %v478 = vmul.f32 %v476, %v241
        %v479 = vadd.f32 %v473, %v477
        %v480 = vadd.f32 %v474, %v478
        %s481 = sld [smem:[#allocation4 + $0x29]]
        %v482 = vstv %s481
        %v483 = vmul.f32 %v482, %v242
        %v484 = vmul.f32 %v482, %v243
        %v485 = vadd.f32 %v479, %v483
        %v486 = vadd.f32 %v480, %v484
        %s487 = sld [smem:[#allocation4 + $0x31]]
        %v488 = vstv %s487
        %v489 = vmul.f32 %v488, %v262
        %v490 = vmul.f32 %v488, %v263
        %v491 = vadd.f32 %v485, %v489
        %v492 = vadd.f32 %v486, %v490
        %s493 = sld [smem:[#allocation4 + $0x39]]
        %v494 = vstv %s493
        %v495 = vmul.f32 %v494, %v264
        %v496 = vmul.f32 %v494, %v265
        %v497 = vadd.f32 %v491, %v495
        %v498 = vadd.f32 %v492, %v496
        %s499 = sld [smem:[#allocation4 + $0x41]]
        %v500 = vstv %s499
        %v501 = vmul.f32 %v500, %v170
        %v502 = vmul.f32 %v500, %v171
        %v503 = vadd.f32 %v497, %v501
        %v504 = vadd.f32 %v498, %v502
        %s505 = sld [smem:[#allocation4 + $0x49]]
        %v506 = vstv %s505
        %v507 = vmul.f32 %v506, %v172
        %v508 = vmul.f32 %v506, %v173
        %v509 = vadd.f32 %v503, %v507
        %v510 = vadd.f32 %v504, %v508
        %s511 = sld [smem:[#allocation4 + $0x51]]
        %v512 = vstv %s511
        %v513 = vmul.f32 %v512, %v278
        %v514 = vmul.f32 %v512, %v279
        %v515 = vadd.f32 %v509, %v513
        %v516 = vadd.f32 %v510, %v514
        %s517 = sld [smem:[#allocation4 + $0x59]]
        %v518 = vstv %s517
        %v519 = vmul.f32 %v518, %v280
        %v520 = vmul.f32 %v518, %v281
        %v521 = vadd.f32 %v515, %v519
        %v522 = vadd.f32 %v516, %v520
        %s523 = sld [smem:[#allocation4 + $0x61]]
        %v524 = vstv %s523
        %v525 = vmul.f32 %v524, %v311
        %v526 = vmul.f32 %v524, %v312
        %v527 = vadd.f32 %v521, %v525
        %v528 = vadd.f32 %v522, %v526
        %s529 = sld [smem:[#allocation4 + $0x69]]
        %v530 = vstv %s529
        %v531 = vmul.f32 %v530, %v313
        %v532 = vmul.f32 %v530, %v314
        %v533 = vadd.f32 %v527, %v531
        %v534 = vadd.f32 %v528, %v532
        %s535 = sld [smem:[#allocation4 + $0x71]]
        %v536 = vstv %s535
        %v537 = vmul.f32 %v536, %v319
        %v538 = vmul.f32 %v536, %v320
        %v539 = vadd.f32 %v533, %v537
        %v540 = vadd.f32 %v534, %v538
        %s541 = sld [smem:[#allocation4 + $0x79]]
        %v542 = vstv %s541
        %v543 = vmul.f32 %v542, %v321
        %v544 = vmul.f32 %v542, %v322
        %v545 = vadd.f32 %v539, %v543
        %v546 = vadd.f32 %v540, %v544
        %s547 = sld [smem:[#allocation4 + $0x81]]
        %v548 = vstv %s547
        %v549 = vmul.f32 %v548, %v335
        %v550 = vmul.f32 %v548, %v336
        %v551 = vadd.f32 %v545, %v549
        %v552 = vadd.f32 %v546, %v550
        %s553 = sld [smem:[#allocation4 + $0x89]]
        %v554 = vstv %s553
        %v555 = vmul.f32 %v554, %v337
        %v556 = vmul.f32 %v554, %v338
        %v557 = vadd.f32 %v551, %v555
        %v558 = vadd.f32 %v552, %v556
        %s559 = sld [smem:[#allocation5 + $0x1]]
        %v560 = vstv %s559
        %v561 = vadd.f32 %v557, %v560
        %v562 = vadd.f32 %v558, %v560
        %s563 = sld [smem:[#allocation4 + $0x2]]
        %v564 = vstv %s563
        %v565 = vmul.f32 %v564, %v211
        %v566 = vmul.f32 %v564, %v212
        %v567 = vadd.f32 %v565, 0.0
        %v568 = vadd.f32 %v566, 0.0
        %s569 = sld [smem:[#allocation4 + $0xa]]
        %v570 = vstv %s569
        %v571 = vmul.f32 %v570, %v213
        %v572 = vmul.f32 %v570, %v214
        %v573 = vadd.f32 %v567, %v571
        %v574 = vadd.f32 %v568, %v572
        %s575 = sld [smem:[#allocation4 + $0x12]]
        %v576 = vstv %s575
        %v577 = vmul.f32 %v576, %v221
        %v578 = vmul.f32 %v576, %v222
        %v579 = vadd.f32 %v573, %v577
        %v580 = vadd.f32 %v574, %v578
        %s581 = sld [smem:[#allocation4 + $0x1a]]
        %v582 = vstv %s581
        %v583 = vmul.f32 %v582, %v223
        %v584 = vmul.f32 %v582, %v224
        %v585 = vadd.f32 %v579, %v583
        %v586 = vadd.f32 %v580, %v584
        %s587 = sld [smem:[#allocation4 + $0x22]]
        %v588 = vstv %s587
        %v589 = vmul.f32 %v588, %v240
        %v590 = vmul.f32 %v588, %v241
        %v591 = vadd.f32 %v585, %v589
        %v592 = vadd.f32 %v586, %v590
        %s593 = sld [smem:[#allocation4 + $0x2a]]
        %v594 = vstv %s593
        %v595 = vmul.f32 %v594, %v242
        %v596 = vmul.f32 %v594, %v243
        %v597 = vadd.f32 %v591, %v595
        %v598 = vadd.f32 %v592, %v596
        %s599 = sld [smem:[#allocation4 + $0x32]]
        %v600 = vstv %s599
        %v601 = vmul.f32 %v600, %v262
        %v602 = vmul.f32 %v600, %v263
        %v603 = vadd.f32 %v597, %v601
        %v604 = vadd.f32 %v598, %v602
        %s605 = sld [smem:[#allocation4 + $0x3a]]
        %v606 = vstv %s605
        %v607 = vmul.f32 %v606, %v264
        %v608 = vmul.f32 %v606, %v265
        %v609 = vadd.f32 %v603, %v607
        %v610 = vadd.f32 %v604, %v608
        %s611 = sld [smem:[#allocation4 + $0x42]]
        %v612 = vstv %s611
        %v613 = vmul.f32 %v612, %v170
        %v614 = vmul.f32 %v612, %v171
        %v615 = vadd.f32 %v609, %v613
        %v616 = vadd.f32 %v610, %v614
        %s617 = sld [smem:[#allocation4 + $0x4a]]
        %v618 = vstv %s617
        %v619 = vmul.f32 %v618, %v172
        %v620 = vmul.f32 %v618, %v173
        %v621 = vadd.f32 %v615, %v619
        %v622 = vadd.f32 %v616, %v620
        %s623 = sld [smem:[#allocation4 + $0x52]]
        %v624 = vstv %s623
        %v625 = vmul.f32 %v624, %v278
        %v626 = vmul.f32 %v624, %v279
        %v627 = vadd.f32 %v621, %v625
        %v628 = vadd.f32 %v622, %v626
        %s629 = sld [smem:[#allocation4 + $0x5a]]
        %v630 = vstv %s629
        %v631 = vmul.f32 %v630, %v280
        %v632 = vmul.f32 %v630, %v281
        %v633 = vadd.f32 %v627, %v631
        %v634 = vadd.f32 %v628, %v632
        %s635 = sld [smem:[#allocation4 + $0x62]]
        %v636 = vstv %s635
        %v637 = vmul.f32 %v636, %v311
        %v638 = vmul.f32 %v636, %v312
        %v639 = vadd.f32 %v633, %v637
        %v640 = vadd.f32 %v634, %v638
        %s641 = sld [smem:[#allocation4 + $0x6a]]
        %v642 = vstv %s641
        %v643 = vmul.f32 %v642, %v313
        %v644 = vmul.f32 %v642, %v314
        %v645 = vadd.f32 %v639, %v643
        %v646 = vadd.f32 %v640, %v644
        %s647 = sld [smem:[#allocation4 + $0x72]]
        %v648 = vstv %s647
        %v649 = vmul.f32 %v648, %v319
        %v650 = vmul.f32 %v648, %v320
        %v651 = vadd.f32 %v645, %v649
        %v652 = vadd.f32 %v646, %v650
        %s653 = sld [smem:[#allocation4 + $0x7a]]
        %v654 = vstv %s653
        %v655 = vmul.f32 %v654, %v321
        %v656 = vmul.f32 %v654, %v322
        %v657 = vadd.f32 %v651, %v655
        %v658 = vadd.f32 %v652, %v656
        %s659 = sld [smem:[#allocation4 + $0x82]]
        %v660 = vstv %s659
        %v661 = vmul.f32 %v660, %v335
        %v662 = vmul.f32 %v660, %v336
        %v663 = vadd.f32 %v657, %v661
        %v664 = vadd.f32 %v658, %v662
        %s665 = sld [smem:[#allocation4 + $0x8a]]
        %v666 = vstv %s665
        %v667 = vmul.f32 %v666, %v337
        %v668 = vmul.f32 %v666, %v338
        %v669 = vadd.f32 %v663, %v667
        %v670 = vadd.f32 %v664, %v668
        %s671 = sld [smem:[#allocation5 + $0x2]]
        %v672 = vstv %s671
        %v673 = vadd.f32 %v669, %v672
        %v674 = vadd.f32 %v670, %v672
        %s675 = sld [smem:[#allocation4 + $0x3]]
        %v676 = vstv %s675
        %v677 = vmul.f32 %v676, %v211
        %v678 = vmul.f32 %v676, %v212
        %v679 = vadd.f32 %v677, 0.0
        %v680 = vadd.f32 %v678, 0.0
        %s681 = sld [smem:[#allocation4 + $0xb]]
        %v682 = vstv %s681
        %v683 = vmul.f32 %v682, %v213
        %v684 = vmul.f32 %v682, %v214
        %v685 = vadd.f32 %v679, %v683
        %v686 = vadd.f32 %v680, %v684
        %s687 = sld [smem:[#allocation4 + $0x13]]
        %v688 = vstv %s687
        %v689 = vmul.f32 %v688, %v221
        %v690 = vmul.f32 %v688, %v222
        %v691 = vadd.f32 %v685, %v689
        %v692 = vadd.f32 %v686, %v690
        %s693 = sld [smem:[#allocation4 + $0x1b]]
        %v694 = vstv %s693
        %v695 = vmul.f32 %v694, %v223
        %v696 = vmul.f32 %v694, %v224
        %v697 = vadd.f32 %v691, %v695
        %v698 = vadd.f32 %v692, %v696
        %s699 = sld [smem:[#allocation4 + $0x23]]
        %v700 = vstv %s699
        %v701 = vmul.f32 %v700, %v240
        %v702 = vmul.f32 %v700, %v241
        %v703 = vadd.f32 %v697, %v701
        %v704 = vadd.f32 %v698, %v702
        %s705 = sld [smem:[#allocation4 + $0x2b]]
        %v706 = vstv %s705
        %v707 = vmul.f32 %v706, %v242
        %v708 = vmul.f32 %v706, %v243
        %v709 = vadd.f32 %v703, %v707
        %v710 = vadd.f32 %v704, %v708
        %s711 = sld [smem:[#allocation4 + $0x33]]
        %v712 = vstv %s711
        %v713 = vmul.f32 %v712, %v262
        %v714 = vmul.f32 %v712, %v263
        %v715 = vadd.f32 %v709, %v713
        %v716 = vadd.f32 %v710, %v714
        %s717 = sld [smem:[#allocation4 + $0x3b]]
        %v718 = vstv %s717
        %v719 = vmul.f32 %v718, %v264
        %v720 = vmul.f32 %v718, %v265
        %v721 = vadd.f32 %v715, %v719
        %v722 = vadd.f32 %v716, %v720
        %s723 = sld [smem:[#allocation4 + $0x43]]
        %v724 = vstv %s723
        %v725 = vmul.f32 %v724, %v170
        %v726 = vmul.f32 %v724, %v171
        %v727 = vadd.f32 %v721, %v725
        %v728 = vadd.f32 %v722, %v726
        %s729 = sld [smem:[#allocation4 + $0x4b]]
        %v730 = vstv %s729
        %v731 = vmul.f32 %v730, %v172
        %v732 = vmul.f32 %v730, %v173
        %v733 = vadd.f32 %v727, %v731
        %v734 = vadd.f32 %v728, %v732
        %s735 = sld [smem:[#allocation4 + $0x53]]
        %v736 = vstv %s735
        %v737 = vmul.f32 %v736, %v278
        %v738 = vmul.f32 %v736, %v279
        %v739 = vadd.f32 %v733, %v737
        %v740 = vadd.f32 %v734, %v738
        %s741 = sld [smem:[#allocation4 + $0x5b]]
        %v742 = vstv %s741
        %v743 = vmul.f32 %v742, %v280
        %v744 = vmul.f32 %v742, %v281
        %v745 = vadd.f32 %v739, %v743
        %v746 = vadd.f32 %v740, %v744
        %s747 = sld [smem:[#allocation4 + $0x63]]
        %v748 = vstv %s747
        %v749 = vmul.f32 %v748, %v311
        %v750 = vmul.f32 %v748, %v312
        %v751 = vadd.f32 %v745, %v749
        %v752 = vadd.f32 %v746, %v750
        %s753 = sld [smem:[#allocation4 + $0x6b]]
        %v754 = vstv %s753
        %v755 = vmul.f32 %v754, %v313
        %v756 = vmul.f32 %v754, %v314
        %v757 = vadd.f32 %v751, %v755
        %v758 = vadd.f32 %v752, %v756
        %s759 = sld [smem:[#allocation4 + $0x73]]
        %v760 = vstv %s759
        %v761 = vmul.f32 %v760, %v319
        %v762 = vmul.f32 %v760, %v320
        %v763 = vadd.f32 %v757, %v761
        %v764 = vadd.f32 %v758, %v762
        %s765 = sld [smem:[#allocation4 + $0x7b]]
        %v766 = vstv %s765
        %v767 = vmul.f32 %v766, %v321
        %v768 = vmul.f32 %v766, %v322
        %v769 = vadd.f32 %v763, %v767
        %v770 = vadd.f32 %v764, %v768
        %s771 = sld [smem:[#allocation4 + $0x83]]
        %v772 = vstv %s771
        %v773 = vmul.f32 %v772, %v335
        %v774 = vmul.f32 %v772, %v336
        %v775 = vadd.f32 %v769, %v773
        %v776 = vadd.f32 %v770, %v774
        %s777 = sld [smem:[#allocation4 + $0x8b]]
        %v778 = vstv %s777
        %v779 = vmul.f32 %v778, %v337
        %v780 = vmul.f32 %v778, %v338
        %v781 = vadd.f32 %v775, %v779
        %v782 = vadd.f32 %v776, %v780
        %s783 = sld [smem:[#allocation5 + $0x3]]
        %v784 = vstv %s783
        %v785 = vadd.f32 %v781, %v784
        %v786 = vadd.f32 %v782, %v784
        %s787 = sld [smem:[#allocation4 + $0x4]]
        %v788 = vstv %s787
        %v789 = vmul.f32 %v788, %v211
        %v790 = vmul.f32 %v788, %v212
        %v791 = vadd.f32 %v789, 0.0
        %v792 = vadd.f32 %v790, 0.0
        %s793 = sld [smem:[#allocation4 + $0xc]]
        %v794 = vstv %s793
        %v795 = vmul.f32 %v794, %v213
        %v796 = vmul.f32 %v794, %v214
        %v797 = vadd.f32 %v791, %v795
        %v798 = vadd.f32 %v792, %v796
        %s799 = sld [smem:[#allocation4 + $0x14]]
        %v800 = vstv %s799
        %v801 = vmul.f32 %v800, %v221
        %v802 = vmul.f32 %v800, %v222
        %v803 = vadd.f32 %v797, %v801
        %v804 = vadd.f32 %v798, %v802
        %s805 = sld [smem:[#allocation4 + $0x1c]]
        %v806 = vstv %s805
        %v807 = vmul.f32 %v806, %v223
        %v808 = vmul.f32 %v806, %v224
        %v809 = vadd.f32 %v803, %v807
        %v810 = vadd.f32 %v804, %v808
        %s811 = sld [smem:[#allocation4 + $0x24]]
        %v812 = vstv %s811
        %v813 = vmul.f32 %v812, %v240
        %v814 = vmul.f32 %v812, %v241
        %v815 = vadd.f32 %v809, %v813
        %v816 = vadd.f32 %v810, %v814
        %s817 = sld [smem:[#allocation4 + $0x2c]]
        %v818 = vstv %s817
        %v819 = vmul.f32 %v818, %v242
        %v820 = vmul.f32 %v818, %v243
        %v821 = vadd.f32 %v815, %v819
        %v822 = vadd.f32 %v816, %v820
        %s823 = sld [smem:[#allocation4 + $0x34]]
        %v824 = vstv %s823
        %v825 = vmul.f32 %v824, %v262
        %v826 = vmul.f32 %v824, %v263
        %v827 = vadd.f32 %v821, %v825
        %v828 = vadd.f32 %v822, %v826
        %s829 = sld [smem:[#allocation4 + $0x3c]]
        %v830 = vstv %s829
        %v831 = vmul.f32 %v830, %v264
        %v832 = vmul.f32 %v830, %v265
        %v833 = vadd.f32 %v827, %v831
        %v834 = vadd.f32 %v828, %v832
        %s835 = sld [smem:[#allocation4 + $0x44]]
        %v836 = vstv %s835
        %v837 = vmul.f32 %v836, %v170
        %v838 = vmul.f32 %v836, %v171
        %v839 = vadd.f32 %v833, %v837
        %v840 = vadd.f32 %v834, %v838
        %s841 = sld [smem:[#allocation4 + $0x4c]]
        %v842 = vstv %s841
        %v843 = vmul.f32 %v842, %v172
        %v844 = vmul.f32 %v842, %v173
        %v845 = vadd.f32 %v839, %v843
        %v846 = vadd.f32 %v840, %v844
        %s847 = sld [smem:[#allocation4 + $0x54]]
        %v848 = vstv %s847
        %v849 = vmul.f32 %v848, %v278
        %v850 = vmul.f32 %v848, %v279
        %v851 = vadd.f32 %v845, %v849
        %v852 = vadd.f32 %v846, %v850
        %s853 = sld [smem:[#allocation4 + $0x5c]]
        %v854 = vstv %s853
        %v855 = vmul.f32 %v854, %v280
        %v856 = vmul.f32 %v854, %v281
        %v857 = vadd.f32 %v851, %v855
        %v858 = vadd.f32 %v852, %v856
        %s859 = sld [smem:[#allocation4 + $0x64]]
        %v860 = vstv %s859
        %v861 = vmul.f32 %v860, %v311
        %v862 = vmul.f32 %v860, %v312
        %v863 = vadd.f32 %v857, %v861
        %v864 = vadd.f32 %v858, %v862
        %s865 = sld [smem:[#allocation4 + $0x6c]]
        %v866 = vstv %s865
        %v867 = vmul.f32 %v866, %v313
        %v868 = vmul.f32 %v866, %v314
        %v869 = vadd.f32 %v863, %v867
        %v870 = vadd.f32 %v864, %v868
        %s871 = sld [smem:[#allocation4 + $0x74]]
        %v872 = vstv %s871
        %v873 = vmul.f32 %v872, %v319
        %v874 = vmul.f32 %v872, %v320
        %v875 = vadd.f32 %v869, %v873
        %v876 = vadd.f32 %v870, %v874
        %s877 = sld [smem:[#allocation4 + $0x7c]]
        %v878 = vstv %s877
        %v879 = vmul.f32 %v878, %v321
        %v880 = vmul.f32 %v878, %v322
        %v881 = vadd.f32 %v875, %v879
        %v882 = vadd.f32 %v876, %v880
        %s883 = sld [smem:[#allocation4 + $0x84]]
        %v884 = vstv %s883
        %v885 = vmul.f32 %v884, %v335
        %v886 = vmul.f32 %v884, %v336
        %v887 = vadd.f32 %v881, %v885
        %v888 = vadd.f32 %v882, %v886
        %s889 = sld [smem:[#allocation4 + $0x8c]]
        %v890 = vstv %s889
        %v891 = vmul.f32 %v890, %v337
        %v892 = vmul.f32 %v890, %v338
        %v893 = vadd.f32 %v887, %v891
        %v894 = vadd.f32 %v888, %v892
        %s895 = sld [smem:[#allocation5 + $0x4]]
        %v896 = vstv %s895
        %v897 = vadd.f32 %v893, %v896
        %v898 = vadd.f32 %v894, %v896
        %s899 = sld [smem:[#allocation4 + $0x5]]
        %v900 = vstv %s899
        %v901 = vmul.f32 %v900, %v211
        %v902 = vmul.f32 %v900, %v212
        %v903 = vadd.f32 %v901, 0.0
        %v904 = vadd.f32 %v902, 0.0
        %s905 = sld [smem:[#allocation4 + $0xd]]
        %v906 = vstv %s905
        %v907 = vmul.f32 %v906, %v213
        %v908 = vmul.f32 %v906, %v214
        %v909 = vadd.f32 %v903, %v907
        %v910 = vadd.f32 %v904, %v908
        %s911 = sld [smem:[#allocation4 + $0x15]]
        %v912 = vstv %s911
        %v913 = vmul.f32 %v912, %v221
        %v914 = vmul.f32 %v912, %v222
        %v915 = vadd.f32 %v909, %v913
        %v916 = vadd.f32 %v910, %v914
        %s917 = sld [smem:[#allocation4 + $0x1d]]
        %v918 = vstv %s917
        %v919 = vmul.f32 %v918, %v223
        %v920 = vmul.f32 %v918, %v224
        %v921 = vadd.f32 %v915, %v919
        %v922 = vadd.f32 %v916, %v920
        %s923 = sld [smem:[#allocation4 + $0x25]]
        %v924 = vstv %s923
        %v925 = vmul.f32 %v924, %v240
        %v926 = vmul.f32 %v924, %v241
        %v927 = vadd.f32 %v921, %v925
        %v928 = vadd.f32 %v922, %v926
        %s929 = sld [smem:[#allocation4 + $0x2d]]
        %v930 = vstv %s929
        %v931 = vmul.f32 %v930, %v242
        %v932 = vmul.f32 %v930, %v243
        %v933 = vadd.f32 %v927, %v931
        %v934 = vadd.f32 %v928, %v932
        %s935 = sld [smem:[#allocation4 + $0x35]]
        %v936 = vstv %s935
        %v937 = vmul.f32 %v936, %v262
        %v938 = vmul.f32 %v936, %v263
        %v939 = vadd.f32 %v933, %v937
        %v940 = vadd.f32 %v934, %v938
        %s941 = sld [smem:[#allocation4 + $0x3d]]
        %v942 = vstv %s941
        %v943 = vmul.f32 %v942, %v264
        %v944 = vmul.f32 %v942, %v265
        %v945 = vadd.f32 %v939, %v943
        %v946 = vadd.f32 %v940, %v944
        %s947 = sld [smem:[#allocation4 + $0x45]]
        %v948 = vstv %s947
        %v949 = vmul.f32 %v948, %v170
        %v950 = vmul.f32 %v948, %v171
        %v951 = vadd.f32 %v945, %v949
        %v952 = vadd.f32 %v946, %v950
        %s953 = sld [smem:[#allocation4 + $0x4d]]
        %v954 = vstv %s953
        %v955 = vmul.f32 %v954, %v172
        %v956 = vmul.f32 %v954, %v173
        %v957 = vadd.f32 %v951, %v955
        %v958 = vadd.f32 %v952, %v956
        %s959 = sld [smem:[#allocation4 + $0x55]]
        %v960 = vstv %s959
        %v961 = vmul.f32 %v960, %v278
        %v962 = vmul.f32 %v960, %v279
        %v963 = vadd.f32 %v957, %v961
        %v964 = vadd.f32 %v958, %v962
        %s965 = sld [smem:[#allocation4 + $0x5d]]
        %v966 = vstv %s965
        %v967 = vmul.f32 %v966, %v280
        %v968 = vmul.f32 %v966, %v281
        %v969 = vadd.f32 %v963, %v967
        %v970 = vadd.f32 %v964, %v968
        %s971 = sld [smem:[#allocation4 + $0x65]]
        %v972 = vstv %s971
        %v973 = vmul.f32 %v972, %v311
        %v974 = vmul.f32 %v972, %v312
        %v975 = vadd.f32 %v969, %v973
        %v976 = vadd.f32 %v970, %v974
        %s977 = sld [smem:[#allocation4 + $0x6d]]
        %v978 = vstv %s977
        %v979 = vmul.f32 %v978, %v313
        %v980 = vmul.f32 %v978, %v314
        %v981 = vadd.f32 %v975, %v979
        %v982 = vadd.f32 %v976, %v980
        %s983 = sld [smem:[#allocation4 + $0x75]]
        %v984 = vstv %s983
        %v985 = vmul.f32 %v984, %v319
        %v986 = vmul.f32 %v984, %v320
        %v987 = vadd.f32 %v981, %v985
        %v988 = vadd.f32 %v982, %v986
        %s989 = sld [smem:[#allocation4 + $0x7d]]
        %v990 = vstv %s989
        %v991 = vmul.f32 %v990, %v321
        %v992 = vmul.f32 %v990, %v322
        %v993 = vadd.f32 %v987, %v991
        %v994 = vadd.f32 %v988, %v992
        %s995 = sld [smem:[#allocation4 + $0x85]]
        %v996 = vstv %s995
        %v997 = vmul.f32 %v996, %v335
        %v998 = vmul.f32 %v996, %v336
        %v999 = vadd.f32 %v993, %v997
        %v1000 = vadd.f32 %v994, %v998
        %s1001 = sld [smem:[#allocation4 + $0x8d]]
        %v1002 = vstv %s1001
        %v1003 = vmul.f32 %v1002, %v337
        %v1004 = vmul.f32 %v1002, %v338
        %v1005 = vadd.f32 %v999, %v1003
        %v1006 = vadd.f32 %v1000, %v1004
        %s1007 = sld [smem:[#allocation5 + $0x5]]
        %v1008 = vstv %s1007
        %v1009 = vadd.f32 %v1005, %v1008
        %v1010 = vadd.f32 %v1006, %v1008
        %s1011 = sld [smem:[#allocation4 + $0x6]]
        %v1012 = vstv %s1011
        %v1013 = vmul.f32 %v1012, %v211
        %v1014 = vmul.f32 %v1012, %v212
        %v1015 = vadd.f32 %v1013, 0.0
        %v1016 = vadd.f32 %v1014, 0.0
        %s1017 = sld [smem:[#allocation4 + $0xe]]
        %v1018 = vstv %s1017
        %v1019 = vmul.f32 %v1018, %v213
        %v1020 = vmul.f32 %v1018, %v214
        %v1021 = vadd.f32 %v1015, %v1019
        %v1022 = vadd.f32 %v1016, %v1020
        %s1023 = sld [smem:[#allocation4 + $0x16]]
        %v1024 = vstv %s1023
        %v1025 = vmul.f32 %v1024, %v221
        %v1026 = vmul.f32 %v1024, %v222
        %v1027 = vadd.f32 %v1021, %v1025
        %v1028 = vadd.f32 %v1022, %v1026
        %s1029 = sld [smem:[#allocation4 + $0x1e]]
        %v1030 = vstv %s1029
        %v1031 = vmul.f32 %v1030, %v223
        %v1032 = vmul.f32 %v1030, %v224
        %v1033 = vadd.f32 %v1027, %v1031
        %v1034 = vadd.f32 %v1028, %v1032
        %s1035 = sld [smem:[#allocation4 + $0x26]]
        %v1036 = vstv %s1035
        %v1037 = vmul.f32 %v1036, %v240
        %v1038 = vmul.f32 %v1036, %v241
        %v1039 = vadd.f32 %v1033, %v1037
        %v1040 = vadd.f32 %v1034, %v1038
        %s1041 = sld [smem:[#allocation4 + $0x2e]]
        %v1042 = vstv %s1041
        %v1043 = vmul.f32 %v1042, %v242
        %v1044 = vmul.f32 %v1042, %v243
        %v1045 = vadd.f32 %v1039, %v1043
        %v1046 = vadd.f32 %v1040, %v1044
        %s1047 = sld [smem:[#allocation4 + $0x36]]
        %v1048 = vstv %s1047
        %v1049 = vmul.f32 %v1048, %v262
        %v1050 = vmul.f32 %v1048, %v263
        %v1051 = vadd.f32 %v1045, %v1049
        %v1052 = vadd.f32 %v1046, %v1050
        %s1053 = sld [smem:[#allocation4 + $0x3e]]
        %v1054 = vstv %s1053
        %v1055 = vmul.f32 %v1054, %v264
        %v1056 = vmul.f32 %v1054, %v265
        %v1057 = vadd.f32 %v1051, %v1055
        %v1058 = vadd.f32 %v1052, %v1056
        %s1059 = sld [smem:[#allocation4 + $0x46]]
        %v1060 = vstv %s1059
        %v1061 = vmul.f32 %v1060, %v170
        %v1062 = vmul.f32 %v1060, %v171
        %v1063 = vadd.f32 %v1057, %v1061
        %v1064 = vadd.f32 %v1058, %v1062
        %s1065 = sld [smem:[#allocation4 + $0x4e]]
        %v1066 = vstv %s1065
        %v1067 = vmul.f32 %v1066, %v172
        %v1068 = vmul.f32 %v1066, %v173
        %v1069 = vadd.f32 %v1063, %v1067
        %v1070 = vadd.f32 %v1064, %v1068
        %s1071 = sld [smem:[#allocation4 + $0x56]]
        %v1072 = vstv %s1071
        %v1073 = vmul.f32 %v1072, %v278
        %v1074 = vmul.f32 %v1072, %v279
        %v1075 = vadd.f32 %v1069, %v1073
        %v1076 = vadd.f32 %v1070, %v1074
        %s1077 = sld [smem:[#allocation4 + $0x5e]]
        %v1078 = vstv %s1077
        %v1079 = vmul.f32 %v1078, %v280
        %v1080 = vmul.f32 %v1078, %v281
        %v1081 = vadd.f32 %v1075, %v1079
        %v1082 = vadd.f32 %v1076, %v1080
        %s1083 = sld [smem:[#allocation4 + $0x66]]
        %v1084 = vstv %s1083
        %v1085 = vmul.f32 %v1084, %v311
        %v1086 = vmul.f32 %v1084, %v312
        %v1087 = vadd.f32 %v1081, %v1085
        %v1088 = vadd.f32 %v1082, %v1086
        %s1089 = sld [smem:[#allocation4 + $0x6e]]
        %v1090 = vstv %s1089
        %v1091 = vmul.f32 %v1090, %v313
        %v1092 = vmul.f32 %v1090, %v314
        %v1093 = vadd.f32 %v1087, %v1091
        %v1094 = vadd.f32 %v1088, %v1092
        %s1095 = sld [smem:[#allocation4 + $0x76]]
        %v1096 = vstv %s1095
        %v1097 = vmul.f32 %v1096, %v319
        %v1098 = vmul.f32 %v1096, %v320
        %v1099 = vadd.f32 %v1093, %v1097
        %v1100 = vadd.f32 %v1094, %v1098
        %s1101 = sld [smem:[#allocation4 + $0x7e]]
        %v1102 = vstv %s1101
        %v1103 = vmul.f32 %v1102, %v321
        %v1104 = vmul.f32 %v1102, %v322
        %v1105 = vadd.f32 %v1099, %v1103
        %v1106 = vadd.f32 %v1100, %v1104
        %s1107 = sld [smem:[#allocation4 + $0x86]]
        %v1108 = vstv %s1107
        %v1109 = vmul.f32 %v1108, %v335
        %v1110 = vmul.f32 %v1108, %v336
        %v1111 = vadd.f32 %v1105, %v1109
        %v1112 = vadd.f32 %v1106, %v1110
        %s1113 = sld [smem:[#allocation4 + $0x8e]]
        %v1114 = vstv %s1113
        %v1115 = vmul.f32 %v1114, %v337
        %v1116 = vmul.f32 %v1114, %v338
        %v1117 = vadd.f32 %v1111, %v1115
        %v1118 = vadd.f32 %v1112, %v1116
        %s1119 = sld [smem:[#allocation5 + $0x6]]
        %v1120 = vstv %s1119
        %v1121 = vadd.f32 %v1117, %v1120
        %v1122 = vadd.f32 %v1118, %v1120
        %s1123 = sld [smem:[#allocation4 + $0x7]]
        %v1124 = vstv %s1123
        %v1125 = vmul.f32 %v1124, %v211
        %v1126 = vmul.f32 %v1124, %v212
        %v1127 = vadd.f32 %v1125, 0.0
        %v1128 = vadd.f32 %v1126, 0.0
        %s1129 = sld [smem:[#allocation4 + $0xf]]
        %v1130 = vstv %s1129
        %v1131 = vmul.f32 %v1130, %v213
        %v1132 = vmul.f32 %v1130, %v214
        %v1133 = vadd.f32 %v1127, %v1131
        %v1134 = vadd.f32 %v1128, %v1132
        %s1135 = sld [smem:[#allocation4 + $0x17]]
        %v1136 = vstv %s1135
        %v1137 = vmul.f32 %v1136, %v221
        %v1138 = vmul.f32 %v1136, %v222
        %v1139 = vadd.f32 %v1133, %v1137
        %v1140 = vadd.f32 %v1134, %v1138
        %s1141 = sld [smem:[#allocation4 + $0x1f]]
        %v1142 = vstv %s1141
        %v1143 = vmul.f32 %v1142, %v223
        %v1144 = vmul.f32 %v1142, %v224
        %v1145 = vadd.f32 %v1139, %v1143
        %v1146 = vadd.f32 %v1140, %v1144
        %s1147 = sld [smem:[#allocation4 + $0x27]]
        %v1148 = vstv %s1147
        %v1149 = vmul.f32 %v1148, %v240
        %v1150 = vmul.f32 %v1148, %v241
        %v1151 = vadd.f32 %v1145, %v1149
        %v1152 = vadd.f32 %v1146, %v1150
        %s1153 = sld [smem:[#allocation4 + $0x2f]]
        %v1154 = vstv %s1153
        %v1155 = vmul.f32 %v1154, %v242
        %v1156 = vmul.f32 %v1154, %v243
        %v1157 = vadd.f32 %v1151, %v1155
        %v1158 = vadd.f32 %v1152, %v1156
        %s1159 = sld [smem:[#allocation4 + $0x37]]
        %v1160 = vstv %s1159
        %v1161 = vmul.f32 %v1160, %v262
        %v1162 = vmul.f32 %v1160, %v263
        %v1163 = vadd.f32 %v1157, %v1161
        %v1164 = vadd.f32 %v1158, %v1162
        %s1165 = sld [smem:[#allocation4 + $0x3f]]
        %v1166 = vstv %s1165
        %v1167 = vmul.f32 %v1166, %v264
        %v1168 = vmul.f32 %v1166, %v265
        %v1169 = vadd.f32 %v1163, %v1167
        %v1170 = vadd.f32 %v1164, %v1168
        %s1171 = sld [smem:[#allocation4 + $0x47]]
        %v1172 = vstv %s1171
        %v1173 = vmul.f32 %v1172, %v170
        %v1174 = vmul.f32 %v1172, %v171
        %v1175 = vadd.f32 %v1169, %v1173
        %v1176 = vadd.f32 %v1170, %v1174
        %s1177 = sld [smem:[#allocation4 + $0x4f]]
        %v1178 = vstv %s1177
        %v1179 = vmul.f32 %v1178, %v172
        %v1180 = vmul.f32 %v1178, %v173
        %v1181 = vadd.f32 %v1175, %v1179
        %v1182 = vadd.f32 %v1176, %v1180
        %s1183 = sld [smem:[#allocation4 + $0x57]]
        %v1184 = vstv %s1183
        %v1185 = vmul.f32 %v1184, %v278
        %v1186 = vmul.f32 %v1184, %v279
        %v1187 = vadd.f32 %v1181, %v1185
        %v1188 = vadd.f32 %v1182, %v1186
        %s1189 = sld [smem:[#allocation4 + $0x5f]]
        %v1190 = vstv %s1189
        %v1191 = vmul.f32 %v1190, %v280
        %v1192 = vmul.f32 %v1190, %v281
        %v1193 = vadd.f32 %v1187, %v1191
        %v1194 = vadd.f32 %v1188, %v1192
        %s1195 = sld [smem:[#allocation4 + $0x67]]
        %v1196 = vstv %s1195
        %v1197 = vmul.f32 %v1196, %v311
        %v1198 = vmul.f32 %v1196, %v312
        %v1199 = vadd.f32 %v1193, %v1197
        %v1200 = vadd.f32 %v1194, %v1198
        %s1201 = sld [smem:[#allocation4 + $0x6f]]
        %v1202 = vstv %s1201
        %v1203 = vmul.f32 %v1202, %v313
        %v1204 = vmul.f32 %v1202, %v314
        %v1205 = vadd.f32 %v1199, %v1203
        %v1206 = vadd.f32 %v1200, %v1204
        %s1207 = sld [smem:[#allocation4 + $0x77]]
        %v1208 = vstv %s1207
        %v1209 = vmul.f32 %v1208, %v319
        %v1210 = vmul.f32 %v1208, %v320
        %v1211 = vadd.f32 %v1205, %v1209
        %v1212 = vadd.f32 %v1206, %v1210
        %s1213 = sld [smem:[#allocation4 + $0x7f]]
        %v1214 = vstv %s1213
        %v1215 = vmul.f32 %v1214, %v321
        %v1216 = vmul.f32 %v1214, %v322
        %v1217 = vadd.f32 %v1211, %v1215
        %v1218 = vadd.f32 %v1212, %v1216
        %s1219 = sld [smem:[#allocation4 + $0x87]]
        %v1220 = vstv %s1219
        %v1221 = vmul.f32 %v1220, %v335
        %v1222 = vmul.f32 %v1220, %v336
        %v1223 = vadd.f32 %v1217, %v1221
        %v1224 = vadd.f32 %v1218, %v1222
        %s1225 = sld [smem:[#allocation4 + $0x8f]]
        %v1226 = vstv %s1225
        %v1227 = vmul.f32 %v1226, %v337
        %v1228 = vmul.f32 %v1226, %v338
        %v1229 = vadd.f32 %v1223, %v1227
        %v1230 = vadd.f32 %v1224, %v1228
        %s1231 = sld [smem:[#allocation5 + $0x7]]
        %v1232 = vstv %s1231
        %v1233 = vadd.f32 %v1229, %v1232
        %v1234 = vadd.f32 %v1230, %v1232
        %v1235 = vmax.f32 %v449, 0.0
        %v1236 = vmax.f32 %v450, 0.0
        %v1237 = vmax.f32 %v561, 0.0
        %v1238 = vmax.f32 %v562, 0.0
        %v1239 = vmax.f32 %v673, 0.0
        %v1240 = vmax.f32 %v674, 0.0
        %v1241 = vmax.f32 %v785, 0.0
        %v1242 = vmax.f32 %v786, 0.0
        %v1243 = vmax.f32 %v897, 0.0
        %v1244 = vmax.f32 %v898, 0.0
        %v1245 = vmax.f32 %v1009, 0.0
        %v1246 = vmax.f32 %v1010, 0.0
        %v1247 = vmax.f32 %v1121, 0.0
        %v1248 = vmax.f32 %v1122, 0.0
        %v1249 = vmax.f32 %v1233, 0.0
        %v1250 = vmax.f32 %v1234, 0.0
        %v1251 = vrot.slane %v1235, 7
        %v1252 = vrot.slane %v1236, 7
        %v1253 = vrot.slane %v1237, 7
        %v1254 = vrot.slane %v1238, 7
        %v1255 = vrot.slane %v1239, 7
        %v1256 = vrot.slane %v1240, 7
        %v1257 = vrot.slane %v1241, 7
        %v1258 = vrot.slane %v1242, 7
        %v1259 = vrot.slane %v1243, 7
        %v1260 = vrot.slane %v1244, 7
        %v1261 = vrot.slane %v1245, 7
        %v1262 = vrot.slane %v1246, 7
        %v1263 = vrot.slane %v1247, 7
        %v1264 = vrot.slane %v1248, 7
        %v1265 = vrot.slane %v1249, 7
        %v1266 = vrot.slane %v1250, 7
        %v1267 = vsel %vm183, %v1265, %v1266
        %v1268 = vsel %vm183, %v1264, %v1265
        %v1269 = vsel %vm183, %v1263, %v1264
        %v1270 = vsel %vm183, %v1262, %v1263
        %v1271 = vsel %vm183, %v1261, %v1262
        %v1272 = vsel %vm183, %v1260, %v1261
        %v1273 = vsel %vm183, %v1259, %v1260
        %v1274 = vsel %vm183, %v1258, %v1259
        %v1275 = vsel %vm183, %v1257, %v1258
        %v1276 = vsel %vm183, %v1256, %v1257
        %v1277 = vsel %vm183, %v1255, %v1256
        %v1278 = vsel %vm183, %v1254, %v1255
        %v1279 = vsel %vm183, %v1253, %v1254
        %v1280 = vsel %vm183, %v1252, %v1253
        %v1281 = vsel %vm183, %v1251, %v1252
        %v1282 = vsel %vm183, %v1266, %v1251
        %1283 = vrot.lane.b32.xlu0 %v1282, 1
        %v1284 = vpop.permute.xlu0 %1283
        %1285 = vrot.lane.b32.xlu0 %v1281, 1
        %v1286 = vpop.permute.xlu0 %1285
        %1287 = vrot.lane.b32.xlu0 %v1280, 1
        %v1288 = vpop.permute.xlu0 %1287
        %1289 = vrot.lane.b32.xlu0 %v1279, 1
        %v1290 = vpop.permute.xlu0 %1289
        %1291 = vrot.lane.b32.xlu0 %v1278, 1
        %v1292 = vpop.permute.xlu0 %1291
        %1293 = vrot.lane.b32.xlu0 %v1277, 1
        %v1294 = vpop.permute.xlu0 %1293
        %1295 = vrot.lane.b32.xlu0 %v1276, 1
        %v1296 = vpop.permute.xlu0 %1295
        %1297 = vrot.lane.b32.xlu0 %v1275, 1
        %v1298 = vpop.permute.xlu0 %1297
        %1299 = vrot.lane.b32.xlu0 %v1274, 1
        %v1300 = vpop.permute.xlu0 %1299
        %1301 = vrot.lane.b32.xlu0 %v1273, 1
        %v1302 = vpop.permute.xlu0 %1301
        %1303 = vrot.lane.b32.xlu0 %v1272, 1
        %v1304 = vpop.permute.xlu0 %1303
        %1305 = vrot.lane.b32.xlu0 %v1271, 1
        %v1306 = vpop.permute.xlu0 %1305
        %1307 = vrot.lane.b32.xlu0 %v1270, 1
        %v1308 = vpop.permute.xlu0 %1307
        %1309 = vrot.lane.b32.xlu0 %v1269, 1
        %v1310 = vpop.permute.xlu0 %1309
        %1311 = vrot.lane.b32.xlu0 %v1268, 1
        %v1312 = vpop.permute.xlu0 %1311
        %1313 = vrot.lane.b32.xlu0 %v1267, 1
        %v1314 = vpop.permute.xlu0 %1313
        %v1315 = vsel %vm209, %v1284, 0.0
        %v1316 = vsel %vm210, %v1286, 0.0
        %v1317 = vsel %vm209, %v1288, 0.0
        %v1318 = vsel %vm210, %v1290, 0.0
        %v1319 = vsel %vm209, %v1292, 0.0
        %v1320 = vsel %vm210, %v1294, 0.0
        %v1321 = vsel %vm209, %v1296, 0.0
        %v1322 = vsel %vm210, %v1298, 0.0
        %v1323 = vsel %vm209, %v1300, 0.0
        %v1324 = vsel %vm210, %v1302, 0.0
        %v1325 = vsel %vm209, %v1304, 0.0
        %v1326 = vsel %vm210, %v1306, 0.0
        %v1327 = vsel %vm209, %v1308, 0.0
        %v1328 = vsel %vm210, %v1310, 0.0
        %v1329 = vsel %vm209, %v1312, 0.0
        %v1330 = vsel %vm210, %v1314, 0.0
        %v1331 = vsel %vm219, %v1282, 0.0
        %v1332 = vsel %vm220, %v1281, 0.0
        %v1333 = vsel %vm219, %v1280, 0.0
        %v1334 = vsel %vm220, %v1279, 0.0
        %v1335 = vsel %vm219, %v1278, 0.0
        %v1336 = vsel %vm220, %v1277, 0.0
        %v1337 = vsel %vm219, %v1276, 0.0
        %v1338 = vsel %vm220, %v1275, 0.0
        %v1339 = vsel %vm219, %v1274, 0.0
        %v1340 = vsel %vm220, %v1273, 0.0
        %v1341 = vsel %vm219, %v1272, 0.0
        %v1342 = vsel %vm220, %v1271, 0.0
        %v1343 = vsel %vm219, %v1270, 0.0
        %v1344 = vsel %vm220, %v1269, 0.0
        %v1345 = vsel %vm219, %v1268, 0.0
        %v1346 = vsel %vm220, %v1267, 0.0
        %1347 = vrot.lane.b32.xlu0 %v1282, 127
        %v1348 = vpop.permute.xlu0 %1347
        %1349 = vrot.lane.b32.xlu0 %v1281, 127
        %v1350 = vpop.permute.xlu0 %1349
        %1351 = vrot.lane.b32.xlu0 %v1280, 127
        %v1352 = vpop.permute.xlu0 %1351
        %1353 = vrot.lane.b32.xlu0 %v1279, 127
        %v1354 = vpop.permute.xlu0 %1353
        %1355 = vrot.lane.b32.xlu0 %v1278, 127
        %v1356 = vpop.permute.xlu0 %1355
        %1357 = vrot.lane.b32.xlu0 %v1277, 127
        %v1358 = vpop.permute.xlu0 %1357
        %1359 = vrot.lane.b32.xlu0 %v1276, 127
        %v1360 = vpop.permute.xlu0 %1359
        %1361 = vrot.lane.b32.xlu0 %v1275, 127
        %v1362 = vpop.permute.xlu0 %1361
        %1363 = vrot.lane.b32.xlu0 %v1274, 127
        %v1364 = vpop.permute.xlu0 %1363
        %1365 = vrot.lane.b32.xlu0 %v1273, 127
        %v1366 = vpop.permute.xlu0 %1365
        %1367 = vrot.lane.b32.xlu0 %v1272, 127
        %v1368 = vpop.permute.xlu0 %1367
        %1369 = vrot.lane.b32.xlu0 %v1271, 127
        %v1370 = vpop.permute.xlu0 %1369
        %1371 = vrot.lane.b32.xlu0 %v1270, 127
        %v1372 = vpop.permute.xlu0 %1371
        %1373 = vrot.lane.b32.xlu0 %v1269, 127
        %v1374 = vpop.permute.xlu0 %1373
        %1375 = vrot.lane.b32.xlu0 %v1268, 127
        %v1376 = vpop.permute.xlu0 %1375
        %1377 = vrot.lane.b32.xlu0 %v1267, 127
        %v1378 = vpop.permute.xlu0 %1377
        %v1379 = vsel %vm238, %v1348, 0.0
        %v1380 = vsel %vm239, %v1350, 0.0
        %v1381 = vsel %vm238, %v1352, 0.0
        %v1382 = vsel %vm239, %v1354, 0.0
        %v1383 = vsel %vm238, %v1356, 0.0
        %v1384 = vsel %vm239, %v1358, 0.0
        %v1385 = vsel %vm238, %v1360, 0.0
        %v1386 = vsel %vm239, %v1362, 0.0
        %v1387 = vsel %vm238, %v1364, 0.0
        %v1388 = vsel %vm239, %v1366, 0.0
        %v1389 = vsel %vm238, %v1368, 0.0
        %v1390 = vsel %vm239, %v1370, 0.0
        %v1391 = vsel %vm238, %v1372, 0.0
        %v1392 = vsel %vm239, %v1374, 0.0
        %v1393 = vsel %vm238, %v1376, 0.0
        %v1394 = vsel %vm239, %v1378, 0.0
        %1395 = vrot.lane.b32.xlu0 %v1235, 1
        %v1396 = vpop.permute.xlu0 %1395
        %1397 = vrot.lane.b32.xlu0 %v1236, 1
        %v1398 = vpop.permute.xlu0 %1397
        %1399 = vrot.lane.b32.xlu0 %v1237, 1
        %v1400 = vpop.permute.xlu0 %1399
        %1401 = vrot.lane.b32.xlu0 %v1238, 1
        %v1402 = vpop.permute.xlu0 %1401
        %1403 = vrot.lane.b32.xlu0 %v1239, 1
        %v1404 = vpop.permute.xlu0 %1403
        %1405 = vrot.lane.b32.xlu0 %v1240, 1
        %v1406 = vpop.permute.xlu0 %1405
        %1407 = vrot.lane.b32.xlu0 %v1241, 1
        %v1408 = vpop.permute.xlu0 %1407
        %1409 = vrot.lane.b32.xlu0 %v1242, 1
        %v1410 = vpop.permute.xlu0 %1409
        %1411 = vrot.lane.b32.xlu0 %v1243, 1
        %v1412 = vpop.permute.xlu0 %1411
        %1413 = vrot.lane.b32.xlu0 %v1244, 1
        %v1414 = vpop.permute.xlu0 %1413
        %1415 = vrot.lane.b32.xlu0 %v1245, 1
        %v1416 = vpop.permute.xlu0 %1415
        %1417 = vrot.lane.b32.xlu0 %v1246, 1
        %v1418 = vpop.permute.xlu0 %1417
        %1419 = vrot.lane.b32.xlu0 %v1247, 1
        %v1420 = vpop.permute.xlu0 %1419
        %1421 = vrot.lane.b32.xlu0 %v1248, 1
        %v1422 = vpop.permute.xlu0 %1421
        %1423 = vrot.lane.b32.xlu0 %v1249, 1
        %v1424 = vpop.permute.xlu0 %1423
        %1425 = vrot.lane.b32.xlu0 %v1250, 1
        %v1426 = vpop.permute.xlu0 %1425
        %v1427 = vsel %vm260, %v1396, 0.0
        %v1428 = vsel %vm261, %v1398, 0.0
        %v1429 = vsel %vm260, %v1400, 0.0
        %v1430 = vsel %vm261, %v1402, 0.0
        %v1431 = vsel %vm260, %v1404, 0.0
        %v1432 = vsel %vm261, %v1406, 0.0
        %v1433 = vsel %vm260, %v1408, 0.0
        %v1434 = vsel %vm261, %v1410, 0.0
        %v1435 = vsel %vm260, %v1412, 0.0
        %v1436 = vsel %vm261, %v1414, 0.0
        %v1437 = vsel %vm260, %v1416, 0.0
        %v1438 = vsel %vm261, %v1418, 0.0
        %v1439 = vsel %vm260, %v1420, 0.0
        %v1440 = vsel %vm261, %v1422, 0.0
        %v1441 = vsel %vm260, %v1424, 0.0
        %v1442 = vsel %vm261, %v1426, 0.0
        %1443 = vrot.lane.b32.xlu0 %v1235, 127
        %v1444 = vpop.permute.xlu0 %1443
        %1445 = vrot.lane.b32.xlu0 %v1236, 127
        %v1446 = vpop.permute.xlu0 %1445
        %1447 = vrot.lane.b32.xlu0 %v1237, 127
        %v1448 = vpop.permute.xlu0 %1447
        %1449 = vrot.lane.b32.xlu0 %v1238, 127
        %v1450 = vpop.permute.xlu0 %1449
        %1451 = vrot.lane.b32.xlu0 %v1239, 127
        %v1452 = vpop.permute.xlu0 %1451
        %1453 = vrot.lane.b32.xlu0 %v1240, 127
        %v1454 = vpop.permute.xlu0 %1453
        %1455 = vrot.lane.b32.xlu0 %v1241, 127
        %v1456 = vpop.permute.xlu0 %1455
        %1457 = vrot.lane.b32.xlu0 %v1242, 127
        %v1458 = vpop.permute.xlu0 %1457
        %1459 = vrot.lane.b32.xlu0 %v1243, 127
        %v1460 = vpop.permute.xlu0 %1459
        %1461 = vrot.lane.b32.xlu0 %v1244, 127
        %v1462 = vpop.permute.xlu0 %1461
        %1463 = vrot.lane.b32.xlu0 %v1245, 127
        %v1464 = vpop.permute.xlu0 %1463
        %1465 = vrot.lane.b32.xlu0 %v1246, 127
        %v1466 = vpop.permute.xlu0 %1465
        %1467 = vrot.lane.b32.xlu0 %v1247, 127
        %v1468 = vpop.permute.xlu0 %1467
        %1469 = vrot.lane.b32.xlu0 %v1248, 127
        %v1470 = vpop.permute.xlu0 %1469
        %1471 = vrot.lane.b32.xlu0 %v1249, 127
        %v1472 = vpop.permute.xlu0 %1471
        %1473 = vrot.lane.b32.xlu0 %v1250, 127
        %v1474 = vpop.permute.xlu0 %1473
        %v1475 = vsel %vm276, %v1444, 0.0
        %v1476 = vsel %vm277, %v1446, 0.0
        %v1477 = vsel %vm276, %v1448, 0.0
        %v1478 = vsel %vm277, %v1450, 0.0
        %v1479 = vsel %vm276, %v1452, 0.0
        %v1480 = vsel %vm277, %v1454, 0.0
        %v1481 = vsel %vm276, %v1456, 0.0
        %v1482 = vsel %vm277, %v1458, 0.0
        %v1483 = vsel %vm276, %v1460, 0.0
        %v1484 = vsel %vm277, %v1462, 0.0
        %v1485 = vsel %vm276, %v1464, 0.0
        %v1486 = vsel %vm277, %v1466, 0.0
        %v1487 = vsel %vm276, %v1468, 0.0
        %v1488 = vsel %vm277, %v1470, 0.0
        %v1489 = vsel %vm276, %v1472, 0.0
        %v1490 = vsel %vm277, %v1474, 0.0
        %v1491 = vrot.slane %v1235, 1
        %v1492 = vrot.slane %v1236, 1
        %v1493 = vrot.slane %v1237, 1
        %v1494 = vrot.slane %v1238, 1
        %v1495 = vrot.slane %v1239, 1
        %v1496 = vrot.slane %v1240, 1
        %v1497 = vrot.slane %v1241, 1
        %v1498 = vrot.slane %v1242, 1
        %v1499 = vrot.slane %v1243, 1
        %v1500 = vrot.slane %v1244, 1
        %v1501 = vrot.slane %v1245, 1
        %v1502 = vrot.slane %v1246, 1
        %v1503 = vrot.slane %v1247, 1
        %v1504 = vrot.slane %v1248, 1
        %v1505 = vrot.slane %v1249, 1
        %v1506 = vrot.slane %v1250, 1
        %v1507 = vsel %vm286, %v1505, %v1506
        %v1508 = vsel %vm286, %v1504, %v1505
        %v1509 = vsel %vm286, %v1503, %v1504
        %v1510 = vsel %vm286, %v1502, %v1503
        %v1511 = vsel %vm286, %v1501, %v1502
        %v1512 = vsel %vm286, %v1500, %v1501
        %v1513 = vsel %vm286, %v1499, %v1500
        %v1514 = vsel %vm286, %v1498, %v1499
        %v1515 = vsel %vm286, %v1497, %v1498
        %v1516 = vsel %vm286, %v1496, %v1497
        %v1517 = vsel %vm286, %v1495, %v1496
        %v1518 = vsel %vm286, %v1494, %v1495
        %v1519 = vsel %vm286, %v1493, %v1494
        %v1520 = vsel %vm286, %v1492, %v1493
        %v1521 = vsel %vm286, %v1491, %v1492
        %v1522 = vsel %vm286, %v1506, %v1491
        %1523 = vrot.lane.b32.xlu0 %v1521, 1
        %v1524 = vpop.permute.xlu0 %1523
        %1525 = vrot.lane.b32.xlu0 %v1520, 1
        %v1526 = vpop.permute.xlu0 %1525
        %1527 = vrot.lane.b32.xlu0 %v1519, 1
        %v1528 = vpop.permute.xlu0 %1527
        %1529 = vrot.lane.b32.xlu0 %v1518, 1
        %v1530 = vpop.permute.xlu0 %1529
        %1531 = vrot.lane.b32.xlu0 %v1517, 1
        %v1532 = vpop.permute.xlu0 %1531
        %1533 = vrot.lane.b32.xlu0 %v1516, 1
        %v1534 = vpop.permute.xlu0 %1533
        %1535 = vrot.lane.b32.xlu0 %v1515, 1
        %v1536 = vpop.permute.xlu0 %1535
        %1537 = vrot.lane.b32.xlu0 %v1514, 1
        %v1538 = vpop.permute.xlu0 %1537
        %1539 = vrot.lane.b32.xlu0 %v1513, 1
        %v1540 = vpop.permute.xlu0 %1539
        %1541 = vrot.lane.b32.xlu0 %v1512, 1
        %v1542 = vpop.permute.xlu0 %1541
        %1543 = vrot.lane.b32.xlu0 %v1511, 1
        %v1544 = vpop.permute.xlu0 %1543
        %1545 = vrot.lane.b32.xlu0 %v1510, 1
        %v1546 = vpop.permute.xlu0 %1545
        %1547 = vrot.lane.b32.xlu0 %v1509, 1
        %v1548 = vpop.permute.xlu0 %1547
        %1549 = vrot.lane.b32.xlu0 %v1508, 1
        %v1550 = vpop.permute.xlu0 %1549
        %1551 = vrot.lane.b32.xlu0 %v1507, 1
        %v1552 = vpop.permute.xlu0 %1551
        %1553 = vrot.lane.b32.xlu0 %v1522, 1
        %v1554 = vpop.permute.xlu0 %1553
        %v1555 = vsel %vm309, %v1524, 0.0
        %v1556 = vsel %vm310, %v1526, 0.0
        %v1557 = vsel %vm309, %v1528, 0.0
        %v1558 = vsel %vm310, %v1530, 0.0
        %v1559 = vsel %vm309, %v1532, 0.0
        %v1560 = vsel %vm310, %v1534, 0.0
        %v1561 = vsel %vm309, %v1536, 0.0
        %v1562 = vsel %vm310, %v1538, 0.0
        %v1563 = vsel %vm309, %v1540, 0.0
        %v1564 = vsel %vm310, %v1542, 0.0
        %v1565 = vsel %vm309, %v1544, 0.0
        %v1566 = vsel %vm310, %v1546, 0.0
        %v1567 = vsel %vm309, %v1548, 0.0
        %v1568 = vsel %vm310, %v1550, 0.0
        %v1569 = vsel %vm309, %v1552, 0.0
        %v1570 = vsel %vm310, %v1554, 0.0
        %v1571 = vsel %vm317, %v1521, 0.0
        %v1572 = vsel %vm318, %v1520, 0.0
        %v1573 = vsel %vm317, %v1519, 0.0
        %v1574 = vsel %vm318, %v1518, 0.0
        %v1575 = vsel %vm317, %v1517, 0.0
        %v1576 = vsel %vm318, %v1516, 0.0
        %v1577 = vsel %vm317, %v1515, 0.0
        %v1578 = vsel %vm318, %v1514, 0.0
        %v1579 = vsel %vm317, %v1513, 0.0
        %v1580 = vsel %vm318, %v1512, 0.0
        %v1581 = vsel %vm317, %v1511, 0.0
        %v1582 = vsel %vm318, %v1510, 0.0
        %v1583 = vsel %vm317, %v1509, 0.0
        %v1584 = vsel %vm318, %v1508, 0.0
        %v1585 = vsel %vm317, %v1507, 0.0
        %v1586 = vsel %vm318, %v1522, 0.0
        %1587 = vrot.lane.b32.xlu0 %v1521, 127
        %v1588 = vpop.permute.xlu0 %1587
        %1589 = vrot.lane.b32.xlu0 %v1520, 127
        %v1590 = vpop.permute.xlu0 %1589
        %1591 = vrot.lane.b32.xlu0 %v1519, 127
        %v1592 = vpop.permute.xlu0 %1591
        %1593 = vrot.lane.b32.xlu0 %v1518, 127
        %v1594 = vpop.permute.xlu0 %1593
        %1595 = vrot.lane.b32.xlu0 %v1517, 127
        %v1596 = vpop.permute.xlu0 %1595
        %1597 = vrot.lane.b32.xlu0 %v1516, 127
        %v1598 = vpop.permute.xlu0 %1597
        %1599 = vrot.lane.b32.xlu0 %v1515, 127
        %v1600 = vpop.permute.xlu0 %1599
        %1601 = vrot.lane.b32.xlu0 %v1514, 127
        %v1602 = vpop.permute.xlu0 %1601
        %1603 = vrot.lane.b32.xlu0 %v1513, 127
        %v1604 = vpop.permute.xlu0 %1603
        %1605 = vrot.lane.b32.xlu0 %v1512, 127
        %v1606 = vpop.permute.xlu0 %1605
        %1607 = vrot.lane.b32.xlu0 %v1511, 127
        %v1608 = vpop.permute.xlu0 %1607
        %1609 = vrot.lane.b32.xlu0 %v1510, 127
        %v1610 = vpop.permute.xlu0 %1609
        %1611 = vrot.lane.b32.xlu0 %v1509, 127
        %v1612 = vpop.permute.xlu0 %1611
        %1613 = vrot.lane.b32.xlu0 %v1508, 127
        %v1614 = vpop.permute.xlu0 %1613
        %1615 = vrot.lane.b32.xlu0 %v1507, 127
        %v1616 = vpop.permute.xlu0 %1615
        %1617 = vrot.lane.b32.xlu0 %v1522, 127
        %v1618 = vpop.permute.xlu0 %1617
        %v1619 = vsel %vm333, %v1588, 0.0
        %v1620 = vsel %vm334, %v1590, 0.0
        %v1621 = vsel %vm333, %v1592, 0.0
        %v1622 = vsel %vm334, %v1594, 0.0
        %v1623 = vsel %vm333, %v1596, 0.0
        %v1624 = vsel %vm334, %v1598, 0.0
        %v1625 = vsel %vm333, %v1600, 0.0
        %v1626 = vsel %vm334, %v1602, 0.0
        %v1627 = vsel %vm333, %v1604, 0.0
        %v1628 = vsel %vm334, %v1606, 0.0
        %v1629 = vsel %vm333, %v1608, 0.0
        %v1630 = vsel %vm334, %v1610, 0.0
        %v1631 = vsel %vm333, %v1612, 0.0
        %v1632 = vsel %vm334, %v1614, 0.0
        %v1633 = vsel %vm333, %v1616, 0.0
        %v1634 = vsel %vm334, %v1618, 0.0
        %s1635 = sld [smem:[#allocation6]]
        %v1636 = vstv %s1635
        %v1637 = vmul.f32 %v1636, %v1315
        %v1638 = vmul.f32 %v1636, %v1316
        %v1639 = vadd.f32 %v1637, 0.0
        %v1640 = vadd.f32 %v1638, 0.0
        %s1641 = sld [smem:[#allocation6 + $0x2]]
        %v1642 = vstv %s1641
        %v1643 = vmul.f32 %v1642, %v1317
        %v1644 = vmul.f32 %v1642, %v1318
        %v1645 = vadd.f32 %v1639, %v1643
        %v1646 = vadd.f32 %v1640, %v1644
        %s1647 = sld [smem:[#allocation6 + $0x4]]
        %v1648 = vstv %s1647
        %v1649 = vmul.f32 %v1648, %v1319
        %v1650 = vmul.f32 %v1648, %v1320
        %v1651 = vadd.f32 %v1645, %v1649
        %v1652 = vadd.f32 %v1646, %v1650
        %s1653 = sld [smem:[#allocation6 + $0x6]]
        %v1654 = vstv %s1653
        %v1655 = vmul.f32 %v1654, %v1321
        %v1656 = vmul.f32 %v1654, %v1322
        %v1657 = vadd.f32 %v1651, %v1655
        %v1658 = vadd.f32 %v1652, %v1656
        %s1659 = sld [smem:[#allocation6 + $0x8]]
        %v1660 = vstv %s1659
        %v1661 = vmul.f32 %v1660, %v1323
        %v1662 = vmul.f32 %v1660, %v1324
        %v1663 = vadd.f32 %v1657, %v1661
        %v1664 = vadd.f32 %v1658, %v1662
        %s1665 = sld [smem:[#allocation6 + $0xa]]
        %v1666 = vstv %s1665
        %v1667 = vmul.f32 %v1666, %v1325
        %v1668 = vmul.f32 %v1666, %v1326
        %v1669 = vadd.f32 %v1663, %v1667
        %v1670 = vadd.f32 %v1664, %v1668
        %s1671 = sld [smem:[#allocation6 + $0xc]]
        %v1672 = vstv %s1671
        %v1673 = vmul.f32 %v1672, %v1327
        %v1674 = vmul.f32 %v1672, %v1328
        %v1675 = vadd.f32 %v1669, %v1673
        %v1676 = vadd.f32 %v1670, %v1674
        %s1677 = sld [smem:[#allocation6 + $0xe]]
        %v1678 = vstv %s1677
        %v1679 = vmul.f32 %v1678, %v1329
        %v1680 = vmul.f32 %v1678, %v1330
        %v1681 = vadd.f32 %v1675, %v1679
        %v1682 = vadd.f32 %v1676, %v1680
        %s1683 = sld [smem:[#allocation6 + $0x10]]
        %v1684 = vstv %s1683
        %v1685 = vmul.f32 %v1684, %v1331
        %v1686 = vmul.f32 %v1684, %v1332
        %v1687 = vadd.f32 %v1681, %v1685
        %v1688 = vadd.f32 %v1682, %v1686
        %s1689 = sld [smem:[#allocation6 + $0x12]]
        %v1690 = vstv %s1689
        %v1691 = vmul.f32 %v1690, %v1333
        %v1692 = vmul.f32 %v1690, %v1334
        %v1693 = vadd.f32 %v1687, %v1691
        %v1694 = vadd.f32 %v1688, %v1692
        %s1695 = sld [smem:[#allocation6 + $0x14]]
        %v1696 = vstv %s1695
        %v1697 = vmul.f32 %v1696, %v1335
        %v1698 = vmul.f32 %v1696, %v1336
        %v1699 = vadd.f32 %v1693, %v1697
        %v1700 = vadd.f32 %v1694, %v1698
        %s1701 = sld [smem:[#allocation6 + $0x16]]
        %v1702 = vstv %s1701
        %v1703 = vmul.f32 %v1702, %v1337
        %v1704 = vmul.f32 %v1702, %v1338
        %v1705 = vadd.f32 %v1699, %v1703
        %v1706 = vadd.f32 %v1700, %v1704
        %s1707 = sld [smem:[#allocation6 + $0x18]]
        %v1708 = vstv %s1707
        %v1709 = vmul.f32 %v1708, %v1339
        %v1710 = vmul.f32 %v1708, %v1340
        %v1711 = vadd.f32 %v1705, %v1709
        %v1712 = vadd.f32 %v1706, %v1710
        %s1713 = sld [smem:[#allocation6 + $0x1a]]
        %v1714 = vstv %s1713
        %v1715 = vmul.f32 %v1714, %v1341
        %v1716 = vmul.f32 %v1714, %v1342
        %v1717 = vadd.f32 %v1711, %v1715
        %v1718 = vadd.f32 %v1712, %v1716
        %s1719 = sld [smem:[#allocation6 + $0x1c]]
        %v1720 = vstv %s1719
        %v1721 = vmul.f32 %v1720, %v1343
        %v1722 = vmul.f32 %v1720, %v1344
        %v1723 = vadd.f32 %v1717, %v1721
        %v1724 = vadd.f32 %v1718, %v1722
        %s1725 = sld [smem:[#allocation6 + $0x1e]]
        %v1726 = vstv %s1725
        %v1727 = vmul.f32 %v1726, %v1345
        %v1728 = vmul.f32 %v1726, %v1346
        %v1729 = vadd.f32 %v1723, %v1727
        %v1730 = vadd.f32 %v1724, %v1728
        %s1731 = sld [smem:[#allocation6 + $0x20]]
        %v1732 = vstv %s1731
        %v1733 = vmul.f32 %v1732, %v1379
        %v1734 = vmul.f32 %v1732, %v1380
        %v1735 = vadd.f32 %v1729, %v1733
        %v1736 = vadd.f32 %v1730, %v1734
        %s1737 = sld [smem:[#allocation6 + $0x22]]
        %v1738 = vstv %s1737
        %v1739 = vmul.f32 %v1738, %v1381
        %v1740 = vmul.f32 %v1738, %v1382
        %v1741 = vadd.f32 %v1735, %v1739
        %v1742 = vadd.f32 %v1736, %v1740
        %s1743 = sld [smem:[#allocation6 + $0x24]]
        %v1744 = vstv %s1743
        %v1745 = vmul.f32 %v1744, %v1383
        %v1746 = vmul.f32 %v1744, %v1384
        %v1747 = vadd.f32 %v1741, %v1745
        %v1748 = vadd.f32 %v1742, %v1746
        %s1749 = sld [smem:[#allocation6 + $0x26]]
        %v1750 = vstv %s1749
        %v1751 = vmul.f32 %v1750, %v1385
        %v1752 = vmul.f32 %v1750, %v1386
        %v1753 = vadd.f32 %v1747, %v1751
        %v1754 = vadd.f32 %v1748, %v1752
        %s1755 = sld [smem:[#allocation6 + $0x28]]
        %v1756 = vstv %s1755
        %v1757 = vmul.f32 %v1756, %v1387
        %v1758 = vmul.f32 %v1756, %v1388
        %v1759 = vadd.f32 %v1753, %v1757
        %v1760 = vadd.f32 %v1754, %v1758
        %s1761 = sld [smem:[#allocation6 + $0x2a]]
        %v1762 = vstv %s1761
        %v1763 = vmul.f32 %v1762, %v1389
        %v1764 = vmul.f32 %v1762, %v1390
        %v1765 = vadd.f32 %v1759, %v1763
        %v1766 = vadd.f32 %v1760, %v1764
        %s1767 = sld [smem:[#allocation6 + $0x2c]]
        %v1768 = vstv %s1767
        %v1769 = vmul.f32 %v1768, %v1391
        %v1770 = vmul.f32 %v1768, %v1392
        %v1771 = vadd.f32 %v1765, %v1769
        %v1772 = vadd.f32 %v1766, %v1770
        %s1773 = sld [smem:[#allocation6 + $0x2e]]
        %v1774 = vstv %s1773
        %v1775 = vmul.f32 %v1774, %v1393
        %v1776 = vmul.f32 %v1774, %v1394
        %v1777 = vadd.f32 %v1771, %v1775
        %v1778 = vadd.f32 %v1772, %v1776
        %s1779 = sld [smem:[#allocation6 + $0x30]]
        %v1780 = vstv %s1779
        %v1781 = vmul.f32 %v1780, %v1427
        %v1782 = vmul.f32 %v1780, %v1428
        %v1783 = vadd.f32 %v1777, %v1781
        %v1784 = vadd.f32 %v1778, %v1782
        %s1785 = sld [smem:[#allocation6 + $0x32]]
        %v1786 = vstv %s1785
        %v1787 = vmul.f32 %v1786, %v1429
        %v1788 = vmul.f32 %v1786, %v1430
        %v1789 = vadd.f32 %v1783, %v1787
        %v1790 = vadd.f32 %v1784, %v1788
        %s1791 = sld [smem:[#allocation6 + $0x34]]
        %v1792 = vstv %s1791
        %v1793 = vmul.f32 %v1792, %v1431
        %v1794 = vmul.f32 %v1792, %v1432
        %v1795 = vadd.f32 %v1789, %v1793
        %v1796 = vadd.f32 %v1790, %v1794
        %s1797 = sld [smem:[#allocation6 + $0x36]]
        %v1798 = vstv %s1797
        %v1799 = vmul.f32 %v1798, %v1433
        %v1800 = vmul.f32 %v1798, %v1434
        %v1801 = vadd.f32 %v1795, %v1799
        %v1802 = vadd.f32 %v1796, %v1800
        %s1803 = sld [smem:[#allocation6 + $0x38]]
        %v1804 = vstv %s1803
        %v1805 = vmul.f32 %v1804, %v1435
        %v1806 = vmul.f32 %v1804, %v1436
        %v1807 = vadd.f32 %v1801, %v1805
        %v1808 = vadd.f32 %v1802, %v1806
        %s1809 = sld [smem:[#allocation6 + $0x3a]]
        %v1810 = vstv %s1809
        %v1811 = vmul.f32 %v1810, %v1437
        %v1812 = vmul.f32 %v1810, %v1438
        %v1813 = vadd.f32 %v1807, %v1811
        %v1814 = vadd.f32 %v1808, %v1812
        %s1815 = sld [smem:[#allocation6 + $0x3c]]
        %v1816 = vstv %s1815
        %v1817 = vmul.f32 %v1816, %v1439
        %v1818 = vmul.f32 %v1816, %v1440
        %v1819 = vadd.f32 %v1813, %v1817
        %v1820 = vadd.f32 %v1814, %v1818
        %s1821 = sld [smem:[#allocation6 + $0x3e]]
        %v1822 = vstv %s1821
        %v1823 = vmul.f32 %v1822, %v1441
        %v1824 = vmul.f32 %v1822, %v1442
        %v1825 = vadd.f32 %v1819, %v1823
        %v1826 = vadd.f32 %v1820, %v1824
        %s1827 = sld [smem:[#allocation6 + $0x40]]
        %v1828 = vstv %s1827
        %v1829 = vmul.f32 %v1828, %v1235
        %v1830 = vmul.f32 %v1828, %v1236
        %v1831 = vadd.f32 %v1825, %v1829
        %v1832 = vadd.f32 %v1826, %v1830
        %s1833 = sld [smem:[#allocation6 + $0x42]]
        %v1834 = vstv %s1833
        %v1835 = vmul.f32 %v1834, %v1237
        %v1836 = vmul.f32 %v1834, %v1238
        %v1837 = vadd.f32 %v1831, %v1835
        %v1838 = vadd.f32 %v1832, %v1836
        %s1839 = sld [smem:[#allocation6 + $0x44]]
        %v1840 = vstv %s1839
        %v1841 = vmul.f32 %v1840, %v1239
        %v1842 = vmul.f32 %v1840, %v1240
        %v1843 = vadd.f32 %v1837, %v1841
        %v1844 = vadd.f32 %v1838, %v1842
        %s1845 = sld [smem:[#allocation6 + $0x46]]
        %v1846 = vstv %s1845
        %v1847 = vmul.f32 %v1846, %v1241
        %v1848 = vmul.f32 %v1846, %v1242
        %v1849 = vadd.f32 %v1843, %v1847
        %v1850 = vadd.f32 %v1844, %v1848
        %s1851 = sld [smem:[#allocation6 + $0x48]]
        %v1852 = vstv %s1851
        %v1853 = vmul.f32 %v1852, %v1243
        %v1854 = vmul.f32 %v1852, %v1244
        %v1855 = vadd.f32 %v1849, %v1853
        %v1856 = vadd.f32 %v1850, %v1854
        %s1857 = sld [smem:[#allocation6 + $0x4a]]
        %v1858 = vstv %s1857
        %v1859 = vmul.f32 %v1858, %v1245
        %v1860 = vmul.f32 %v1858, %v1246
        %v1861 = vadd.f32 %v1855, %v1859
        %v1862 = vadd.f32 %v1856, %v1860
        %s1863 = sld [smem:[#allocation6 + $0x4c]]
        %v1864 = vstv %s1863
        %v1865 = vmul.f32 %v1864, %v1247
        %v1866 = vmul.f32 %v1864, %v1248
        %v1867 = vadd.f32 %v1861, %v1865
        %v1868 = vadd.f32 %v1862, %v1866
        %s1869 = sld [smem:[#allocation6 + $0x4e]]
        %v1870 = vstv %s1869
        %v1871 = vmul.f32 %v1870, %v1249
        %v1872 = vmul.f32 %v1870, %v1250
        %v1873 = vadd.f32 %v1867, %v1871
        %v1874 = vadd.f32 %v1868, %v1872
        %s1875 = sld [smem:[#allocation6 + $0x50]]
        %v1876 = vstv %s1875
        %v1877 = vmul.f32 %v1876, %v1475
        %v1878 = vmul.f32 %v1876, %v1476
        %v1879 = vadd.f32 %v1873, %v1877
        %v1880 = vadd.f32 %v1874, %v1878
        %s1881 = sld [smem:[#allocation6 + $0x52]]
        %v1882 = vstv %s1881
        %v1883 = vmul.f32 %v1882, %v1477
        %v1884 = vmul.f32 %v1882, %v1478
        %v1885 = vadd.f32 %v1879, %v1883
        %v1886 = vadd.f32 %v1880, %v1884
        %s1887 = sld [smem:[#allocation6 + $0x54]]
        %v1888 = vstv %s1887
        %v1889 = vmul.f32 %v1888, %v1479
        %v1890 = vmul.f32 %v1888, %v1480
        %v1891 = vadd.f32 %v1885, %v1889
        %v1892 = vadd.f32 %v1886, %v1890
        %s1893 = sld [smem:[#allocation6 + $0x56]]
        %v1894 = vstv %s1893
        %v1895 = vmul.f32 %v1894, %v1481
        %v1896 = vmul.f32 %v1894, %v1482
        %v1897 = vadd.f32 %v1891, %v1895
        %v1898 = vadd.f32 %v1892, %v1896
        %s1899 = sld [smem:[#allocation6 + $0x58]]
        %v1900 = vstv %s1899
        %v1901 = vmul.f32 %v1900, %v1483
        %v1902 = vmul.f32 %v1900, %v1484
        %v1903 = vadd.f32 %v1897, %v1901
        %v1904 = vadd.f32 %v1898, %v1902
        %s1905 = sld [smem:[#allocation6 + $0x5a]]
        %v1906 = vstv %s1905
        %v1907 = vmul.f32 %v1906, %v1485
        %v1908 = vmul.f32 %v1906, %v1486
        %v1909 = vadd.f32 %v1903, %v1907
        %v1910 = vadd.f32 %v1904, %v1908
        %s1911 = sld [smem:[#allocation6 + $0x5c]]
        %v1912 = vstv %s1911
        %v1913 = vmul.f32 %v1912, %v1487
        %v1914 = vmul.f32 %v1912, %v1488
        %v1915 = vadd.f32 %v1909, %v1913
        %v1916 = vadd.f32 %v1910, %v1914
        %s1917 = sld [smem:[#allocation6 + $0x5e]]
        %v1918 = vstv %s1917
        %v1919 = vmul.f32 %v1918, %v1489
        %v1920 = vmul.f32 %v1918, %v1490
        %v1921 = vadd.f32 %v1915, %v1919
        %v1922 = vadd.f32 %v1916, %v1920
        %s1923 = sld [smem:[#allocation6 + $0x60]]
        %v1924 = vstv %s1923
        %v1925 = vmul.f32 %v1924, %v1555
        %v1926 = vmul.f32 %v1924, %v1556
        %v1927 = vadd.f32 %v1921, %v1925
        %v1928 = vadd.f32 %v1922, %v1926
        %s1929 = sld [smem:[#allocation6 + $0x62]]
        %v1930 = vstv %s1929
        %v1931 = vmul.f32 %v1930, %v1557
        %v1932 = vmul.f32 %v1930, %v1558
        %v1933 = vadd.f32 %v1927, %v1931
        %v1934 = vadd.f32 %v1928, %v1932
        %s1935 = sld [smem:[#allocation6 + $0x64]]
        %v1936 = vstv %s1935
        %v1937 = vmul.f32 %v1936, %v1559
        %v1938 = vmul.f32 %v1936, %v1560
        %v1939 = vadd.f32 %v1933, %v1937
        %v1940 = vadd.f32 %v1934, %v1938
        %s1941 = sld [smem:[#allocation6 + $0x66]]
        %v1942 = vstv %s1941
        %v1943 = vmul.f32 %v1942, %v1561
        %v1944 = vmul.f32 %v1942, %v1562
        %v1945 = vadd.f32 %v1939, %v1943
        %v1946 = vadd.f32 %v1940, %v1944
        %s1947 = sld [smem:[#allocation6 + $0x68]]
        %v1948 = vstv %s1947
        %v1949 = vmul.f32 %v1948, %v1563
        %v1950 = vmul.f32 %v1948, %v1564
        %v1951 = vadd.f32 %v1945, %v1949
        %v1952 = vadd.f32 %v1946, %v1950
        %s1953 = sld [smem:[#allocation6 + $0x6a]]
        %v1954 = vstv %s1953
        %v1955 = vmul.f32 %v1954, %v1565
        %v1956 = vmul.f32 %v1954, %v1566
        %v1957 = vadd.f32 %v1951, %v1955
        %v1958 = vadd.f32 %v1952, %v1956
        %s1959 = sld [smem:[#allocation6 + $0x6c]]
        %v1960 = vstv %s1959
        %v1961 = vmul.f32 %v1960, %v1567
        %v1962 = vmul.f32 %v1960, %v1568
        %v1963 = vadd.f32 %v1957, %v1961
        %v1964 = vadd.f32 %v1958, %v1962
        %s1965 = sld [smem:[#allocation6 + $0x6e]]
        %v1966 = vstv %s1965
        %v1967 = vmul.f32 %v1966, %v1569
        %v1968 = vmul.f32 %v1966, %v1570
        %v1969 = vadd.f32 %v1963, %v1967
        %v1970 = vadd.f32 %v1964, %v1968
        %s1971 = sld [smem:[#allocation6 + $0x70]]
        %v1972 = vstv %s1971
        %v1973 = vmul.f32 %v1972, %v1571
        %v1974 = vmul.f32 %v1972, %v1572
        %v1975 = vadd.f32 %v1969, %v1973
        %v1976 = vadd.f32 %v1970, %v1974
        %s1977 = sld [smem:[#allocation6 + $0x72]]
        %v1978 = vstv %s1977
        %v1979 = vmul.f32 %v1978, %v1573
        %v1980 = vmul.f32 %v1978, %v1574
        %v1981 = vadd.f32 %v1975, %v1979
        %v1982 = vadd.f32 %v1976, %v1980
        %s1983 = sld [smem:[#allocation6 + $0x74]]
        %v1984 = vstv %s1983
        %v1985 = vmul.f32 %v1984, %v1575
        %v1986 = vmul.f32 %v1984, %v1576
        %v1987 = vadd.f32 %v1981, %v1985
        %v1988 = vadd.f32 %v1982, %v1986
        %s1989 = sld [smem:[#allocation6 + $0x76]]
        %v1990 = vstv %s1989
        %v1991 = vmul.f32 %v1990, %v1577
        %v1992 = vmul.f32 %v1990, %v1578
        %v1993 = vadd.f32 %v1987, %v1991
        %v1994 = vadd.f32 %v1988, %v1992
        %s1995 = sld [smem:[#allocation6 + $0x78]]
        %v1996 = vstv %s1995
        %v1997 = vmul.f32 %v1996, %v1579
        %v1998 = vmul.f32 %v1996, %v1580
        %v1999 = vadd.f32 %v1993, %v1997
        %v2000 = vadd.f32 %v1994, %v1998
        %s2001 = sld [smem:[#allocation6 + $0x7a]]
        %v2002 = vstv %s2001
        %v2003 = vmul.f32 %v2002, %v1581
        %v2004 = vmul.f32 %v2002, %v1582
        %v2005 = vadd.f32 %v1999, %v2003
        %v2006 = vadd.f32 %v2000, %v2004
        %s2007 = sld [smem:[#allocation6 + $0x7c]]
        %v2008 = vstv %s2007
        %v2009 = vmul.f32 %v2008, %v1583
        %v2010 = vmul.f32 %v2008, %v1584
        %v2011 = vadd.f32 %v2005, %v2009
        %v2012 = vadd.f32 %v2006, %v2010
        %s2013 = sld [smem:[#allocation6 + $0x7e]]
        %v2014 = vstv %s2013
        %v2015 = vmul.f32 %v2014, %v1585
        %v2016 = vmul.f32 %v2014, %v1586
        %v2017 = vadd.f32 %v2011, %v2015
        %v2018 = vadd.f32 %v2012, %v2016
        %s2019 = sld [smem:[#allocation6 + $0x80]]
        %v2020 = vstv %s2019
        %v2021 = vmul.f32 %v2020, %v1619
        %v2022 = vmul.f32 %v2020, %v1620
        %v2023 = vadd.f32 %v2017, %v2021
        %v2024 = vadd.f32 %v2018, %v2022
        %s2025 = sld [smem:[#allocation6 + $0x82]]
        %v2026 = vstv %s2025
        %v2027 = vmul.f32 %v2026, %v1621
        %v2028 = vmul.f32 %v2026, %v1622
        %v2029 = vadd.f32 %v2023, %v2027
        %v2030 = vadd.f32 %v2024, %v2028
        %s2031 = sld [smem:[#allocation6 + $0x84]]
        %v2032 = vstv %s2031
        %v2033 = vmul.f32 %v2032, %v1623
        %v2034 = vmul.f32 %v2032, %v1624
        %v2035 = vadd.f32 %v2029, %v2033
        %v2036 = vadd.f32 %v2030, %v2034
        %s2037 = sld [smem:[#allocation6 + $0x86]]
        %v2038 = vstv %s2037
        %v2039 = vmul.f32 %v2038, %v1625
        %v2040 = vmul.f32 %v2038, %v1626
        %v2041 = vadd.f32 %v2035, %v2039
        %v2042 = vadd.f32 %v2036, %v2040
        %s2043 = sld [smem:[#allocation6 + $0x88]]
        %v2044 = vstv %s2043
        %v2045 = vmul.f32 %v2044, %v1627
        %v2046 = vmul.f32 %v2044, %v1628
        %v2047 = vadd.f32 %v2041, %v2045
        %v2048 = vadd.f32 %v2042, %v2046
        %s2049 = sld [smem:[#allocation6 + $0x8a]]
        %v2050 = vstv %s2049
        %v2051 = vmul.f32 %v2050, %v1629
        %v2052 = vmul.f32 %v2050, %v1630
        %v2053 = vadd.f32 %v2047, %v2051
        %v2054 = vadd.f32 %v2048, %v2052
        %s2055 = sld [smem:[#allocation6 + $0x8c]]
        %v2056 = vstv %s2055
        %v2057 = vmul.f32 %v2056, %v1631
        %v2058 = vmul.f32 %v2056, %v1632
        %v2059 = vadd.f32 %v2053, %v2057
        %v2060 = vadd.f32 %v2054, %v2058
        %s2061 = sld [smem:[#allocation6 + $0x8e]]
        %v2062 = vstv %s2061
        %v2063 = vmul.f32 %v2062, %v1633
        %v2064 = vmul.f32 %v2062, %v1634
        %v2065 = vadd.f32 %v2059, %v2063
        %v2066 = vadd.f32 %v2060, %v2064
        %s2067 = sld [smem:[#allocation7]]
        %v2068 = vstv %s2067
        %v2069 = vadd.f32 %v2065, %v2068
        %v2070 = vadd.f32 %v2066, %v2068
        %s2071 = sld [smem:[#allocation6 + $0x1]]
        %v2072 = vstv %s2071
        %v2073 = vmul.f32 %v2072, %v1315
        %v2074 = vmul.f32 %v2072, %v1316
        %v2075 = vadd.f32 %v2073, 0.0
        %v2076 = vadd.f32 %v2074, 0.0
        %s2077 = sld [smem:[#allocation6 + $0x3]]
        %v2078 = vstv %s2077
        %v2079 = vmul.f32 %v2078, %v1317
        %v2080 = vmul.f32 %v2078, %v1318
        %v2081 = vadd.f32 %v2075, %v2079
        %v2082 = vadd.f32 %v2076, %v2080
        %s2083 = sld [smem:[#allocation6 + $0x5]]
        %v2084 = vstv %s2083
        %v2085 = vmul.f32 %v2084, %v1319
        %v2086 = vmul.f32 %v2084, %v1320
        %v2087 = vadd.f32 %v2081, %v2085
        %v2088 = vadd.f32 %v2082, %v2086
        %s2089 = sld [smem:[#allocation6 + $0x7]]
        %v2090 = vstv %s2089
        %v2091 = vmul.f32 %v2090, %v1321
        %v2092 = vmul.f32 %v2090, %v1322
        %v2093 = vadd.f32 %v2087, %v2091
        %v2094 = vadd.f32 %v2088, %v2092
        %s2095 = sld [smem:[#allocation6 + $0x9]]
        %v2096 = vstv %s2095
        %v2097 = vmul.f32 %v2096, %v1323
        %v2098 = vmul.f32 %v2096, %v1324
        %v2099 = vadd.f32 %v2093, %v2097
        %v2100 = vadd.f32 %v2094, %v2098
        %s2101 = sld [smem:[#allocation6 + $0xb]]
        %v2102 = vstv %s2101
        %v2103 = vmul.f32 %v2102, %v1325
        %v2104 = vmul.f32 %v2102, %v1326
        %v2105 = vadd.f32 %v2099, %v2103
        %v2106 = vadd.f32 %v2100, %v2104
        %s2107 = sld [smem:[#allocation6 + $0xd]]
        %v2108 = vstv %s2107
        %v2109 = vmul.f32 %v2108, %v1327
        %v2110 = vmul.f32 %v2108, %v1328
        %v2111 = vadd.f32 %v2105, %v2109
        %v2112 = vadd.f32 %v2106, %v2110
        %s2113 = sld [smem:[#allocation6 + $0xf]]
        %v2114 = vstv %s2113
        %v2115 = vmul.f32 %v2114, %v1329
        %v2116 = vmul.f32 %v2114, %v1330
        %v2117 = vadd.f32 %v2111, %v2115
        %v2118 = vadd.f32 %v2112, %v2116
        %s2119 = sld [smem:[#allocation6 + $0x11]]
        %v2120 = vstv %s2119
        %v2121 = vmul.f32 %v2120, %v1331
        %v2122 = vmul.f32 %v2120, %v1332
        %v2123 = vadd.f32 %v2117, %v2121
        %v2124 = vadd.f32 %v2118, %v2122
        %s2125 = sld [smem:[#allocation6 + $0x13]]
        %v2126 = vstv %s2125
        %v2127 = vmul.f32 %v2126, %v1333
        %v2128 = vmul.f32 %v2126, %v1334
        %v2129 = vadd.f32 %v2123, %v2127
        %v2130 = vadd.f32 %v2124, %v2128
        %s2131 = sld [smem:[#allocation6 + $0x15]]
        %v2132 = vstv %s2131
        %v2133 = vmul.f32 %v2132, %v1335
        %v2134 = vmul.f32 %v2132, %v1336
        %v2135 = vadd.f32 %v2129, %v2133
        %v2136 = vadd.f32 %v2130, %v2134
        %s2137 = sld [smem:[#allocation6 + $0x17]]
        %v2138 = vstv %s2137
        %v2139 = vmul.f32 %v2138, %v1337
        %v2140 = vmul.f32 %v2138, %v1338
        %v2141 = vadd.f32 %v2135, %v2139
        %v2142 = vadd.f32 %v2136, %v2140
        %s2143 = sld [smem:[#allocation6 + $0x19]]
        %v2144 = vstv %s2143
        %v2145 = vmul.f32 %v2144, %v1339
        %v2146 = vmul.f32 %v2144, %v1340
        %v2147 = vadd.f32 %v2141, %v2145
        %v2148 = vadd.f32 %v2142, %v2146
        %s2149 = sld [smem:[#allocation6 + $0x1b]]
        %v2150 = vstv %s2149
        %v2151 = vmul.f32 %v2150, %v1341
        %v2152 = vmul.f32 %v2150, %v1342
        %v2153 = vadd.f32 %v2147, %v2151
        %v2154 = vadd.f32 %v2148, %v2152
        %s2155 = sld [smem:[#allocation6 + $0x1d]]
        %v2156 = vstv %s2155
        %v2157 = vmul.f32 %v2156, %v1343
        %v2158 = vmul.f32 %v2156, %v1344
        %v2159 = vadd.f32 %v2153, %v2157
        %v2160 = vadd.f32 %v2154, %v2158
        %s2161 = sld [smem:[#allocation6 + $0x1f]]
        %v2162 = vstv %s2161
        %v2163 = vmul.f32 %v2162, %v1345
        %v2164 = vmul.f32 %v2162, %v1346
        %v2165 = vadd.f32 %v2159, %v2163
        %v2166 = vadd.f32 %v2160, %v2164
        %s2167 = sld [smem:[#allocation6 + $0x21]]
        %v2168 = vstv %s2167
        %v2169 = vmul.f32 %v2168, %v1379
        %v2170 = vmul.f32 %v2168, %v1380
        %v2171 = vadd.f32 %v2165, %v2169
        %v2172 = vadd.f32 %v2166, %v2170
        %s2173 = sld [smem:[#allocation6 + $0x23]]
        %v2174 = vstv %s2173
        %v2175 = vmul.f32 %v2174, %v1381
        %v2176 = vmul.f32 %v2174, %v1382
        %v2177 = vadd.f32 %v2171, %v2175
        %v2178 = vadd.f32 %v2172, %v2176
        %s2179 = sld [smem:[#allocation6 + $0x25]]
        %v2180 = vstv %s2179
        %v2181 = vmul.f32 %v2180, %v1383
        %v2182 = vmul.f32 %v2180, %v1384
        %v2183 = vadd.f32 %v2177, %v2181
        %v2184 = vadd.f32 %v2178, %v2182
        %s2185 = sld [smem:[#allocation6 + $0x27]]
        %v2186 = vstv %s2185
        %v2187 = vmul.f32 %v2186, %v1385
        %v2188 = vmul.f32 %v2186, %v1386
        %v2189 = vadd.f32 %v2183, %v2187
        %v2190 = vadd.f32 %v2184, %v2188
        %s2191 = sld [smem:[#allocation6 + $0x29]]
        %v2192 = vstv %s2191
        %v2193 = vmul.f32 %v2192, %v1387
        %v2194 = vmul.f32 %v2192, %v1388
        %v2195 = vadd.f32 %v2189, %v2193
        %v2196 = vadd.f32 %v2190, %v2194
        %s2197 = sld [smem:[#allocation6 + $0x2b]]
        %v2198 = vstv %s2197
        %v2199 = vmul.f32 %v2198, %v1389
        %v2200 = vmul.f32 %v2198, %v1390
        %v2201 = vadd.f32 %v2195, %v2199
        %v2202 = vadd.f32 %v2196, %v2200
        %s2203 = sld [smem:[#allocation6 + $0x2d]]
        %v2204 = vstv %s2203
        %v2205 = vmul.f32 %v2204, %v1391
        %v2206 = vmul.f32 %v2204, %v1392
        %v2207 = vadd.f32 %v2201, %v2205
        %v2208 = vadd.f32 %v2202, %v2206
        %s2209 = sld [smem:[#allocation6 + $0x2f]]
        %v2210 = vstv %s2209
        %v2211 = vmul.f32 %v2210, %v1393
        %v2212 = vmul.f32 %v2210, %v1394
        %v2213 = vadd.f32 %v2207, %v2211
        %v2214 = vadd.f32 %v2208, %v2212
        %s2215 = sld [smem:[#allocation6 + $0x31]]
        %v2216 = vstv %s2215
        %v2217 = vmul.f32 %v2216, %v1427
        %v2218 = vmul.f32 %v2216, %v1428
        %v2219 = vadd.f32 %v2213, %v2217
        %v2220 = vadd.f32 %v2214, %v2218
        %s2221 = sld [smem:[#allocation6 + $0x33]]
        %v2222 = vstv %s2221
        %v2223 = vmul.f32 %v2222, %v1429
        %v2224 = vmul.f32 %v2222, %v1430
        %v2225 = vadd.f32 %v2219, %v2223
        %v2226 = vadd.f32 %v2220, %v2224
        %s2227 = sld [smem:[#allocation6 + $0x35]]
        %v2228 = vstv %s2227
        %v2229 = vmul.f32 %v2228, %v1431
        %v2230 = vmul.f32 %v2228, %v1432
        %v2231 = vadd.f32 %v2225, %v2229
        %v2232 = vadd.f32 %v2226, %v2230
        %s2233 = sld [smem:[#allocation6 + $0x37]]
        %v2234 = vstv %s2233
        %v2235 = vmul.f32 %v2234, %v1433
        %v2236 = vmul.f32 %v2234, %v1434
        %v2237 = vadd.f32 %v2231, %v2235
        %v2238 = vadd.f32 %v2232, %v2236
        %s2239 = sld [smem:[#allocation6 + $0x39]]
        %v2240 = vstv %s2239
        %v2241 = vmul.f32 %v2240, %v1435
        %v2242 = vmul.f32 %v2240, %v1436
        %v2243 = vadd.f32 %v2237, %v2241
        %v2244 = vadd.f32 %v2238, %v2242
        %s2245 = sld [smem:[#allocation6 + $0x3b]]
        %v2246 = vstv %s2245
        %v2247 = vmul.f32 %v2246, %v1437
        %v2248 = vmul.f32 %v2246, %v1438
        %v2249 = vadd.f32 %v2243, %v2247
        %v2250 = vadd.f32 %v2244, %v2248
        %s2251 = sld [smem:[#allocation6 + $0x3d]]
        %v2252 = vstv %s2251
        %v2253 = vmul.f32 %v2252, %v1439
        %v2254 = vmul.f32 %v2252, %v1440
        %v2255 = vadd.f32 %v2249, %v2253
        %v2256 = vadd.f32 %v2250, %v2254
        %s2257 = sld [smem:[#allocation6 + $0x3f]]
        %v2258 = vstv %s2257
        %v2259 = vmul.f32 %v2258, %v1441
        %v2260 = vmul.f32 %v2258, %v1442
        %v2261 = vadd.f32 %v2255, %v2259
        %v2262 = vadd.f32 %v2256, %v2260
        %s2263 = sld [smem:[#allocation6 + $0x41]]
        %v2264 = vstv %s2263
        %v2265 = vmul.f32 %v2264, %v1235
        %v2266 = vmul.f32 %v2264, %v1236
        %v2267 = vadd.f32 %v2261, %v2265
        %v2268 = vadd.f32 %v2262, %v2266
        %s2269 = sld [smem:[#allocation6 + $0x43]]
        %v2270 = vstv %s2269
        %v2271 = vmul.f32 %v2270, %v1237
        %v2272 = vmul.f32 %v2270, %v1238
        %v2273 = vadd.f32 %v2267, %v2271
        %v2274 = vadd.f32 %v2268, %v2272
        %s2275 = sld [smem:[#allocation6 + $0x45]]
        %v2276 = vstv %s2275
        %v2277 = vmul.f32 %v2276, %v1239
        %v2278 = vmul.f32 %v2276, %v1240
        %v2279 = vadd.f32 %v2273, %v2277
        %v2280 = vadd.f32 %v2274, %v2278
        %s2281 = sld [smem:[#allocation6 + $0x47]]
        %v2282 = vstv %s2281
        %v2283 = vmul.f32 %v2282, %v1241
        %v2284 = vmul.f32 %v2282, %v1242
        %v2285 = vadd.f32 %v2279, %v2283
        %v2286 = vadd.f32 %v2280, %v2284
        %s2287 = sld [smem:[#allocation6 + $0x49]]
        %v2288 = vstv %s2287
        %v2289 = vmul.f32 %v2288, %v1243
        %v2290 = vmul.f32 %v2288, %v1244
        %v2291 = vadd.f32 %v2285, %v2289
        %v2292 = vadd.f32 %v2286, %v2290
        %s2293 = sld [smem:[#allocation6 + $0x4b]]
        %v2294 = vstv %s2293
        %v2295 = vmul.f32 %v2294, %v1245
        %v2296 = vmul.f32 %v2294, %v1246
        %v2297 = vadd.f32 %v2291, %v2295
        %v2298 = vadd.f32 %v2292, %v2296
        %s2299 = sld [smem:[#allocation6 + $0x4d]]
        %v2300 = vstv %s2299
        %v2301 = vmul.f32 %v2300, %v1247
        %v2302 = vmul.f32 %v2300, %v1248
        %v2303 = vadd.f32 %v2297, %v2301
        %v2304 = vadd.f32 %v2298, %v2302
        %s2305 = sld [smem:[#allocation6 + $0x4f]]
        %v2306 = vstv %s2305
        %v2307 = vmul.f32 %v2306, %v1249
        %v2308 = vmul.f32 %v2306, %v1250
        %v2309 = vadd.f32 %v2303, %v2307
        %v2310 = vadd.f32 %v2304, %v2308
        %s2311 = sld [smem:[#allocation6 + $0x51]]
        %v2312 = vstv %s2311
        %v2313 = vmul.f32 %v2312, %v1475
        %v2314 = vmul.f32 %v2312, %v1476
        %v2315 = vadd.f32 %v2309, %v2313
        %v2316 = vadd.f32 %v2310, %v2314
        %s2317 = sld [smem:[#allocation6 + $0x53]]
        %v2318 = vstv %s2317
        %v2319 = vmul.f32 %v2318, %v1477
        %v2320 = vmul.f32 %v2318, %v1478
        %v2321 = vadd.f32 %v2315, %v2319
        %v2322 = vadd.f32 %v2316, %v2320
        %s2323 = sld [smem:[#allocation6 + $0x55]]
        %v2324 = vstv %s2323
        %v2325 = vmul.f32 %v2324, %v1479
        %v2326 = vmul.f32 %v2324, %v1480
        %v2327 = vadd.f32 %v2321, %v2325
        %v2328 = vadd.f32 %v2322, %v2326
        %s2329 = sld [smem:[#allocation6 + $0x57]]
        %v2330 = vstv %s2329
        %v2331 = vmul.f32 %v2330, %v1481
        %v2332 = vmul.f32 %v2330, %v1482
        %v2333 = vadd.f32 %v2327, %v2331
        %v2334 = vadd.f32 %v2328, %v2332
        %s2335 = sld [smem:[#allocation6 + $0x59]]
        %v2336 = vstv %s2335
        %v2337 = vmul.f32 %v2336, %v1483
        %v2338 = vmul.f32 %v2336, %v1484
        %v2339 = vadd.f32 %v2333, %v2337
        %v2340 = vadd.f32 %v2334, %v2338
        %s2341 = sld [smem:[#allocation6 + $0x5b]]
        %v2342 = vstv %s2341
        %v2343 = vmul.f32 %v2342, %v1485
        %v2344 = vmul.f32 %v2342, %v1486
        %v2345 = vadd.f32 %v2339, %v2343
        %v2346 = vadd.f32 %v2340, %v2344
        %s2347 = sld [smem:[#allocation6 + $0x5d]]
        %v2348 = vstv %s2347
        %v2349 = vmul.f32 %v2348, %v1487
        %v2350 = vmul.f32 %v2348, %v1488
        %v2351 = vadd.f32 %v2345, %v2349
        %v2352 = vadd.f32 %v2346, %v2350
        %s2353 = sld [smem:[#allocation6 + $0x5f]]
        %v2354 = vstv %s2353
        %v2355 = vmul.f32 %v2354, %v1489
        %v2356 = vmul.f32 %v2354, %v1490
        %v2357 = vadd.f32 %v2351, %v2355
        %v2358 = vadd.f32 %v2352, %v2356
        %s2359 = sld [smem:[#allocation6 + $0x61]]
        %v2360 = vstv %s2359
        %v2361 = vmul.f32 %v2360, %v1555
        %v2362 = vmul.f32 %v2360, %v1556
        %v2363 = vadd.f32 %v2357, %v2361
        %v2364 = vadd.f32 %v2358, %v2362
        %s2365 = sld [smem:[#allocation6 + $0x63]]
        %v2366 = vstv %s2365
        %v2367 = vmul.f32 %v2366, %v1557
        %v2368 = vmul.f32 %v2366, %v1558
        %v2369 = vadd.f32 %v2363, %v2367
        %v2370 = vadd.f32 %v2364, %v2368
        %s2371 = sld [smem:[#allocation6 + $0x65]]
        %v2372 = vstv %s2371
        %v2373 = vmul.f32 %v2372, %v1559
        %v2374 = vmul.f32 %v2372, %v1560
        %v2375 = vadd.f32 %v2369, %v2373
        %v2376 = vadd.f32 %v2370, %v2374
        %s2377 = sld [smem:[#allocation6 + $0x67]]
        %v2378 = vstv %s2377
        %v2379 = vmul.f32 %v2378, %v1561
        %v2380 = vmul.f32 %v2378, %v1562
        %v2381 = vadd.f32 %v2375, %v2379
        %v2382 = vadd.f32 %v2376, %v2380
        %s2383 = sld [smem:[#allocation6 + $0x69]]
        %v2384 = vstv %s2383
        %v2385 = vmul.f32 %v2384, %v1563
        %v2386 = vmul.f32 %v2384, %v1564
        %v2387 = vadd.f32 %v2381, %v2385
        %v2388 = vadd.f32 %v2382, %v2386
        %s2389 = sld [smem:[#allocation6 + $0x6b]]
        %v2390 = vstv %s2389
        %v2391 = vmul.f32 %v2390, %v1565
        %v2392 = vmul.f32 %v2390, %v1566
        %v2393 = vadd.f32 %v2387, %v2391
        %v2394 = vadd.f32 %v2388, %v2392
        %s2395 = sld [smem:[#allocation6 + $0x6d]]
        %v2396 = vstv %s2395
        %v2397 = vmul.f32 %v2396, %v1567
        %v2398 = vmul.f32 %v2396, %v1568
        %v2399 = vadd.f32 %v2393, %v2397
        %v2400 = vadd.f32 %v2394, %v2398
        %s2401 = sld [smem:[#allocation6 + $0x6f]]
        %v2402 = vstv %s2401
        %v2403 = vmul.f32 %v2402, %v1569
        %v2404 = vmul.f32 %v2402, %v1570
        %v2405 = vadd.f32 %v2399, %v2403
        %v2406 = vadd.f32 %v2400, %v2404
        %s2407 = sld [smem:[#allocation6 + $0x71]]
        %v2408 = vstv %s2407
        %v2409 = vmul.f32 %v2408, %v1571
        %v2410 = vmul.f32 %v2408, %v1572
        %v2411 = vadd.f32 %v2405, %v2409
        %v2412 = vadd.f32 %v2406, %v2410
        %s2413 = sld [smem:[#allocation6 + $0x73]]
        %v2414 = vstv %s2413
        %v2415 = vmul.f32 %v2414, %v1573
        %v2416 = vmul.f32 %v2414, %v1574
        %v2417 = vadd.f32 %v2411, %v2415
        %v2418 = vadd.f32 %v2412, %v2416
        %s2419 = sld [smem:[#allocation6 + $0x75]]
        %v2420 = vstv %s2419
        %v2421 = vmul.f32 %v2420, %v1575
        %v2422 = vmul.f32 %v2420, %v1576
        %v2423 = vadd.f32 %v2417, %v2421
        %v2424 = vadd.f32 %v2418, %v2422
        %s2425 = sld [smem:[#allocation6 + $0x77]]
        %v2426 = vstv %s2425
        %v2427 = vmul.f32 %v2426, %v1577
        %v2428 = vmul.f32 %v2426, %v1578
        %v2429 = vadd.f32 %v2423, %v2427
        %v2430 = vadd.f32 %v2424, %v2428
        %s2431 = sld [smem:[#allocation6 + $0x79]]
        %v2432 = vstv %s2431
        %v2433 = vmul.f32 %v2432, %v1579
        %v2434 = vmul.f32 %v2432, %v1580
        %v2435 = vadd.f32 %v2429, %v2433
        %v2436 = vadd.f32 %v2430, %v2434
        %s2437 = sld [smem:[#allocation6 + $0x7b]]
        %v2438 = vstv %s2437
        %v2439 = vmul.f32 %v2438, %v1581
        %v2440 = vmul.f32 %v2438, %v1582
        %v2441 = vadd.f32 %v2435, %v2439
        %v2442 = vadd.f32 %v2436, %v2440
        %s2443 = sld [smem:[#allocation6 + $0x7d]]
        %v2444 = vstv %s2443
        %v2445 = vmul.f32 %v2444, %v1583
        %v2446 = vmul.f32 %v2444, %v1584
        %v2447 = vadd.f32 %v2441, %v2445
        %v2448 = vadd.f32 %v2442, %v2446
        %s2449 = sld [smem:[#allocation6 + $0x7f]]
        %v2450 = vstv %s2449
        %v2451 = vmul.f32 %v2450, %v1585
        %v2452 = vmul.f32 %v2450, %v1586
        %v2453 = vadd.f32 %v2447, %v2451
        %v2454 = vadd.f32 %v2448, %v2452
        %s2455 = sld [smem:[#allocation6 + $0x81]]
        %v2456 = vstv %s2455
        %v2457 = vmul.f32 %v2456, %v1619
        %v2458 = vmul.f32 %v2456, %v1620
        %v2459 = vadd.f32 %v2453, %v2457
        %v2460 = vadd.f32 %v2454, %v2458
        %s2461 = sld [smem:[#allocation6 + $0x83]]
        %v2462 = vstv %s2461
        %v2463 = vmul.f32 %v2462, %v1621
        %v2464 = vmul.f32 %v2462, %v1622
        %v2465 = vadd.f32 %v2459, %v2463
        %v2466 = vadd.f32 %v2460, %v2464
        %s2467 = sld [smem:[#allocation6 + $0x85]]
        %v2468 = vstv %s2467
        %v2469 = vmul.f32 %v2468, %v1623
        %v2470 = vmul.f32 %v2468, %v1624
        %v2471 = vadd.f32 %v2465, %v2469
        %v2472 = vadd.f32 %v2466, %v2470
        %s2473 = sld [smem:[#allocation6 + $0x87]]
        %v2474 = vstv %s2473
        %v2475 = vmul.f32 %v2474, %v1625
        %v2476 = vmul.f32 %v2474, %v1626
        %v2477 = vadd.f32 %v2471, %v2475
        %v2478 = vadd.f32 %v2472, %v2476
        %s2479 = sld [smem:[#allocation6 + $0x89]]
        %v2480 = vstv %s2479
        %v2481 = vmul.f32 %v2480, %v1627
        %v2482 = vmul.f32 %v2480, %v1628
        %v2483 = vadd.f32 %v2477, %v2481
        %v2484 = vadd.f32 %v2478, %v2482
        %s2485 = sld [smem:[#allocation6 + $0x8b]]
        %v2486 = vstv %s2485
        %v2487 = vmul.f32 %v2486, %v1629
        %v2488 = vmul.f32 %v2486, %v1630
        %v2489 = vadd.f32 %v2483, %v2487
        %v2490 = vadd.f32 %v2484, %v2488
        %s2491 = sld [smem:[#allocation6 + $0x8d]]
        %v2492 = vstv %s2491
        %v2493 = vmul.f32 %v2492, %v1631
        %v2494 = vmul.f32 %v2492, %v1632
        %v2495 = vadd.f32 %v2489, %v2493
        %v2496 = vadd.f32 %v2490, %v2494
        %s2497 = sld [smem:[#allocation6 + $0x8f]]
        %v2498 = vstv %s2497
        %v2499 = vmul.f32 %v2498, %v1633
        %v2500 = vmul.f32 %v2498, %v1634
        %v2501 = vadd.f32 %v2495, %v2499
        %v2502 = vadd.f32 %v2496, %v2500
        %s2503 = sld [smem:[#allocation7 + $0x1]]
        %v2504 = vstv %s2503
        %v2505 = vadd.f32 %v2501, %v2504
        %v2506 = vadd.f32 %v2502, %v2504
        %s2507 = sld [smem:[#allocation3 + %s51]]
        %v2508 = vstv %s2507
        %v2509 = vmul.f32 %v2069, %v2508
        %v2510 = vmul.f32 %v2070, %v2508
        %v2511 = vmul.f32 %v2505, %v2508
        %v2512 = vmul.f32 %v2506, %v2508
        %2513 = vst [vmem:[%s169] sm:$0xff] %v2509
        %2514 = vst [vmem:[%s169 + $0x8] sm:$0xff] %v2510
        %2515 = vst [vmem:[%s169 + $0x10] sm:$0xff] %v2511
        %2516 = vst [vmem:[%s169 + $0x18] sm:$0xff] %v2512
        %s2517 = sand.u32 %s85, 1
        %s2518 = scalar_lea.sflag [#allocation10], %s2517
        %s2519 = sand.u32 %s85, 1
        %s2520 = smul.addr %s2519, 32
        %s2521 = scalar_lea.vmem [#allocation11], %s2520
        // Predicated region
        $region29: #{tpu_custom_call.1} parent=23 // pred_check
          %p2522 = pneg %p95
        $region30: #{tpu_custom_call.1} parent=23 // pred_check_branch
          %2524 = sbr.rel (%p2522) target = $region32
        $region31: #{tpu_custom_call.1} parent=23 // pred_region
          %2526 = vsyncadd %s2518, 0
          %s2527 = smul.addr %s51, 4
          %s2528 = smul.addr %s2527, 8
          %s2529 = scalar_lea.hbm %s6, %s2528
          %s2530 = sshll.u32 %s2521, 4
          %s2531 = int_to_ptr.vmem [resolvable:$true] %s2530
          %s2532 = sshll.u32 %s2529, 4
          %s2533 = int_to_ptr.hbm [resolvable:$true] %s2532
          %2538 = dma.vmem_to_hbm [thread:$0]  %s2531, 512, %s2533, %s2518, 128, 128, 8
        $region32: #{tpu_custom_call.1} parent=23 // pred_fallthru
          _
      $region24: #{tpu_custom_call.1} parent=5 // pred_fallthru
        _
      %p2539 = scmp.le.s32.totalorder 2, %s46
      // Predicated region
      $region33: #{tpu_custom_call.1} parent=5 // pred_check
        %p2540 = pneg %p2539
      $region34: #{tpu_custom_call.1} parent=5 // pred_check_branch
        %2542 = sbr.rel (%p2540) target = $region36
      $region35: #{tpu_custom_call.1} parent=5 // pred_region
        %s2543 = ssub.s32 %s46, 2
        // Predicated region
        $region37: #{tpu_custom_call.1} parent=35 // pred_check
          %p2544 = pneg %p101
        $region38: #{tpu_custom_call.1} parent=35 // pred_check_branch
          %2546 = sbr.rel (%p2544) target = $region40
        $region39: #{tpu_custom_call.1} parent=35 // pred_region
          %s2547 = sand.u32 %s86, 1
          %s2548 = scalar_lea.sflag [#allocation10], %s2547
          %s2549 = sand.u32 %s86, 1
          %s2550 = smul.addr %s2549, 32
          %s2551 = scalar_lea.vmem [#allocation11], %s2550
          %2553 = dma.done %s2548, 512
        $region40: #{tpu_custom_call.1} parent=35 // pred_fallthru
          _
      $region36: #{tpu_custom_call.1} parent=5 // pred_fallthru
        _
    $region6: #{tpu_custom_call.1} parent=1 // loop_footer
      %s50 = sadd.s32 1, %s46
    $region7: #{tpu_custom_call.1} parent=1 // loop_footer_branch
      %45 = sbr.rel target = $region3
    $region8: #{tpu_custom_call.1} parent=1 // loop_exit
      _
    %2554 = vsyncpa [#allocation9], 1
    %s2555 = scalar_lea.sflag [#allocation9], 1
    %2556 = vsyncpa %s2555, 1
    %2557 = vsyncpa [#allocation10], 1
    %s2558 = scalar_lea.sflag [#allocation10], 1
    %2559 = vsyncpa %s2558, 1

</llo_original>
